<compile_context>
chip_gen: v6e
topology: v6e:2x2x1
jax: 0.10.0
libtpu: 0.0.40
codegen_flags: <defaults>
</compile_context>

<pallas_src>
import functools

import numpy as np
import jax
import jax.numpy as jnp
from jax import lax
from jax.experimental import pallas as pl
from jax.experimental.pallas import tpu as pltpu


def _silu(x):
    return x * jax.nn.sigmoid(x)


# --------------------- pltpu.roll direction probe ----------------------------
def _probe_roll_kernel(x_ref, o_ref):
    o_ref[...] = pltpu.roll(x_ref[...], 1, 1)


@functools.lru_cache(maxsize=1)
def _probe_pltpu_roll():
    """One-time probe of the hardware rotate direction.

    The depthwise stage shifts the flattened spatial (lane) axis with
    pltpu.roll.  This tiny kernel pins down the rotate sign convention of the
    underlying tpu rotate op so the tap shifts are always correct.  Returns
    "numpy" (matches np.roll), "reverse" (opposite direction), or None
    (fall back to jnp.roll inside the kernel).
    """
    try:
        x = jnp.arange(8 * 128, dtype=jnp.float32).reshape(8, 128)
        out = pl.pallas_call(
            _probe_roll_kernel,
            out_shape=jax.ShapeDtypeStruct((8, 128), jnp.float32),
        )(x)
        out = np.asarray(jax.block_until_ready(out))
        xn = np.asarray(x)
        if np.array_equal(out, np.roll(xn, 1, axis=1)):
            return "numpy"
        if np.array_equal(out, np.roll(xn, -1, axis=1)):
            return "reverse"
    except Exception:  # pragma: no cover - defensive, falls back to jnp.roll
        pass
    return None


# ----------------------------- helpers ----------------------------------------
def _matmul(w, x, f32, mxu_min_k=32):
    """(Co, Ci) @ (Ci, S) with f32 accumulation.

    Tiny contraction dims (toy channel counts) would waste a full MXU pass,
    so they are done as VPU rank-1 broadcast-mult-accumulates; larger
    contractions go to the MXU via jnp.dot.
    """
    k = w.shape[1]
    if k >= mxu_min_k:
        return jnp.dot(w, x, preferred_element_type=f32)
    acc = w[:, 0:1] * x[0:1, :]
    for c in range(1, k):
        acc = acc + w[:, c:c + 1] * x[c:c + 1, :]
    return acc


# --------------------------- fully fused kernel ------------------------------
def mbconv_kernel(x_ref, masks_ref, w1_ref, bn1s_ref, bn1b_ref,
                  dww_ref, bn2s_ref, bn2b_ref,
                  fc1w_ref, fc1b_ref, fc2w_ref, fc2b_ref,
                  wp_ref, bn3s_ref, bn3b_ref,
                  o_ref, *,
                  K, stride, H, W, Ho, Wo, Nb, use_skip,
                  tap_shifts, use_hw_roll):
    f32 = jnp.float32
    S = H * W

    # Resident weights / folded-BN constants: load once per grid step.
    w1 = w1_ref[...]                          # (Cexp, Cin)
    wdw = dww_ref[...]                        # (Cexp, K*K)
    masks = masks_ref[...]                    # (K*K, 1, S) in {0, 1}
    wp = wp_ref[...]                          # (Cout, Cexp)
    bn1s, bn1b = bn1s_ref[...], bn1b_ref[...]
    bn2s, bn2b = bn2s_ref[...], bn2b_ref[...]
    bn3s, bn3b = bn3s_ref[...], bn3b_ref[...]
    fc1w, fc1b = fc1w_ref[...], fc1b_ref[...]
    fc2w, fc2b = fc2w_ref[...], fc2b_ref[...]
    Cexp = w1.shape[0]

    for nb in range(Nb):                      # images in this block (unrolled)
        x = x_ref[nb].astype(f32)             # (Cin, S), channel-on-sublane

        # -- stage 1: 1x1 expansion + BN + SiLU -> (Cexp, S), lane-dense -----
        e = _matmul(w1, x, f32)
        e = _silu(e * bn1s + bn1b)

        # -- stage 2: depthwise KxK via lane shifts + border masks -----------
        acc = jnp.zeros((Cexp, S), f32)
        for t in range(K * K):
            shift = tap_shifts[t]
            if shift == 0:                    # center tap: no shift, no mask
                contrib = e * wdw[:, t:t + 1]
            else:
                if use_hw_roll:
                    shifted = pltpu.roll(e, shift, 1)
                else:
                    shifted = jnp.roll(e, shift, axis=1)
                contrib = (shifted * wdw[:, t:t + 1]) * masks[t]
            acc = acc + contrib
        if stride > 1:
            # TODO(synk): stride>1 subsample path is not exercised by the
            # stride=1 test below; validate on hardware before relying on it.
            acc = acc.reshape(Cexp, Ho, stride, Wo, stride)[:, :, 0, :, 0]
            acc = acc.reshape(Cexp, Ho * Wo)
        y = _silu(acc * bn2s + bn2b)          # (Cexp, Ho*Wo)

        # -- stage 3: squeeze-and-excite --------------------------------------
        pooled = jnp.mean(y, axis=1, keepdims=True)            # (Cexp, 1)
        h = _silu(_matmul(fc1w, pooled, f32) + fc1b)           # (Cr, 1)
        se = jax.nn.sigmoid(_matmul(fc2w, h, f32) + fc2b)      # (Cexp, 1)
        y = y * se                                             # lane broadcast

        # -- stage 4: 1x1 projection + BN (+ skip), lane-dense (Cout, So) -----
        out = _matmul(wp, y, f32)
        out = out * bn3s + bn3b
        if use_skip:
            out = out + x                      # x is (Cin, S) == (Cout, S)
        o_ref[nb] = out.astype(o_ref.dtype)


# ------------------------------ wrapper ---------------------------------------
def mbconv_forward(x_nchw, params, *, kernel_size, stride, expand_ratio,
                   images_per_step=8):
    N, Cin, H, W = x_nchw.shape
    K = kernel_size
    if K % 2 != 1:
        # TODO(synk): even-K depthwise needs an asymmetric-halo path.
        raise NotImplementedError("only odd depthwise kernel sizes supported")
    p = K // 2
    Cexp = params["expand_w"].shape[0]
    assert Cexp == Cin * expand_ratio
    Cout = params["proj_w"].shape[0]
    Cr = params["fc1_w"].shape[0]
    Ho = (H + 2 * p - K) // stride + 1
    Wo = (W + 2 * p - K) // stride + 1
    if stride > 1 and (H % stride != 0 or W % stride != 0):
        # TODO(synk): non-divisible strided spatial dims not supported.
        raise NotImplementedError("stride>1 requires H, W divisible by stride")
    use_skip = (stride == 1 and Cin == Cout)
    S, So = H * W, Ho * Wo
    dtype = x_nchw.dtype

    # Images per grid step: largest divisor of N not exceeding images_per_step
    # (all images within a step are independent, loop is unrolled in-kernel).
    Nb = max(d for d in range(1, min(N, images_per_step) + 1) if N % d == 0)

    # Per-tap flat-spatial shift amounts + {0,1} border masks (trace-time).
    conv = _probe_pltpu_roll()
    use_hw_roll = conv is not None
    hh = np.arange(H).reshape(H, 1)
    ww = np.arange(W).reshape(1, W)
    tap_shifts = []
    masks_np = np.zeros((K * K, 1, S), np.float32)
    for kh in range(K):
        for kw in range(K):
            dh, dw = kh - p, kw - p
            d = dh * W + dw                   # flat input offset for this tap
            if conv == "reverse":
                tap_shifts.append(d % S)
            else:                             # np.roll convention
                tap_shifts.append((-d) % S)
            valid = ((hh + dh >= 0) & (hh + dh < H) &
                     (ww + dw >= 0) & (ww + dw < W))
            masks_np[kh * K + kw, 0] = valid.reshape(-1).astype(np.float32)
    masks = jnp.asarray(masks_np)

    x_flat = x_nchw.reshape(N, Cin, S)        # free reshape, channel-major

    kernel = functools.partial(
        mbconv_kernel, K=K, stride=stride, H=H, W=W, Ho=Ho, Wo=Wo,
        Nb=Nb, use_skip=use_skip, tap_shifts=tuple(tap_shifts),
        use_hw_roll=use_hw_roll)

    c2 = lambda b: (0, 0)                     # resident weight / BN blocks
    c3 = lambda b: (0, 0, 0)
    out = pl.pallas_call(
        kernel,
        out_shape=jax.ShapeDtypeStruct((N, Cout, So), dtype),
        grid=(N // Nb,),
        in_specs=[
            pl.BlockSpec((Nb, Cin, S), lambda b: (b, 0, 0)),   # x
            pl.BlockSpec((K * K, 1, S), c3),                   # tap masks
            pl.BlockSpec((Cexp, Cin), c2),                     # expand_w
            pl.BlockSpec((Cexp, 1), c2),                       # bn1_scale
            pl.BlockSpec((Cexp, 1), c2),                       # bn1_shift
            pl.BlockSpec((Cexp, K * K), c2),                   # dw_w
            pl.BlockSpec((Cexp, 1), c2),                       # bn2_scale
            pl.BlockSpec((Cexp, 1), c2),                       # bn2_shift
            pl.BlockSpec((Cr, Cexp), c2),                      # fc1_w
            pl.BlockSpec((Cr, 1), c2),                         # fc1_b
            pl.BlockSpec((Cexp, Cr), c2),                      # fc2_w
            pl.BlockSpec((Cexp, 1), c2),                       # fc2_b
            pl.BlockSpec((Cout, Cexp), c2),                    # proj_w
            pl.BlockSpec((Cout, 1), c2),                       # bn3_scale
            pl.BlockSpec((Cout, 1), c2),                       # bn3_shift
        ],
        out_specs=pl.BlockSpec((Nb, Cout, So), lambda b: (b, 0, 0)),
        compiler_params=pltpu.CompilerParams(
            # Batch axis; on v7x prefer pltpu.CORE_PARALLEL / pl.core_map to
            # split across both TensorCores once the grid has >1 step.
            dimension_semantics=("parallel",),
            # Toy shapes fit trivially; raise toward 64-100 MiB on v5e/v6e
            # (128 MiB VMEM) for bigger tiles, keep <= ~48 MiB on v7x.
            vmem_limit_bytes=32 * 1024 * 1024,
        ),
    )(x_flat, masks,
      params["expand_w"], params["bn1_scale"], params["bn1_shift"],
      params["dw_w"], params["bn2_scale"], params["bn2_shift"],
      params["fc1_w"], params["fc1_b"], params["fc2_w"], params["fc2_b"],
      params["proj_w"], params["bn3_scale"], params["bn3_shift"])

    return out.reshape(N, Cout, Ho, Wo)       # free reshape back to NCHW


# ----------------------- parameter initialization -----------------------------
def init_params(key, Cin, Cout, K, expand_ratio):
    Cexp = Cin * expand_ratio
    Cr = max(1, Cexp // 4)
    ks = list(jax.random.split(key, 19))
    f32 = jnp.float32

    def bn_fold(kg, kb, km, kv, C):
        gamma = jax.random.uniform(kg, (C,), minval=0.5, maxval=1.5)
        beta = jax.random.normal(kb, (C,)) * 0.1
        mean = jax.random.normal(km, (C,)) * 0.1
        var = jax.random.uniform(kv, (C,), minval=0.5, maxval=1.5)
        scale = gamma / jnp.sqrt(var + 1e-5)
        shift = beta - mean * scale
        return scale.astype(f32), shift.astype(f32)

    s1, b1 = bn_fold(ks[0], ks[1], ks[2], ks[3], Cexp)
    s2, b2 = bn_fold(ks[4], ks[5], ks[6], ks[7], Cexp)
    s3, b3 = bn_fold(ks[8], ks[9], ks[10], ks[11], Cout)

    params = dict(
        # 1x1 expansion conv weight (Cexp, Cin):  e = W1 @ x
        expand_w=(jax.random.normal(ks[12], (Cexp, Cin)) * 0.2).astype(f32),
        # depthwise conv weight (Cexp, K*K), tap index t = kh*K + kw
        dw_w=(jax.random.normal(ks[13], (Cexp, K * K)) * 0.2).astype(f32),
        # SE linear layers in PyTorch (out, in) layout; biases as columns
        fc1_w=(jax.random.normal(ks[14], (Cr, Cexp)) * 0.2).astype(f32),
        fc1_b=(jax.random.normal(ks[15], (Cr, 1)) * 0.1).astype(f32),
        fc2_w=(jax.random.normal(ks[16], (Cexp, Cr)) * 0.2).astype(f32),
        fc2_b=(jax.random.normal(ks[17], (Cexp, 1)) * 0.1).astype(f32),
        # 1x1 projection conv weight (Cout, Cexp)
        proj_w=(jax.random.normal(ks[18], (Cout, Cexp)) * 0.2).astype(f32),
        bn1_scale=s1.reshape(Cexp, 1), bn1_shift=b1.reshape(Cexp, 1),
        bn2_scale=s2.reshape(Cexp, 1), bn2_shift=b2.reshape(Cexp, 1),
        bn3_scale=s3.reshape(Cout, 1), bn3_shift=b3.reshape(Cout, 1),
    )
    return params


# ------------------------- pure-JAX reference ---------------------------------
def mbconv_reference(x_nchw, params, *, kernel_size, stride, expand_ratio):
    N, Cin, H, W = x_nchw.shape
    Cexp = Cin * expand_ratio
    Cout = params["proj_w"].shape[0]
    K = kernel_size
    p = K // 2
    x = x_nchw.astype(jnp.float32)

    def bn(y, scale, shift):  # scale/shift are (C, 1)
        return y * scale.reshape(1, -1, 1, 1) + shift.reshape(1, -1, 1, 1)

    # expansion
    w1 = params["expand_w"].reshape(Cexp, Cin, 1, 1)
    y = lax.conv_general_dilated(x, w1, (1, 1), "VALID",
                                 dimension_numbers=("NCHW", "OIHW", "NCHW"))
    y = bn(y, params["bn1_scale"], params["bn1_shift"])
    y = y * jax.nn.sigmoid(y)
    # depthwise
    wd = params["dw_w"].reshape(Cexp, 1, K, K)
    y = lax.conv_general_dilated(y, wd, (stride, stride), [(p, p), (p, p)],
                                 dimension_numbers=("NCHW", "OIHW", "NCHW"),
                                 feature_group_count=Cexp)
    y = bn(y, params["bn2_scale"], params["bn2_shift"])
    y = y * jax.nn.sigmoid(y)
    # SE
    se = jnp.mean(y, axis=(2, 3))                              # (N, Cexp)
    se = se @ params["fc1_w"].T + params["fc1_b"][:, 0]
    se = se * jax.nn.sigmoid(se)
    se = se @ params["fc2_w"].T + params["fc2_b"][:, 0]
    se = jax.nn.sigmoid(se)
    y = y * se[:, :, None, None]
    # projection
    wp = params["proj_w"].reshape(Cout, Cexp, 1, 1)
    y = lax.conv_general_dilated(y, wp, (1, 1), "VALID",
                                 dimension_numbers=("NCHW", "OIHW", "NCHW"))
    y = bn(y, params["bn3_scale"], params["bn3_shift"])
    if stride == 1 and Cin == Cout:
        y = y + x
    return y


if __name__ == "__main__":
    # Config mirroring MBConv(input_channels=4, output_channels=4,
    #                         kernel_size=3, stride=1, expand_ratio=4)
    N, Cin, H, W = 2, 4, 16, 16
    Cout, K, stride, expand_ratio = 4, 3, 1, 4

    key = jax.random.PRNGKey(0)
    kx, kp = jax.random.split(key)
    x = jax.random.normal(kx, (N, Cin, H, W), dtype=jnp.float32)
    params = init_params(kp, Cin, Cout, K, expand_ratio)

    out = mbconv_forward(x, params, kernel_size=K, stride=stride,
                         expand_ratio=expand_ratio)
    out = jax.block_until_ready(out)

    ref = mbconv_reference(x, params, kernel_size=K, stride=stride,
                           expand_ratio=expand_ratio)
    assert out.shape == (N, Cout, H, W), out.shape
    err = float(jnp.max(jnp.abs(out - ref)))
    assert jnp.allclose(out, ref, atol=1e-4, rtol=1e-4), err

    print("KERNEL_OK")
</pallas_src>

<mosaic_0001>
module attributes {stable_mosaic.version = 11 : i64} {
  func.func @_probe_roll_kernel(%arg0: memref<8x128xf32, #tpu.memory_space<vmem>>, %arg1: memref<8x128xf32, #tpu.memory_space<vmem>>) attributes {dimension_semantics = [], scalar_prefetch = 0 : i64, scratch_operands = 0 : i64, tpu.core_type = #tpu.core_type<tc>} {
    %c0 = arith.constant 0 : index
    %c0_0 = arith.constant 0 : index
    %0 = vector.load %arg0[%c0, %c0_0] : memref<8x128xf32, #tpu.memory_space<vmem>>, vector<8x128xf32>
    %c1_i32 = arith.constant 1 : i32
    %1 = tpu.dynamic_rotate %0 by %c1_i32 dim 1 : vector<8x128xf32>, i32 -> vector<8x128xf32>
    %c0_1 = arith.constant 0 : index
    %c0_2 = arith.constant 0 : index
    %2 = vector.load %arg1[%c0_1, %c0_2] : memref<8x128xf32, #tpu.memory_space<vmem>>, vector<8x128xf32>
    tpu.vector_store %arg1[%c0_1, %c0_2], %1 {strides = array<i32>} : memref<8x128xf32, #tpu.memory_space<vmem>>, vector<8x128xf32>,
    return
  }
}

module attributes {stable_mosaic.version = 11 : i64} {
  func.func @mbconv_kernel(%arg0: i32, %arg1: memref<2x4x256xf32, #tpu.memory_space<vmem>>, %arg2: memref<9x1x256xf32, #tpu.memory_space<vmem>>, %arg3: memref<16x4xf32, #tpu.memory_space<vmem>>, %arg4: memref<16x1xf32, #tpu.memory_space<vmem>>, %arg5: memref<16x1xf32, #tpu.memory_space<vmem>>, %arg6: memref<16x9xf32, #tpu.memory_space<vmem>>, %arg7: memref<16x1xf32, #tpu.memory_space<vmem>>, %arg8: memref<16x1xf32, #tpu.memory_space<vmem>>, %arg9: memref<4x16xf32, #tpu.memory_space<vmem>>, %arg10: memref<4x1xf32, #tpu.memory_space<vmem>>, %arg11: memref<16x4xf32, #tpu.memory_space<vmem>>, %arg12: memref<16x1xf32, #tpu.memory_space<vmem>>, %arg13: memref<4x16xf32, #tpu.memory_space<vmem>>, %arg14: memref<4x1xf32, #tpu.memory_space<vmem>>, %arg15: memref<4x1xf32, #tpu.memory_space<vmem>>, %arg16: memref<2x4x256xf32, #tpu.memory_space<vmem>>) attributes {dimension_semantics = [#tpu.dimension_semantics<parallel>], iteration_bounds = array<i64: 1>, scalar_prefetch = 0 : i64, scratch_operands = 0 : i64, tpu.core_type = #tpu.core_type<tc>, window_params = [{transform_indices = @transform_0, window_bounds = array<i64: 2, 4, 256>}, {pipeline_mode = #tpu.pipeline_mode<synchronous>, transform_indices = @transform_1, window_bounds = array<i64: 9, 1, 256>}, {pipeline_mode = #tpu.pipeline_mode<synchronous>, transform_indices = @transform_2, window_bounds = array<i64: 16, 4>}, {pipeline_mode = #tpu.pipeline_mode<synchronous>, transform_indices = @transform_3, window_bounds = array<i64: 16, 1>}, {pipeline_mode = #tpu.pipeline_mode<synchronous>, transform_indices = @transform_4, window_bounds = array<i64: 16, 1>}, {pipeline_mode = #tpu.pipeline_mode<synchronous>, transform_indices = @transform_5, window_bounds = array<i64: 16, 9>}, {pipeline_mode = #tpu.pipeline_mode<synchronous>, transform_indices = @transform_6, window_bounds = array<i64: 16, 1>}, {pipeline_mode = #tpu.pipeline_mode<synchronous>, transform_indices = @transform_7, window_bounds = array<i64: 16, 1>}, {pipeline_mode = #tpu.pipeline_mode<synchronous>, transform_indices = @transform_8, window_bounds = array<i64: 4, 16>}, {pipeline_mode = #tpu.pipeline_mode<synchronous>, transform_indices = @transform_9, window_bounds = array<i64: 4, 1>}, {pipeline_mode = #tpu.pipeline_mode<synchronous>, transform_indices = @transform_10, window_bounds = array<i64: 16, 4>}, {pipeline_mode = #tpu.pipeline_mode<synchronous>, transform_indices = @transform_11, window_bounds = array<i64: 16, 1>}, {pipeline_mode = #tpu.pipeline_mode<synchronous>, transform_indices = @transform_12, window_bounds = array<i64: 4, 16>}, {pipeline_mode = #tpu.pipeline_mode<synchronous>, transform_indices = @transform_13, window_bounds = array<i64: 4, 1>}, {pipeline_mode = #tpu.pipeline_mode<synchronous>, transform_indices = @transform_14, window_bounds = array<i64: 4, 1>}, {transform_indices = @transform_15, window_bounds = array<i64: 2, 4, 256>}]} {
    %c0 = arith.constant 0 : index
    %c0_0 = arith.constant 0 : index
    %0 = vector.load %arg3[%c0, %c0_0] : memref<16x4xf32, #tpu.memory_space<vmem>>, vector<16x4xf32>
    %c0_1 = arith.constant 0 : index
    %c0_2 = arith.constant 0 : index
    %1 = vector.load %arg6[%c0_1, %c0_2] : memref<16x9xf32, #tpu.memory_space<vmem>>, vector<16x9xf32>
    %c0_3 = arith.constant 0 : index
    %c0_4 = arith.constant 0 : index
    %c0_5 = arith.constant 0 : index
    %2 = vector.load %arg2[%c0_3, %c0_4, %c0_5] : memref<9x1x256xf32, #tpu.memory_space<vmem>>, vector<9x1x256xf32>
    %c0_6 = arith.constant 0 : index
    %c0_7 = arith.constant 0 : index
    %3 = vector.load %arg13[%c0_6, %c0_7] : memref<4x16xf32, #tpu.memory_space<vmem>>, vector<4x16xf32>
    %c0_8 = arith.constant 0 : index
    %c0_9 = arith.constant 0 : index
    %4 = vector.load %arg4[%c0_8, %c0_9] : memref<16x1xf32, #tpu.memory_space<vmem>>, vector<16x1xf32>
    %c0_10 = arith.constant 0 : index
    %c0_11 = arith.constant 0 : index
    %5 = vector.load %arg5[%c0_10, %c0_11] : memref<16x1xf32, #tpu.memory_space<vmem>>, vector<16x1xf32>
    %c0_12 = arith.constant 0 : index
    %c0_13 = arith.constant 0 : index
    %6 = vector.load %arg7[%c0_12, %c0_13] : memref<16x1xf32, #tpu.memory_space<vmem>>, vector<16x1xf32>
    %c0_14 = arith.constant 0 : index
    %c0_15 = arith.constant 0 : index
    %7 = vector.load %arg8[%c0_14, %c0_15] : memref<16x1xf32, #tpu.memory_space<vmem>>, vector<16x1xf32>
    %c0_16 = arith.constant 0 : index
    %c0_17 = arith.constant 0 : index
    %8 = vector.load %arg14[%c0_16, %c0_17] : memref<4x1xf32, #tpu.memory_space<vmem>>, vector<4x1xf32>
    %c0_18 = arith.constant 0 : index
    %c0_19 = arith.constant 0 : index
    %9 = vector.load %arg15[%c0_18, %c0_19] : memref<4x1xf32, #tpu.memory_space<vmem>>, vector<4x1xf32>
    %c0_20 = arith.constant 0 : index
    %c0_21 = arith.constant 0 : index
    %10 = vector.load %arg9[%c0_20, %c0_21] : memref<4x16xf32, #tpu.memory_space<vmem>>, vector<4x16xf32>
    %c0_22 = arith.constant 0 : index
    %c0_23 = arith.constant 0 : index
    %11 = vector.load %arg10[%c0_22, %c0_23] : memref<4x1xf32, #tpu.memory_space<vmem>>, vector<4x1xf32>
    %c0_24 = arith.constant 0 : index
    %c0_25 = arith.constant 0 : index
    %12 = vector.load %arg11[%c0_24, %c0_25] : memref<16x4xf32, #tpu.memory_space<vmem>>, vector<16x4xf32>
    %c0_26 = arith.constant 0 : index
    %c0_27 = arith.constant 0 : index
    %13 = vector.load %arg12[%c0_26, %c0_27] : memref<16x1xf32, #tpu.memory_space<vmem>>, vector<16x1xf32>
    %c0_28 = arith.constant 0 : index
    %c0_29 = arith.constant 0 : index
    %c0_30 = arith.constant 0 : index
    %14 = vector.load %arg1[%c0_28, %c0_29, %c0_30] : memref<2x4x256xf32, #tpu.memory_space<vmem>>, vector<1x4x256xf32>
    %15 = vector.shape_cast %14 : vector<1x4x256xf32> to vector<4x256xf32>
    %16 = vector.extract_strided_slice %0 {offsets = [0, 0], sizes = [16, 1], strides = [1, 1]} : vector<16x4xf32> to vector<16x1xf32>
    %17 = vector.extract_strided_slice %15 {offsets = [0, 0], sizes = [1, 256], strides = [1, 1]} : vector<4x256xf32> to vector<1x256xf32>
    %18 = vector.broadcast %16 : vector<16x1xf32> to vector<16x256xf32>
    %19 = vector.broadcast %17 : vector<1x256xf32> to vector<16x256xf32>
    %20 = arith.mulf %18, %19 : vector<16x256xf32>
    %21 = vector.extract_strided_slice %0 {offsets = [0, 1], sizes = [16, 1], strides = [1, 1]} : vector<16x4xf32> to vector<16x1xf32>
    %22 = vector.extract_strided_slice %15 {offsets = [1, 0], sizes = [1, 256], strides = [1, 1]} : vector<4x256xf32> to vector<1x256xf32>
    %23 = vector.broadcast %21 : vector<16x1xf32> to vector<16x256xf32>
    %24 = vector.broadcast %22 : vector<1x256xf32> to vector<16x256xf32>
    %25 = arith.mulf %23, %24 : vector<16x256xf32>
    %26 = arith.addf %20, %25 : vector<16x256xf32>
    %27 = vector.extract_strided_slice %0 {offsets = [0, 2], sizes = [16, 1], strides = [1, 1]} : vector<16x4xf32> to vector<16x1xf32>
    %28 = vector.extract_strided_slice %15 {offsets = [2, 0], sizes = [1, 256], strides = [1, 1]} : vector<4x256xf32> to vector<1x256xf32>
    %29 = vector.broadcast %27 : vector<16x1xf32> to vector<16x256xf32>
    %30 = vector.broadcast %28 : vector<1x256xf32> to vector<16x256xf32>
    %31 = arith.mulf %29, %30 : vector<16x256xf32>
    %32 = arith.addf %26, %31 : vector<16x256xf32>
    %33 = vector.extract_strided_slice %0 {offsets = [0, 3], sizes = [16, 1], strides = [1, 1]} : vector<16x4xf32> to vector<16x1xf32>
    %34 = vector.extract_strided_slice %15 {offsets = [3, 0], sizes = [1, 256], strides = [1, 1]} : vector<4x256xf32> to vector<1x256xf32>
    %35 = vector.broadcast %33 : vector<16x1xf32> to vector<16x256xf32>
    %36 = vector.broadcast %34 : vector<1x256xf32> to vector<16x256xf32>
    %37 = arith.mulf %35, %36 : vector<16x256xf32>
    %38 = arith.addf %32, %37 : vector<16x256xf32>
    %39 = vector.broadcast %4 : vector<16x1xf32> to vector<16x256xf32>
    %40 = arith.mulf %38, %39 : vector<16x256xf32>
    %41 = vector.broadcast %5 : vector<16x1xf32> to vector<16x256xf32>
    %42 = arith.addf %40, %41 : vector<16x256xf32>
    %43 = arith.negf %42 : vector<16x256xf32>
    %44 = math.exp %43 : vector<16x256xf32>
    %cst = arith.constant 1.000000e+00 : f32
    %45 = vector.broadcast %cst : f32 to vector<16x256xf32>
    %46 = arith.addf %45, %44 : vector<16x256xf32>
    %47 = arith.divf %45, %46 : vector<16x256xf32>
    %48 = arith.mulf %42, %47 : vector<16x256xf32>
    %cst_31 = arith.constant 0.000000e+00 : f32
    %49 = vector.broadcast %cst_31 : f32 to vector<16x256xf32>
    %50 = vector.extract_strided_slice %48 {offsets = [0, 239], sizes = [16, 17], strides = [1, 1]} : vector<16x256xf32> to vector<16x17xf32>
    %51 = vector.extract_strided_slice %48 {offsets = [0, 0], sizes = [16, 239], strides = [1, 1]} : vector<16x256xf32> to vector<16x239xf32>
    %52 = tpu.concatenate %50, %51 in 1 : vector<16x17xf32>, vector<16x239xf32> -> vector<16x256xf32>
    %53 = vector.extract_strided_slice %1 {offsets = [0, 0], sizes = [16, 1], strides = [1, 1]} : vector<16x9xf32> to vector<16x1xf32>
    %54 = vector.broadcast %53 : vector<16x1xf32> to vector<16x256xf32>
    %55 = arith.mulf %52, %54 : vector<16x256xf32>
    %56 = vector.extract_strided_slice %2 {offsets = [0, 0, 0], sizes = [1, 1, 256], strides = [1, 1, 1]} : vector<9x1x256xf32> to vector<1x1x256xf32>
    %57 = vector.shape_cast %56 : vector<1x1x256xf32> to vector<1x256xf32>
    %58 = vector.broadcast %57 : vector<1x256xf32> to vector<16x256xf32>
    %59 = arith.mulf %55, %58 : vector<16x256xf32>
    %60 = arith.addf %49, %59 : vector<16x256xf32>
    %61 = vector.extract_strided_slice %48 {offsets = [0, 240], sizes = [16, 16], strides = [1, 1]} : vector<16x256xf32> to vector<16x16xf32>
    %62 = vector.extract_strided_slice %48 {offsets = [0, 0], sizes = [16, 240], strides = [1, 1]} : vector<16x256xf32> to vector<16x240xf32>
    %63 = tpu.concatenate %61, %62 in 1 : vector<16x16xf32>, vector<16x240xf32> -> vector<16x256xf32>
    %64 = vector.extract_strided_slice %1 {offsets = [0, 1], sizes = [16, 1], strides = [1, 1]} : vector<16x9xf32> to vector<16x1xf32>
    %65 = vector.broadcast %64 : vector<16x1xf32> to vector<16x256xf32>
    %66 = arith.mulf %63, %65 : vector<16x256xf32>
    %67 = vector.extract_strided_slice %2 {offsets = [1, 0, 0], sizes = [1, 1, 256], strides = [1, 1, 1]} : vector<9x1x256xf32> to vector<1x1x256xf32>
    %68 = vector.shape_cast %67 : vector<1x1x256xf32> to vector<1x256xf32>
    %69 = vector.broadcast %68 : vector<1x256xf32> to vector<16x256xf32>
    %70 = arith.mulf %66, %69 : vector<16x256xf32>
    %71 = arith.addf %60, %70 : vector<16x256xf32>
    %72 = vector.extract_strided_slice %48 {offsets = [0, 241], sizes = [16, 15], strides = [1, 1]} : vector<16x256xf32> to vector<16x15xf32>
    %73 = vector.extract_strided_slice %48 {offsets = [0, 0], sizes = [16, 241], strides = [1, 1]} : vector<16x256xf32> to vector<16x241xf32>
    %74 = tpu.concatenate %72, %73 in 1 : vector<16x15xf32>, vector<16x241xf32> -> vector<16x256xf32>
    %75 = vector.extract_strided_slice %1 {offsets = [0, 2], sizes = [16, 1], strides = [1, 1]} : vector<16x9xf32> to vector<16x1xf32>
    %76 = vector.broadcast %75 : vector<16x1xf32> to vector<16x256xf32>
    %77 = arith.mulf %74, %76 : vector<16x256xf32>
    %78 = vector.extract_strided_slice %2 {offsets = [2, 0, 0], sizes = [1, 1, 256], strides = [1, 1, 1]} : vector<9x1x256xf32> to vector<1x1x256xf32>
    %79 = vector.shape_cast %78 : vector<1x1x256xf32> to vector<1x256xf32>
    %80 = vector.broadcast %79 : vector<1x256xf32> to vector<16x256xf32>
    %81 = arith.mulf %77, %80 : vector<16x256xf32>
    %82 = arith.addf %71, %81 : vector<16x256xf32>
    %83 = vector.extract_strided_slice %48 {offsets = [0, 255], sizes = [16, 1], strides = [1, 1]} : vector<16x256xf32> to vector<16x1xf32>
    %84 = vector.extract_strided_slice %48 {offsets = [0, 0], sizes = [16, 255], strides = [1, 1]} : vector<16x256xf32> to vector<16x255xf32>
    %85 = tpu.concatenate %83, %84 in 1 : vector<16x1xf32>, vector<16x255xf32> -> vector<16x256xf32>
    %86 = vector.extract_strided_slice %1 {offsets = [0, 3], sizes = [16, 1], strides = [1, 1]} : vector<16x9xf32> to vector<16x1xf32>
    %87 = vector.broadcast %86 : vector<16x1xf32> to vector<16x256xf32>
    %88 = arith.mulf %85, %87 : vector<16x256xf32>
    %89 = vector.extract_strided_slice %2 {offsets = [3, 0, 0], sizes = [1, 1, 256], strides = [1, 1, 1]} : vector<9x1x256xf32> to vector<1x1x256xf32>
    %90 = vector.shape_cast %89 : vector<1x1x256xf32> to vector<1x256xf32>
    %91 = vector.broadcast %90 : vector<1x256xf32> to vector<16x256xf32>
    %92 = arith.mulf %88, %91 : vector<16x256xf32>
    %93 = arith.addf %82, %92 : vector<16x256xf32>
    %94 = vector.extract_strided_slice %1 {offsets = [0, 4], sizes = [16, 1], strides = [1, 1]} : vector<16x9xf32> to vector<16x1xf32>
    %95 = vector.broadcast %94 : vector<16x1xf32> to vector<16x256xf32>
    %96 = arith.mulf %48, %95 : vector<16x256xf32>
    %97 = arith.addf %93, %96 : vector<16x256xf32>
    %98 = vector.extract_strided_slice %48 {offsets = [0, 1], sizes = [16, 255], strides = [1, 1]} : vector<16x256xf32> to vector<16x255xf32>
    %99 = vector.extract_strided_slice %48 {offsets = [0, 0], sizes = [16, 1], strides = [1, 1]} : vector<16x256xf32> to vector<16x1xf32>
    %100 = tpu.concatenate %98, %99 in 1 : vector<16x255xf32>, vector<16x1xf32> -> vector<16x256xf32>
    %101 = vector.extract_strided_slice %1 {offsets = [0, 5], sizes = [16, 1], strides = [1, 1]} : vector<16x9xf32> to vector<16x1xf32>
    %102 = vector.broadcast %101 : vector<16x1xf32> to vector<16x256xf32>
    %103 = arith.mulf %100, %102 : vector<16x256xf32>
    %104 = vector.extract_strided_slice %2 {offsets = [5, 0, 0], sizes = [1, 1, 256], strides = [1, 1, 1]} : vector<9x1x256xf32> to vector<1x1x256xf32>
    %105 = vector.shape_cast %104 : vector<1x1x256xf32> to vector<1x256xf32>
    %106 = vector.broadcast %105 : vector<1x256xf32> to vector<16x256xf32>
    %107 = arith.mulf %103, %106 : vector<16x256xf32>
    %108 = arith.addf %97, %107 : vector<16x256xf32>
    %109 = vector.extract_strided_slice %48 {offsets = [0, 15], sizes = [16, 241], strides = [1, 1]} : vector<16x256xf32> to vector<16x241xf32>
    %110 = vector.extract_strided_slice %48 {offsets = [0, 0], sizes = [16, 15], strides = [1, 1]} : vector<16x256xf32> to vector<16x15xf32>
    %111 = tpu.concatenate %109, %110 in 1 : vector<16x241xf32>, vector<16x15xf32> -> vector<16x256xf32>
    %112 = vector.extract_strided_slice %1 {offsets = [0, 6], sizes = [16, 1], strides = [1, 1]} : vector<16x9xf32> to vector<16x1xf32>
    %113 = vector.broadcast %112 : vector<16x1xf32> to vector<16x256xf32>
    %114 = arith.mulf %111, %113 : vector<16x256xf32>
    %115 = vector.extract_strided_slice %2 {offsets = [6, 0, 0], sizes = [1, 1, 256], strides = [1, 1, 1]} : vector<9x1x256xf32> to vector<1x1x256xf32>
    %116 = vector.shape_cast %115 : vector<1x1x256xf32> to vector<1x256xf32>
    %117 = vector.broadcast %116 : vector<1x256xf32> to vector<16x256xf32>
    %118 = arith.mulf %114, %117 : vector<16x256xf32>
    %119 = arith.addf %108, %118 : vector<16x256xf32>
    %120 = vector.extract_strided_slice %48 {offsets = [0, 16], sizes = [16, 240], strides = [1, 1]} : vector<16x256xf32> to vector<16x240xf32>
    %121 = vector.extract_strided_slice %48 {offsets = [0, 0], sizes = [16, 16], strides = [1, 1]} : vector<16x256xf32> to vector<16x16xf32>
    %122 = tpu.concatenate %120, %121 in 1 : vector<16x240xf32>, vector<16x16xf32> -> vector<16x256xf32>
    %123 = vector.extract_strided_slice %1 {offsets = [0, 7], sizes = [16, 1], strides = [1, 1]} : vector<16x9xf32> to vector<16x1xf32>
    %124 = vector.broadcast %123 : vector<16x1xf32> to vector<16x256xf32>
    %125 = arith.mulf %122, %124 : vector<16x256xf32>
    %126 = vector.extract_strided_slice %2 {offsets = [7, 0, 0], sizes = [1, 1, 256], strides = [1, 1, 1]} : vector<9x1x256xf32> to vector<1x1x256xf32>
    %127 = vector.shape_cast %126 : vector<1x1x256xf32> to vector<1x256xf32>
    %128 = vector.broadcast %127 : vector<1x256xf32> to vector<16x256xf32>
    %129 = arith.mulf %125, %128 : vector<16x256xf32>
    %130 = arith.addf %119, %129 : vector<16x256xf32>
    %131 = vector.extract_strided_slice %48 {offsets = [0, 17], sizes = [16, 239], strides = [1, 1]} : vector<16x256xf32> to vector<16x239xf32>
    %132 = vector.extract_strided_slice %48 {offsets = [0, 0], sizes = [16, 17], strides = [1, 1]} : vector<16x256xf32> to vector<16x17xf32>
    %133 = tpu.concatenate %131, %132 in 1 : vector<16x239xf32>, vector<16x17xf32> -> vector<16x256xf32>
    %134 = vector.extract_strided_slice %1 {offsets = [0, 8], sizes = [16, 1], strides = [1, 1]} : vector<16x9xf32> to vector<16x1xf32>
    %135 = vector.broadcast %134 : vector<16x1xf32> to vector<16x256xf32>
    %136 = arith.mulf %133, %135 : vector<16x256xf32>
    %137 = vector.extract_strided_slice %2 {offsets = [8, 0, 0], sizes = [1, 1, 256], strides = [1, 1, 1]} : vector<9x1x256xf32> to vector<1x1x256xf32>
    %138 = vector.shape_cast %137 : vector<1x1x256xf32> to vector<1x256xf32>
    %139 = vector.broadcast %138 : vector<1x256xf32> to vector<16x256xf32>
    %140 = arith.mulf %136, %139 : vector<16x256xf32>
    %141 = arith.addf %130, %140 : vector<16x256xf32>
    %142 = vector.broadcast %6 : vector<16x1xf32> to vector<16x256xf32>
    %143 = arith.mulf %141, %142 : vector<16x256xf32>
    %144 = vector.broadcast %7 : vector<16x1xf32> to vector<16x256xf32>
    %145 = arith.addf %143, %144 : vector<16x256xf32>
    %146 = arith.negf %145 : vector<16x256xf32>
    %147 = math.exp %146 : vector<16x256xf32>
    %cst_32 = arith.constant 1.000000e+00 : f32
    %148 = vector.broadcast %cst_32 : f32 to vector<16x256xf32>
    %149 = arith.addf %148, %147 : vector<16x256xf32>
    %150 = arith.divf %148, %149 : vector<16x256xf32>
    %151 = arith.mulf %145, %150 : vector<16x256xf32>
    %cst_33 = arith.constant dense<0.000000e+00> : vector<16xf32>
    %152 = vector.multi_reduction <add>, %151, %cst_33 [1] : vector<16x256xf32> to vector<16xf32>
    %153 = vector.shape_cast %152 : vector<16xf32> to vector<16x1xf32>
    %cst_34 = arith.constant 2.560000e+02 : f32
    %154 = vector.broadcast %cst_34 : f32 to vector<16x1xf32>
    %155 = arith.divf %153, %154 : vector<16x1xf32>
    %156 = vector.extract_strided_slice %10 {offsets = [0, 0], sizes = [4, 1], strides = [1, 1]} : vector<4x16xf32> to vector<4x1xf32>
    %157 = vector.extract_strided_slice %155 {offsets = [0, 0], sizes = [1, 1], strides = [1, 1]} : vector<16x1xf32> to vector<1x1xf32>
    %158 = vector.broadcast %157 : vector<1x1xf32> to vector<4x1xf32>
    %159 = arith.mulf %156, %158 : vector<4x1xf32>
    %160 = vector.extract_strided_slice %10 {offsets = [0, 1], sizes = [4, 1], strides = [1, 1]} : vector<4x16xf32> to vector<4x1xf32>
    %161 = vector.extract_strided_slice %155 {offsets = [1, 0], sizes = [1, 1], strides = [1, 1]} : vector<16x1xf32> to vector<1x1xf32>
    %162 = vector.broadcast %161 : vector<1x1xf32> to vector<4x1xf32>
    %163 = arith.mulf %160, %162 : vector<4x1xf32>
    %164 = arith.addf %159, %163 : vector<4x1xf32>
    %165 = vector.extract_strided_slice %10 {offsets = [0, 2], sizes = [4, 1], strides = [1, 1]} : vector<4x16xf32> to vector<4x1xf32>
    %166 = vector.extract_strided_slice %155 {offsets = [2, 0], sizes = [1, 1], strides = [1, 1]} : vector<16x1xf32> to vector<1x1xf32>
    %167 = vector.broadcast %166 : vector<1x1xf32> to vector<4x1xf32>
    %168 = arith.mulf %165, %167 : vector<4x1xf32>
    %169 = arith.addf %164, %168 : vector<4x1xf32>
    %170 = vector.extract_strided_slice %10 {offsets = [0, 3], sizes = [4, 1], strides = [1, 1]} : vector<4x16xf32> to vector<4x1xf32>
    %171 = vector.extract_strided_slice %155 {offsets = [3, 0], sizes = [1, 1], strides = [1, 1]} : vector<16x1xf32> to vector<1x1xf32>
    %172 = vector.broadcast %171 : vector<1x1xf32> to vector<4x1xf32>
    %173 = arith.mulf %170, %172 : vector<4x1xf32>
    %174 = arith.addf %169, %173 : vector<4x1xf32>
    %175 = vector.extract_strided_slice %10 {offsets = [0, 4], sizes = [4, 1], strides = [1, 1]} : vector<4x16xf32> to vector<4x1xf32>
    %176 = vector.extract_strided_slice %155 {offsets = [4, 0], sizes = [1, 1], strides = [1, 1]} : vector<16x1xf32> to vector<1x1xf32>
    %177 = vector.broadcast %176 : vector<1x1xf32> to vector<4x1xf32>
    %178 = arith.mulf %175, %177 : vector<4x1xf32>
    %179 = arith.addf %174, %178 : vector<4x1xf32>
    %180 = vector.extract_strided_slice %10 {offsets = [0, 5], sizes = [4, 1], strides = [1, 1]} : vector<4x16xf32> to vector<4x1xf32>
    %181 = vector.extract_strided_slice %155 {offsets = [5, 0], sizes = [1, 1], strides = [1, 1]} : vector<16x1xf32> to vector<1x1xf32>
    %182 = vector.broadcast %181 : vector<1x1xf32> to vector<4x1xf32>
    %183 = arith.mulf %180, %182 : vector<4x1xf32>
    %184 = arith.addf %179, %183 : vector<4x1xf32>
    %185 = vector.extract_strided_slice %10 {offsets = [0, 6], sizes = [4, 1], strides = [1, 1]} : vector<4x16xf32> to vector<4x1xf32>
    %186 = vector.extract_strided_slice %155 {offsets = [6, 0], sizes = [1, 1], strides = [1, 1]} : vector<16x1xf32> to vector<1x1xf32>
    %187 = vector.broadcast %186 : vector<1x1xf32> to vector<4x1xf32>
    %188 = arith.mulf %185, %187 : vector<4x1xf32>
    %189 = arith.addf %184, %188 : vector<4x1xf32>
    %190 = vector.extract_strided_slice %10 {offsets = [0, 7], sizes = [4, 1], strides = [1, 1]} : vector<4x16xf32> to vector<4x1xf32>
    %191 = vector.extract_strided_slice %155 {offsets = [7, 0], sizes = [1, 1], strides = [1, 1]} : vector<16x1xf32> to vector<1x1xf32>
    %192 = vector.broadcast %191 : vector<1x1xf32> to vector<4x1xf32>
    %193 = arith.mulf %190, %192 : vector<4x1xf32>
    %194 = arith.addf %189, %193 : vector<4x1xf32>
    %195 = vector.extract_strided_slice %10 {offsets = [0, 8], sizes = [4, 1], strides = [1, 1]} : vector<4x16xf32> to vector<4x1xf32>
    %196 = vector.extract_strided_slice %155 {offsets = [8, 0], sizes = [1, 1], strides = [1, 1]} : vector<16x1xf32> to vector<1x1xf32>
    %197 = vector.broadcast %196 : vector<1x1xf32> to vector<4x1xf32>
    %198 = arith.mulf %195, %197 : vector<4x1xf32>
    %199 = arith.addf %194, %198 : vector<4x1xf32>
    %200 = vector.extract_strided_slice %10 {offsets = [0, 9], sizes = [4, 1], strides = [1, 1]} : vector<4x16xf32> to vector<4x1xf32>
    %201 = vector.extract_strided_slice %155 {offsets = [9, 0], sizes = [1, 1], strides = [1, 1]} : vector<16x1xf32> to vector<1x1xf32>
    %202 = vector.broadcast %201 : vector<1x1xf32> to vector<4x1xf32>
    %203 = arith.mulf %200, %202 : vector<4x1xf32>
    %204 = arith.addf %199, %203 : vector<4x1xf32>
    %205 = vector.extract_strided_slice %10 {offsets = [0, 10], sizes = [4, 1], strides = [1, 1]} : vector<4x16xf32> to vector<4x1xf32>
    %206 = vector.extract_strided_slice %155 {offsets = [10, 0], sizes = [1, 1], strides = [1, 1]} : vector<16x1xf32> to vector<1x1xf32>
    %207 = vector.broadcast %206 : vector<1x1xf32> to vector<4x1xf32>
    %208 = arith.mulf %205, %207 : vector<4x1xf32>
    %209 = arith.addf %204, %208 : vector<4x1xf32>
    %210 = vector.extract_strided_slice %10 {offsets = [0, 11], sizes = [4, 1], strides = [1, 1]} : vector<4x16xf32> to vector<4x1xf32>
    %211 = vector.extract_strided_slice %155 {offsets = [11, 0], sizes = [1, 1], strides = [1, 1]} : vector<16x1xf32> to vector<1x1xf32>
    %212 = vector.broadcast %211 : vector<1x1xf32> to vector<4x1xf32>
    %213 = arith.mulf %210, %212 : vector<4x1xf32>
    %214 = arith.addf %209, %213 : vector<4x1xf32>
    %215 = vector.extract_strided_slice %10 {offsets = [0, 12], sizes = [4, 1], strides = [1, 1]} : vector<4x16xf32> to vector<4x1xf32>
    %216 = vector.extract_strided_slice %155 {offsets = [12, 0], sizes = [1, 1], strides = [1, 1]} : vector<16x1xf32> to vector<1x1xf32>
    %217 = vector.broadcast %216 : vector<1x1xf32> to vector<4x1xf32>
    %218 = arith.mulf %215, %217 : vector<4x1xf32>
    %219 = arith.addf %214, %218 : vector<4x1xf32>
    %220 = vector.extract_strided_slice %10 {offsets = [0, 13], sizes = [4, 1], strides = [1, 1]} : vector<4x16xf32> to vector<4x1xf32>
    %221 = vector.extract_strided_slice %155 {offsets = [13, 0], sizes = [1, 1], strides = [1, 1]} : vector<16x1xf32> to vector<1x1xf32>
    %222 = vector.broadcast %221 : vector<1x1xf32> to vector<4x1xf32>
    %223 = arith.mulf %220, %222 : vector<4x1xf32>
    %224 = arith.addf %219, %223 : vector<4x1xf32>
    %225 = vector.extract_strided_slice %10 {offsets = [0, 14], sizes = [4, 1], strides = [1, 1]} : vector<4x16xf32> to vector<4x1xf32>
    %226 = vector.extract_strided_slice %155 {offsets = [14, 0], sizes = [1, 1], strides = [1, 1]} : vector<16x1xf32> to vector<1x1xf32>
    %227 = vector.broadcast %226 : vector<1x1xf32> to vector<4x1xf32>
    %228 = arith.mulf %225, %227 : vector<4x1xf32>
    %229 = arith.addf %224, %228 : vector<4x1xf32>
    %230 = vector.extract_strided_slice %10 {offsets = [0, 15], sizes = [4, 1], strides = [1, 1]} : vector<4x16xf32> to vector<4x1xf32>
    %231 = vector.extract_strided_slice %155 {offsets = [15, 0], sizes = [1, 1], strides = [1, 1]} : vector<16x1xf32> to vector<1x1xf32>
    %232 = vector.broadcast %231 : vector<1x1xf32> to vector<4x1xf32>
    %233 = arith.mulf %230, %232 : vector<4x1xf32>
    %234 = arith.addf %229, %233 : vector<4x1xf32>
    %235 = arith.addf %234, %11 : vector<4x1xf32>
    %236 = arith.negf %235 : vector<4x1xf32>
    %237 = math.exp %236 : vector<4x1xf32>
    %cst_35 = arith.constant 1.000000e+00 : f32
    %238 = vector.broadcast %cst_35 : f32 to vector<4x1xf32>
    %239 = arith.addf %238, %237 : vector<4x1xf32>
    %240 = arith.divf %238, %239 : vector<4x1xf32>
    %241 = arith.mulf %235, %240 : vector<4x1xf32>
    %242 = vector.extract_strided_slice %12 {offsets = [0, 0], sizes = [16, 1], strides = [1, 1]} : vector<16x4xf32> to vector<16x1xf32>
    %243 = vector.extract_strided_slice %241 {offsets = [0, 0], sizes = [1, 1], strides = [1, 1]} : vector<4x1xf32> to vector<1x1xf32>
    %244 = vector.broadcast %243 : vector<1x1xf32> to vector<16x1xf32>
    %245 = arith.mulf %242, %244 : vector<16x1xf32>
    %246 = vector.extract_strided_slice %12 {offsets = [0, 1], sizes = [16, 1], strides = [1, 1]} : vector<16x4xf32> to vector<16x1xf32>
    %247 = vector.extract_strided_slice %241 {offsets = [1, 0], sizes = [1, 1], strides = [1, 1]} : vector<4x1xf32> to vector<1x1xf32>
    %248 = vector.broadcast %247 : vector<1x1xf32> to vector<16x1xf32>
    %249 = arith.mulf %246, %248 : vector<16x1xf32>
    %250 = arith.addf %245, %249 : vector<16x1xf32>
    %251 = vector.extract_strided_slice %12 {offsets = [0, 2], sizes = [16, 1], strides = [1, 1]} : vector<16x4xf32> to vector<16x1xf32>
    %252 = vector.extract_strided_slice %241 {offsets = [2, 0], sizes = [1, 1], strides = [1, 1]} : vector<4x1xf32> to vector<1x1xf32>
    %253 = vector.broadcast %252 : vector<1x1xf32> to vector<16x1xf32>
    %254 = arith.mulf %251, %253 : vector<16x1xf32>
    %255 = arith.addf %250, %254 : vector<16x1xf32>
    %256 = vector.extract_strided_slice %12 {offsets = [0, 3], sizes = [16, 1], strides = [1, 1]} : vector<16x4xf32> to vector<16x1xf32>
    %257 = vector.extract_strided_slice %241 {offsets = [3, 0], sizes = [1, 1], strides = [1, 1]} : vector<4x1xf32> to vector<1x1xf32>
    %258 = vector.broadcast %257 : vector<1x1xf32> to vector<16x1xf32>
    %259 = arith.mulf %256, %258 : vector<16x1xf32>
    %260 = arith.addf %255, %259 : vector<16x1xf32>
    %261 = arith.addf %260, %13 : vector<16x1xf32>
    %262 = arith.negf %261 : vector<16x1xf32>
    %263 = math.exp %262 : vector<16x1xf32>
    %cst_36 = arith.constant 1.000000e+00 : f32
    %264 = vector.broadcast %cst_36 : f32 to vector<16x1xf32>
    %265 = arith.addf %264, %263 : vector<16x1xf32>
    %266 = arith.divf %264, %265 : vector<16x1xf32>
    %267 = vector.broadcast %266 : vector<16x1xf32> to vector<16x256xf32>
    %268 = arith.mulf %151, %267 : vector<16x256xf32>
    %269 = vector.extract_strided_slice %3 {offsets = [0, 0], sizes = [4, 1], strides = [1, 1]} : vector<4x16xf32> to vector<4x1xf32>
    %270 = vector.extract_strided_slice %268 {offsets = [0, 0], sizes = [1, 256], strides = [1, 1]} : vector<16x256xf32> to vector<1x256xf32>
    %271 = vector.broadcast %269 : vector<4x1xf32> to vector<4x256xf32>
    %272 = vector.broadcast %270 : vector<1x256xf32> to vector<4x256xf32>
    %273 = arith.mulf %271, %272 : vector<4x256xf32>
    %274 = vector.extract_strided_slice %3 {offsets = [0, 1], sizes = [4, 1], strides = [1, 1]} : vector<4x16xf32> to vector<4x1xf32>
    %275 = vector.extract_strided_slice %268 {offsets = [1, 0], sizes = [1, 256], strides = [1, 1]} : vector<16x256xf32> to vector<1x256xf32>
    %276 = vector.broadcast %274 : vector<4x1xf32> to vector<4x256xf32>
    %277 = vector.broadcast %275 : vector<1x256xf32> to vector<4x256xf32>
    %278 = arith.mulf %276, %277 : vector<4x256xf32>
    %279 = arith.addf %273, %278 : vector<4x256xf32>
    %280 = vector.extract_strided_slice %3 {offsets = [0, 2], sizes = [4, 1], strides = [1, 1]} : vector<4x16xf32> to vector<4x1xf32>
    %281 = vector.extract_strided_slice %268 {offsets = [2, 0], sizes = [1, 256], strides = [1, 1]} : vector<16x256xf32> to vector<1x256xf32>
    %282 = vector.broadcast %280 : vector<4x1xf32> to vector<4x256xf32>
    %283 = vector.broadcast %281 : vector<1x256xf32> to vector<4x256xf32>
    %284 = arith.mulf %282, %283 : vector<4x256xf32>
    %285 = arith.addf %279, %284 : vector<4x256xf32>
    %286 = vector.extract_strided_slice %3 {offsets = [0, 3], sizes = [4, 1], strides = [1, 1]} : vector<4x16xf32> to vector<4x1xf32>
    %287 = vector.extract_strided_slice %268 {offsets = [3, 0], sizes = [1, 256], strides = [1, 1]} : vector<16x256xf32> to vector<1x256xf32>
    %288 = vector.broadcast %286 : vector<4x1xf32> to vector<4x256xf32>
    %289 = vector.broadcast %287 : vector<1x256xf32> to vector<4x256xf32>
    %290 = arith.mulf %288, %289 : vector<4x256xf32>
    %291 = arith.addf %285, %290 : vector<4x256xf32>
    %292 = vector.extract_strided_slice %3 {offsets = [0, 4], sizes = [4, 1], strides = [1, 1]} : vector<4x16xf32> to vector<4x1xf32>
    %293 = vector.extract_strided_slice %268 {offsets = [4, 0], sizes = [1, 256], strides = [1, 1]} : vector<16x256xf32> to vector<1x256xf32>
    %294 = vector.broadcast %292 : vector<4x1xf32> to vector<4x256xf32>
    %295 = vector.broadcast %293 : vector<1x256xf32> to vector<4x256xf32>
    %296 = arith.mulf %294, %295 : vector<4x256xf32>
    %297 = arith.addf %291, %296 : vector<4x256xf32>
    %298 = vector.extract_strided_slice %3 {offsets = [0, 5], sizes = [4, 1], strides = [1, 1]} : vector<4x16xf32> to vector<4x1xf32>
    %299 = vector.extract_strided_slice %268 {offsets = [5, 0], sizes = [1, 256], strides = [1, 1]} : vector<16x256xf32> to vector<1x256xf32>
    %300 = vector.broadcast %298 : vector<4x1xf32> to vector<4x256xf32>
    %301 = vector.broadcast %299 : vector<1x256xf32> to vector<4x256xf32>
    %302 = arith.mulf %300, %301 : vector<4x256xf32>
    %303 = arith.addf %297, %302 : vector<4x256xf32>
    %304 = vector.extract_strided_slice %3 {offsets = [0, 6], sizes = [4, 1], strides = [1, 1]} : vector<4x16xf32> to vector<4x1xf32>
    %305 = vector.extract_strided_slice %268 {offsets = [6, 0], sizes = [1, 256], strides = [1, 1]} : vector<16x256xf32> to vector<1x256xf32>
    %306 = vector.broadcast %304 : vector<4x1xf32> to vector<4x256xf32>
    %307 = vector.broadcast %305 : vector<1x256xf32> to vector<4x256xf32>
    %308 = arith.mulf %306, %307 : vector<4x256xf32>
    %309 = arith.addf %303, %308 : vector<4x256xf32>
    %310 = vector.extract_strided_slice %3 {offsets = [0, 7], sizes = [4, 1], strides = [1, 1]} : vector<4x16xf32> to vector<4x1xf32>
    %311 = vector.extract_strided_slice %268 {offsets = [7, 0], sizes = [1, 256], strides = [1, 1]} : vector<16x256xf32> to vector<1x256xf32>
    %312 = vector.broadcast %310 : vector<4x1xf32> to vector<4x256xf32>
    %313 = vector.broadcast %311 : vector<1x256xf32> to vector<4x256xf32>
    %314 = arith.mulf %312, %313 : vector<4x256xf32>
    %315 = arith.addf %309, %314 : vector<4x256xf32>
    %316 = vector.extract_strided_slice %3 {offsets = [0, 8], sizes = [4, 1], strides = [1, 1]} : vector<4x16xf32> to vector<4x1xf32>
    %317 = vector.extract_strided_slice %268 {offsets = [8, 0], sizes = [1, 256], strides = [1, 1]} : vector<16x256xf32> to vector<1x256xf32>
    %318 = vector.broadcast %316 : vector<4x1xf32> to vector<4x256xf32>
    %319 = vector.broadcast %317 : vector<1x256xf32> to vector<4x256xf32>
    %320 = arith.mulf %318, %319 : vector<4x256xf32>
    %321 = arith.addf %315, %320 : vector<4x256xf32>
    %322 = vector.extract_strided_slice %3 {offsets = [0, 9], sizes = [4, 1], strides = [1, 1]} : vector<4x16xf32> to vector<4x1xf32>
    %323 = vector.extract_strided_slice %268 {offsets = [9, 0], sizes = [1, 256], strides = [1, 1]} : vector<16x256xf32> to vector<1x256xf32>
    %324 = vector.broadcast %322 : vector<4x1xf32> to vector<4x256xf32>
    %325 = vector.broadcast %323 : vector<1x256xf32> to vector<4x256xf32>
    %326 = arith.mulf %324, %325 : vector<4x256xf32>
    %327 = arith.addf %321, %326 : vector<4x256xf32>
    %328 = vector.extract_strided_slice %3 {offsets = [0, 10], sizes = [4, 1], strides = [1, 1]} : vector<4x16xf32> to vector<4x1xf32>
    %329 = vector.extract_strided_slice %268 {offsets = [10, 0], sizes = [1, 256], strides = [1, 1]} : vector<16x256xf32> to vector<1x256xf32>
    %330 = vector.broadcast %328 : vector<4x1xf32> to vector<4x256xf32>
    %331 = vector.broadcast %329 : vector<1x256xf32> to vector<4x256xf32>
    %332 = arith.mulf %330, %331 : vector<4x256xf32>
    %333 = arith.addf %327, %332 : vector<4x256xf32>
    %334 = vector.extract_strided_slice %3 {offsets = [0, 11], sizes = [4, 1], strides = [1, 1]} : vector<4x16xf32> to vector<4x1xf32>
    %335 = vector.extract_strided_slice %268 {offsets = [11, 0], sizes = [1, 256], strides = [1, 1]} : vector<16x256xf32> to vector<1x256xf32>
    %336 = vector.broadcast %334 : vector<4x1xf32> to vector<4x256xf32>
    %337 = vector.broadcast %335 : vector<1x256xf32> to vector<4x256xf32>
    %338 = arith.mulf %336, %337 : vector<4x256xf32>
    %339 = arith.addf %333, %338 : vector<4x256xf32>
    %340 = vector.extract_strided_slice %3 {offsets = [0, 12], sizes = [4, 1], strides = [1, 1]} : vector<4x16xf32> to vector<4x1xf32>
    %341 = vector.extract_strided_slice %268 {offsets = [12, 0], sizes = [1, 256], strides = [1, 1]} : vector<16x256xf32> to vector<1x256xf32>
    %342 = vector.broadcast %340 : vector<4x1xf32> to vector<4x256xf32>
    %343 = vector.broadcast %341 : vector<1x256xf32> to vector<4x256xf32>
    %344 = arith.mulf %342, %343 : vector<4x256xf32>
    %345 = arith.addf %339, %344 : vector<4x256xf32>
    %346 = vector.extract_strided_slice %3 {offsets = [0, 13], sizes = [4, 1], strides = [1, 1]} : vector<4x16xf32> to vector<4x1xf32>
    %347 = vector.extract_strided_slice %268 {offsets = [13, 0], sizes = [1, 256], strides = [1, 1]} : vector<16x256xf32> to vector<1x256xf32>
    %348 = vector.broadcast %346 : vector<4x1xf32> to vector<4x256xf32>
    %349 = vector.broadcast %347 : vector<1x256xf32> to vector<4x256xf32>
    %350 = arith.mulf %348, %349 : vector<4x256xf32>
    %351 = arith.addf %345, %350 : vector<4x256xf32>
    %352 = vector.extract_strided_slice %3 {offsets = [0, 14], sizes = [4, 1], strides = [1, 1]} : vector<4x16xf32> to vector<4x1xf32>
    %353 = vector.extract_strided_slice %268 {offsets = [14, 0], sizes = [1, 256], strides = [1, 1]} : vector<16x256xf32> to vector<1x256xf32>
    %354 = vector.broadcast %352 : vector<4x1xf32> to vector<4x256xf32>
    %355 = vector.broadcast %353 : vector<1x256xf32> to vector<4x256xf32>
    %356 = arith.mulf %354, %355 : vector<4x256xf32>
    %357 = arith.addf %351, %356 : vector<4x256xf32>
    %358 = vector.extract_strided_slice %3 {offsets = [0, 15], sizes = [4, 1], strides = [1, 1]} : vector<4x16xf32> to vector<4x1xf32>
    %359 = vector.extract_strided_slice %268 {offsets = [15, 0], sizes = [1, 256], strides = [1, 1]} : vector<16x256xf32> to vector<1x256xf32>
    %360 = vector.broadcast %358 : vector<4x1xf32> to vector<4x256xf32>
    %361 = vector.broadcast %359 : vector<1x256xf32> to vector<4x256xf32>
    %362 = arith.mulf %360, %361 : vector<4x256xf32>
    %363 = arith.addf %357, %362 : vector<4x256xf32>
    %364 = vector.broadcast %8 : vector<4x1xf32> to vector<4x256xf32>
    %365 = arith.mulf %363, %364 : vector<4x256xf32>
    %366 = vector.broadcast %9 : vector<4x1xf32> to vector<4x256xf32>
    %367 = arith.addf %365, %366 : vector<4x256xf32>
    %368 = arith.addf %367, %15 : vector<4x256xf32>
    %c0_37 = arith.constant 0 : index
    %c0_38 = arith.constant 0 : index
    %c0_39 = arith.constant 0 : index
    %369 = vector.load %arg16[%c0_37, %c0_38, %c0_39] : memref<2x4x256xf32, #tpu.memory_space<vmem>>, vector<1x4x256xf32>
    %370 = vector.shape_cast %369 : vector<1x4x256xf32> to vector<4x256xf32>
    %371 = vector.shape_cast %368 : vector<4x256xf32> to vector<1x4x256xf32>
    tpu.vector_store %arg16[%c0_37, %c0_38, %c0_39], %371 {strides = array<i32>} : memref<2x4x256xf32, #tpu.memory_space<vmem>>, vector<1x4x256xf32>,
    %c1 = arith.constant 1 : index
    %c0_40 = arith.constant 0 : index
    %c0_41 = arith.constant 0 : index
    %372 = vector.load %arg1[%c1, %c0_40, %c0_41] : memref<2x4x256xf32, #tpu.memory_space<vmem>>, vector<1x4x256xf32>
    %373 = vector.shape_cast %372 : vector<1x4x256xf32> to vector<4x256xf32>
    %374 = vector.extract_strided_slice %0 {offsets = [0, 0], sizes = [16, 1], strides = [1, 1]} : vector<16x4xf32> to vector<16x1xf32>
    %375 = vector.extract_strided_slice %373 {offsets = [0, 0], sizes = [1, 256], strides = [1, 1]} : vector<4x256xf32> to vector<1x256xf32>
    %376 = vector.broadcast %374 : vector<16x1xf32> to vector<16x256xf32>
    %377 = vector.broadcast %375 : vector<1x256xf32> to vector<16x256xf32>
    %378 = arith.mulf %376, %377 : vector<16x256xf32>
    %379 = vector.extract_strided_slice %0 {offsets = [0, 1], sizes = [16, 1], strides = [1, 1]} : vector<16x4xf32> to vector<16x1xf32>
    %380 = vector.extract_strided_slice %373 {offsets = [1, 0], sizes = [1, 256], strides = [1, 1]} : vector<4x256xf32> to vector<1x256xf32>
    %381 = vector.broadcast %379 : vector<16x1xf32> to vector<16x256xf32>
    %382 = vector.broadcast %380 : vector<1x256xf32> to vector<16x256xf32>
    %383 = arith.mulf %381, %382 : vector<16x256xf32>
    %384 = arith.addf %378, %383 : vector<16x256xf32>
    %385 = vector.extract_strided_slice %0 {offsets = [0, 2], sizes = [16, 1], strides = [1, 1]} : vector<16x4xf32> to vector<16x1xf32>
    %386 = vector.extract_strided_slice %373 {offsets = [2, 0], sizes = [1, 256], strides = [1, 1]} : vector<4x256xf32> to vector<1x256xf32>
    %387 = vector.broadcast %385 : vector<16x1xf32> to vector<16x256xf32>
    %388 = vector.broadcast %386 : vector<1x256xf32> to vector<16x256xf32>
    %389 = arith.mulf %387, %388 : vector<16x256xf32>
    %390 = arith.addf %384, %389 : vector<16x256xf32>
    %391 = vector.extract_strided_slice %0 {offsets = [0, 3], sizes = [16, 1], strides = [1, 1]} : vector<16x4xf32> to vector<16x1xf32>
    %392 = vector.extract_strided_slice %373 {offsets = [3, 0], sizes = [1, 256], strides = [1, 1]} : vector<4x256xf32> to vector<1x256xf32>
    %393 = vector.broadcast %391 : vector<16x1xf32> to vector<16x256xf32>
    %394 = vector.broadcast %392 : vector<1x256xf32> to vector<16x256xf32>
    %395 = arith.mulf %393, %394 : vector<16x256xf32>
    %396 = arith.addf %390, %395 : vector<16x256xf32>
    %397 = vector.broadcast %4 : vector<16x1xf32> to vector<16x256xf32>
    %398 = arith.mulf %396, %397 : vector<16x256xf32>
    %399 = vector.broadcast %5 : vector<16x1xf32> to vector<16x256xf32>
    %400 = arith.addf %398, %399 : vector<16x256xf32>
    %401 = arith.negf %400 : vector<16x256xf32>
    %402 = math.exp %401 : vector<16x256xf32>
    %cst_42 = arith.constant 1.000000e+00 : f32
    %403 = vector.broadcast %cst_42 : f32 to vector<16x256xf32>
    %404 = arith.addf %403, %402 : vector<16x256xf32>
    %405 = arith.divf %403, %404 : vector<16x256xf32>
    %406 = arith.mulf %400, %405 : vector<16x256xf32>
    %cst_43 = arith.constant 0.000000e+00 : f32
    %407 = vector.broadcast %cst_43 : f32 to vector<16x256xf32>
    %408 = vector.extract_strided_slice %406 {offsets = [0, 239], sizes = [16, 17], strides = [1, 1]} : vector<16x256xf32> to vector<16x17xf32>
    %409 = vector.extract_strided_slice %406 {offsets = [0, 0], sizes = [16, 239], strides = [1, 1]} : vector<16x256xf32> to vector<16x239xf32>
    %410 = tpu.concatenate %408, %409 in 1 : vector<16x17xf32>, vector<16x239xf32> -> vector<16x256xf32>
    %411 = vector.extract_strided_slice %1 {offsets = [0, 0], sizes = [16, 1], strides = [1, 1]} : vector<16x9xf32> to vector<16x1xf32>
    %412 = vector.broadcast %411 : vector<16x1xf32> to vector<16x256xf32>
    %413 = arith.mulf %410, %412 : vector<16x256xf32>
    %414 = vector.extract_strided_slice %2 {offsets = [0, 0, 0], sizes = [1, 1, 256], strides = [1, 1, 1]} : vector<9x1x256xf32> to vector<1x1x256xf32>
    %415 = vector.shape_cast %414 : vector<1x1x256xf32> to vector<1x256xf32>
    %416 = vector.broadcast %415 : vector<1x256xf32> to vector<16x256xf32>
    %417 = arith.mulf %413, %416 : vector<16x256xf32>
    %418 = arith.addf %407, %417 : vector<16x256xf32>
    %419 = vector.extract_strided_slice %406 {offsets = [0, 240], sizes = [16, 16], strides = [1, 1]} : vector<16x256xf32> to vector<16x16xf32>
    %420 = vector.extract_strided_slice %406 {offsets = [0, 0], sizes = [16, 240], strides = [1, 1]} : vector<16x256xf32> to vector<16x240xf32>
    %421 = tpu.concatenate %419, %420 in 1 : vector<16x16xf32>, vector<16x240xf32> -> vector<16x256xf32>
    %422 = vector.extract_strided_slice %1 {offsets = [0, 1], sizes = [16, 1], strides = [1, 1]} : vector<16x9xf32> to vector<16x1xf32>
    %423 = vector.broadcast %422 : vector<16x1xf32> to vector<16x256xf32>
    %424 = arith.mulf %421, %423 : vector<16x256xf32>
    %425 = vector.extract_strided_slice %2 {offsets = [1, 0, 0], sizes = [1, 1, 256], strides = [1, 1, 1]} : vector<9x1x256xf32> to vector<1x1x256xf32>
    %426 = vector.shape_cast %425 : vector<1x1x256xf32> to vector<1x256xf32>
    %427 = vector.broadcast %426 : vector<1x256xf32> to vector<16x256xf32>
    %428 = arith.mulf %424, %427 : vector<16x256xf32>
    %429 = arith.addf %418, %428 : vector<16x256xf32>
    %430 = vector.extract_strided_slice %406 {offsets = [0, 241], sizes = [16, 15], strides = [1, 1]} : vector<16x256xf32> to vector<16x15xf32>
    %431 = vector.extract_strided_slice %406 {offsets = [0, 0], sizes = [16, 241], strides = [1, 1]} : vector<16x256xf32> to vector<16x241xf32>
    %432 = tpu.concatenate %430, %431 in 1 : vector<16x15xf32>, vector<16x241xf32> -> vector<16x256xf32>
    %433 = vector.extract_strided_slice %1 {offsets = [0, 2], sizes = [16, 1], strides = [1, 1]} : vector<16x9xf32> to vector<16x1xf32>
    %434 = vector.broadcast %433 : vector<16x1xf32> to vector<16x256xf32>
    %435 = arith.mulf %432, %434 : vector<16x256xf32>
    %436 = vector.extract_strided_slice %2 {offsets = [2, 0, 0], sizes = [1, 1, 256], strides = [1, 1, 1]} : vector<9x1x256xf32> to vector<1x1x256xf32>
    %437 = vector.shape_cast %436 : vector<1x1x256xf32> to vector<1x256xf32>
    %438 = vector.broadcast %437 : vector<1x256xf32> to vector<16x256xf32>
    %439 = arith.mulf %435, %438 : vector<16x256xf32>
    %440 = arith.addf %429, %439 : vector<16x256xf32>
    %441 = vector.extract_strided_slice %406 {offsets = [0, 255], sizes = [16, 1], strides = [1, 1]} : vector<16x256xf32> to vector<16x1xf32>
    %442 = vector.extract_strided_slice %406 {offsets = [0, 0], sizes = [16, 255], strides = [1, 1]} : vector<16x256xf32> to vector<16x255xf32>
    %443 = tpu.concatenate %441, %442 in 1 : vector<16x1xf32>, vector<16x255xf32> -> vector<16x256xf32>
    %444 = vector.extract_strided_slice %1 {offsets = [0, 3], sizes = [16, 1], strides = [1, 1]} : vector<16x9xf32> to vector<16x1xf32>
    %445 = vector.broadcast %444 : vector<16x1xf32> to vector<16x256xf32>
    %446 = arith.mulf %443, %445 : vector<16x256xf32>
    %447 = vector.extract_strided_slice %2 {offsets = [3, 0, 0], sizes = [1, 1, 256], strides = [1, 1, 1]} : vector<9x1x256xf32> to vector<1x1x256xf32>
    %448 = vector.shape_cast %447 : vector<1x1x256xf32> to vector<1x256xf32>
    %449 = vector.broadcast %448 : vector<1x256xf32> to vector<16x256xf32>
    %450 = arith.mulf %446, %449 : vector<16x256xf32>
    %451 = arith.addf %440, %450 : vector<16x256xf32>
    %452 = vector.extract_strided_slice %1 {offsets = [0, 4], sizes = [16, 1], strides = [1, 1]} : vector<16x9xf32> to vector<16x1xf32>
    %453 = vector.broadcast %452 : vector<16x1xf32> to vector<16x256xf32>
    %454 = arith.mulf %406, %453 : vector<16x256xf32>
    %455 = arith.addf %451, %454 : vector<16x256xf32>
    %456 = vector.extract_strided_slice %406 {offsets = [0, 1], sizes = [16, 255], strides = [1, 1]} : vector<16x256xf32> to vector<16x255xf32>
    %457 = vector.extract_strided_slice %406 {offsets = [0, 0], sizes = [16, 1], strides = [1, 1]} : vector<16x256xf32> to vector<16x1xf32>
    %458 = tpu.concatenate %456, %457 in 1 : vector<16x255xf32>, vector<16x1xf32> -> vector<16x256xf32>
    %459 = vector.extract_strided_slice %1 {offsets = [0, 5], sizes = [16, 1], strides = [1, 1]} : vector<16x9xf32> to vector<16x1xf32>
    %460 = vector.broadcast %459 : vector<16x1xf32> to vector<16x256xf32>
    %461 = arith.mulf %458, %460 : vector<16x256xf32>
    %462 = vector.extract_strided_slice %2 {offsets = [5, 0, 0], sizes = [1, 1, 256], strides = [1, 1, 1]} : vector<9x1x256xf32> to vector<1x1x256xf32>
    %463 = vector.shape_cast %462 : vector<1x1x256xf32> to vector<1x256xf32>
    %464 = vector.broadcast %463 : vector<1x256xf32> to vector<16x256xf32>
    %465 = arith.mulf %461, %464 : vector<16x256xf32>
    %466 = arith.addf %455, %465 : vector<16x256xf32>
    %467 = vector.extract_strided_slice %406 {offsets = [0, 15], sizes = [16, 241], strides = [1, 1]} : vector<16x256xf32> to vector<16x241xf32>
    %468 = vector.extract_strided_slice %406 {offsets = [0, 0], sizes = [16, 15], strides = [1, 1]} : vector<16x256xf32> to vector<16x15xf32>
    %469 = tpu.concatenate %467, %468 in 1 : vector<16x241xf32>, vector<16x15xf32> -> vector<16x256xf32>
    %470 = vector.extract_strided_slice %1 {offsets = [0, 6], sizes = [16, 1], strides = [1, 1]} : vector<16x9xf32> to vector<16x1xf32>
    %471 = vector.broadcast %470 : vector<16x1xf32> to vector<16x256xf32>
    %472 = arith.mulf %469, %471 : vector<16x256xf32>
    %473 = vector.extract_strided_slice %2 {offsets = [6, 0, 0], sizes = [1, 1, 256], strides = [1, 1, 1]} : vector<9x1x256xf32> to vector<1x1x256xf32>
    %474 = vector.shape_cast %473 : vector<1x1x256xf32> to vector<1x256xf32>
    %475 = vector.broadcast %474 : vector<1x256xf32> to vector<16x256xf32>
    %476 = arith.mulf %472, %475 : vector<16x256xf32>
    %477 = arith.addf %466, %476 : vector<16x256xf32>
    %478 = vector.extract_strided_slice %406 {offsets = [0, 16], sizes = [16, 240], strides = [1, 1]} : vector<16x256xf32> to vector<16x240xf32>
    %479 = vector.extract_strided_slice %406 {offsets = [0, 0], sizes = [16, 16], strides = [1, 1]} : vector<16x256xf32> to vector<16x16xf32>
    %480 = tpu.concatenate %478, %479 in 1 : vector<16x240xf32>, vector<16x16xf32> -> vector<16x256xf32>
    %481 = vector.extract_strided_slice %1 {offsets = [0, 7], sizes = [16, 1], strides = [1, 1]} : vector<16x9xf32> to vector<16x1xf32>
    %482 = vector.broadcast %481 : vector<16x1xf32> to vector<16x256xf32>
    %483 = arith.mulf %480, %482 : vector<16x256xf32>
    %484 = vector.extract_strided_slice %2 {offsets = [7, 0, 0], sizes = [1, 1, 256], strides = [1, 1, 1]} : vector<9x1x256xf32> to vector<1x1x256xf32>
    %485 = vector.shape_cast %484 : vector<1x1x256xf32> to vector<1x256xf32>
    %486 = vector.broadcast %485 : vector<1x256xf32> to vector<16x256xf32>
    %487 = arith.mulf %483, %486 : vector<16x256xf32>
    %488 = arith.addf %477, %487 : vector<16x256xf32>
    %489 = vector.extract_strided_slice %406 {offsets = [0, 17], sizes = [16, 239], strides = [1, 1]} : vector<16x256xf32> to vector<16x239xf32>
    %490 = vector.extract_strided_slice %406 {offsets = [0, 0], sizes = [16, 17], strides = [1, 1]} : vector<16x256xf32> to vector<16x17xf32>
    %491 = tpu.concatenate %489, %490 in 1 : vector<16x239xf32>, vector<16x17xf32> -> vector<16x256xf32>
    %492 = vector.extract_strided_slice %1 {offsets = [0, 8], sizes = [16, 1], strides = [1, 1]} : vector<16x9xf32> to vector<16x1xf32>
    %493 = vector.broadcast %492 : vector<16x1xf32> to vector<16x256xf32>
    %494 = arith.mulf %491, %493 : vector<16x256xf32>
    %495 = vector.extract_strided_slice %2 {offsets = [8, 0, 0], sizes = [1, 1, 256], strides = [1, 1, 1]} : vector<9x1x256xf32> to vector<1x1x256xf32>
    %496 = vector.shape_cast %495 : vector<1x1x256xf32> to vector<1x256xf32>
    %497 = vector.broadcast %496 : vector<1x256xf32> to vector<16x256xf32>
    %498 = arith.mulf %494, %497 : vector<16x256xf32>
    %499 = arith.addf %488, %498 : vector<16x256xf32>
    %500 = vector.broadcast %6 : vector<16x1xf32> to vector<16x256xf32>
    %501 = arith.mulf %499, %500 : vector<16x256xf32>
    %502 = vector.broadcast %7 : vector<16x1xf32> to vector<16x256xf32>
    %503 = arith.addf %501, %502 : vector<16x256xf32>
    %504 = arith.negf %503 : vector<16x256xf32>
    %505 = math.exp %504 : vector<16x256xf32>
    %cst_44 = arith.constant 1.000000e+00 : f32
    %506 = vector.broadcast %cst_44 : f32 to vector<16x256xf32>
    %507 = arith.addf %506, %505 : vector<16x256xf32>
    %508 = arith.divf %506, %507 : vector<16x256xf32>
    %509 = arith.mulf %503, %508 : vector<16x256xf32>
    %cst_45 = arith.constant dense<0.000000e+00> : vector<16xf32>
    %510 = vector.multi_reduction <add>, %509, %cst_45 [1] : vector<16x256xf32> to vector<16xf32>
    %511 = vector.shape_cast %510 : vector<16xf32> to vector<16x1xf32>
    %cst_46 = arith.constant 2.560000e+02 : f32
    %512 = vector.broadcast %cst_46 : f32 to vector<16x1xf32>
    %513 = arith.divf %511, %512 : vector<16x1xf32>
    %514 = vector.extract_strided_slice %10 {offsets = [0, 0], sizes = [4, 1], strides = [1, 1]} : vector<4x16xf32> to vector<4x1xf32>
    %515 = vector.extract_strided_slice %513 {offsets = [0, 0], sizes = [1, 1], strides = [1, 1]} : vector<16x1xf32> to vector<1x1xf32>
    %516 = vector.broadcast %515 : vector<1x1xf32> to vector<4x1xf32>
    %517 = arith.mulf %514, %516 : vector<4x1xf32>
    %518 = vector.extract_strided_slice %10 {offsets = [0, 1], sizes = [4, 1], strides = [1, 1]} : vector<4x16xf32> to vector<4x1xf32>
    %519 = vector.extract_strided_slice %513 {offsets = [1, 0], sizes = [1, 1], strides = [1, 1]} : vector<16x1xf32> to vector<1x1xf32>
    %520 = vector.broadcast %519 : vector<1x1xf32> to vector<4x1xf32>
    %521 = arith.mulf %518, %520 : vector<4x1xf32>
    %522 = arith.addf %517, %521 : vector<4x1xf32>
    %523 = vector.extract_strided_slice %10 {offsets = [0, 2], sizes = [4, 1], strides = [1, 1]} : vector<4x16xf32> to vector<4x1xf32>
    %524 = vector.extract_strided_slice %513 {offsets = [2, 0], sizes = [1, 1], strides = [1, 1]} : vector<16x1xf32> to vector<1x1xf32>
    %525 = vector.broadcast %524 : vector<1x1xf32> to vector<4x1xf32>
    %526 = arith.mulf %523, %525 : vector<4x1xf32>
    %527 = arith.addf %522, %526 : vector<4x1xf32>
    %528 = vector.extract_strided_slice %10 {offsets = [0, 3], sizes = [4, 1], strides = [1, 1]} : vector<4x16xf32> to vector<4x1xf32>
    %529 = vector.extract_strided_slice %513 {offsets = [3, 0], sizes = [1, 1], strides = [1, 1]} : vector<16x1xf32> to vector<1x1xf32>
    %530 = vector.broadcast %529 : vector<1x1xf32> to vector<4x1xf32>
    %531 = arith.mulf %528, %530 : vector<4x1xf32>
    %532 = arith.addf %527, %531 : vector<4x1xf32>
    %533 = vector.extract_strided_slice %10 {offsets = [0, 4], sizes = [4, 1], strides = [1, 1]} : vector<4x16xf32> to vector<4x1xf32>
    %534 = vector.extract_strided_slice %513 {offsets = [4, 0], sizes = [1, 1], strides = [1, 1]} : vector<16x1xf32> to vector<1x1xf32>
    %535 = vector.broadcast %534 : vector<1x1xf32> to vector<4x1xf32>
    %536 = arith.mulf %533, %535 : vector<4x1xf32>
    %537 = arith.addf %532, %536 : vector<4x1xf32>
    %538 = vector.extract_strided_slice %10 {offsets = [0, 5], sizes = [4, 1], strides = [1, 1]} : vector<4x16xf32> to vector<4x1xf32>
    %539 = vector.extract_strided_slice %513 {offsets = [5, 0], sizes = [1, 1], strides = [1, 1]} : vector<16x1xf32> to vector<1x1xf32>
    %540 = vector.broadcast %539 : vector<1x1xf32> to vector<4x1xf32>
    %541 = arith.mulf %538, %540 : vector<4x1xf32>
    %542 = arith.addf %537, %541 : vector<4x1xf32>
    %543 = vector.extract_strided_slice %10 {offsets = [0, 6], sizes = [4, 1], strides = [1, 1]} : vector<4x16xf32> to vector<4x1xf32>
    %544 = vector.extract_strided_slice %513 {offsets = [6, 0], sizes = [1, 1], strides = [1, 1]} : vector<16x1xf32> to vector<1x1xf32>
    %545 = vector.broadcast %544 : vector<1x1xf32> to vector<4x1xf32>
    %546 = arith.mulf %543, %545 : vector<4x1xf32>
    %547 = arith.addf %542, %546 : vector<4x1xf32>
    %548 = vector.extract_strided_slice %10 {offsets = [0, 7], sizes = [4, 1], strides = [1, 1]} : vector<4x16xf32> to vector<4x1xf32>
    %549 = vector.extract_strided_slice %513 {offsets = [7, 0], sizes = [1, 1], strides = [1, 1]} : vector<16x1xf32> to vector<1x1xf32>
    %550 = vector.broadcast %549 : vector<1x1xf32> to vector<4x1xf32>
    %551 = arith.mulf %548, %550 : vector<4x1xf32>
    %552 = arith.addf %547, %551 : vector<4x1xf32>
    %553 = vector.extract_strided_slice %10 {offsets = [0, 8], sizes = [4, 1], strides = [1, 1]} : vector<4x16xf32> to vector<4x1xf32>
    %554 = vector.extract_strided_slice %513 {offsets = [8, 0], sizes = [1, 1], strides = [1, 1]} : vector<16x1xf32> to vector<1x1xf32>
    %555 = vector.broadcast %554 : vector<1x1xf32> to vector<4x1xf32>
    %556 = arith.mulf %553, %555 : vector<4x1xf32>
    %557 = arith.addf %552, %556 : vector<4x1xf32>
    %558 = vector.extract_strided_slice %10 {offsets = [0, 9], sizes = [4, 1], strides = [1, 1]} : vector<4x16xf32> to vector<4x1xf32>
    %559 = vector.extract_strided_slice %513 {offsets = [9, 0], sizes = [1, 1], strides = [1, 1]} : vector<16x1xf32> to vector<1x1xf32>
    %560 = vector.broadcast %559 : vector<1x1xf32> to vector<4x1xf32>
    %561 = arith.mulf %558, %560 : vector<4x1xf32>
    %562 = arith.addf %557, %561 : vector<4x1xf32>
    %563 = vector.extract_strided_slice %10 {offsets = [0, 10], sizes = [4, 1], strides = [1, 1]} : vector<4x16xf32> to vector<4x1xf32>
    %564 = vector.extract_strided_slice %513 {offsets = [10, 0], sizes = [1, 1], strides = [1, 1]} : vector<16x1xf32> to vector<1x1xf32>
    %565 = vector.broadcast %564 : vector<1x1xf32> to vector<4x1xf32>
    %566 = arith.mulf %563, %565 : vector<4x1xf32>
    %567 = arith.addf %562, %566 : vector<4x1xf32>
    %568 = vector.extract_strided_slice %10 {offsets = [0, 11], sizes = [4, 1], strides = [1, 1]} : vector<4x16xf32> to vector<4x1xf32>
    %569 = vector.extract_strided_slice %513 {offsets = [11, 0], sizes = [1, 1], strides = [1, 1]} : vector<16x1xf32> to vector<1x1xf32>
    %570 = vector.broadcast %569 : vector<1x1xf32> to vector<4x1xf32>
    %571 = arith.mulf %568, %570 : vector<4x1xf32>
    %572 = arith.addf %567, %571 : vector<4x1xf32>
    %573 = vector.extract_strided_slice %10 {offsets = [0, 12], sizes = [4, 1], strides = [1, 1]} : vector<4x16xf32> to vector<4x1xf32>
    %574 = vector.extract_strided_slice %513 {offsets = [12, 0], sizes = [1, 1], strides = [1, 1]} : vector<16x1xf32> to vector<1x1xf32>
    %575 = vector.broadcast %574 : vector<1x1xf32> to vector<4x1xf32>
    %576 = arith.mulf %573, %575 : vector<4x1xf32>
    %577 = arith.addf %572, %576 : vector<4x1xf32>
    %578 = vector.extract_strided_slice %10 {offsets = [0, 13], sizes = [4, 1], strides = [1, 1]} : vector<4x16xf32> to vector<4x1xf32>
    %579 = vector.extract_strided_slice %513 {offsets = [13, 0], sizes = [1, 1], strides = [1, 1]} : vector<16x1xf32> to vector<1x1xf32>
    %580 = vector.broadcast %579 : vector<1x1xf32> to vector<4x1xf32>
    %581 = arith.mulf %578, %580 : vector<4x1xf32>
    %582 = arith.addf %577, %581 : vector<4x1xf32>
    %583 = vector.extract_strided_slice %10 {offsets = [0, 14], sizes = [4, 1], strides = [1, 1]} : vector<4x16xf32> to vector<4x1xf32>
    %584 = vector.extract_strided_slice %513 {offsets = [14, 0], sizes = [1, 1], strides = [1, 1]} : vector<16x1xf32> to vector<1x1xf32>
    %585 = vector.broadcast %584 : vector<1x1xf32> to vector<4x1xf32>
    %586 = arith.mulf %583, %585 : vector<4x1xf32>
    %587 = arith.addf %582, %586 : vector<4x1xf32>
    %588 = vector.extract_strided_slice %10 {offsets = [0, 15], sizes = [4, 1], strides = [1, 1]} : vector<4x16xf32> to vector<4x1xf32>
    %589 = vector.extract_strided_slice %513 {offsets = [15, 0], sizes = [1, 1], strides = [1, 1]} : vector<16x1xf32> to vector<1x1xf32>
    %590 = vector.broadcast %589 : vector<1x1xf32> to vector<4x1xf32>
    %591 = arith.mulf %588, %590 : vector<4x1xf32>
    %592 = arith.addf %587, %591 : vector<4x1xf32>
    %593 = arith.addf %592, %11 : vector<4x1xf32>
    %594 = arith.negf %593 : vector<4x1xf32>
    %595 = math.exp %594 : vector<4x1xf32>
    %cst_47 = arith.constant 1.000000e+00 : f32
    %596 = vector.broadcast %cst_47 : f32 to vector<4x1xf32>
    %597 = arith.addf %596, %595 : vector<4x1xf32>
    %598 = arith.divf %596, %597 : vector<4x1xf32>
    %599 = arith.mulf %593, %598 : vector<4x1xf32>
    %600 = vector.extract_strided_slice %12 {offsets = [0, 0], sizes = [16, 1], strides = [1, 1]} : vector<16x4xf32> to vector<16x1xf32>
    %601 = vector.extract_strided_slice %599 {offsets = [0, 0], sizes = [1, 1], strides = [1, 1]} : vector<4x1xf32> to vector<1x1xf32>
    %602 = vector.broadcast %601 : vector<1x1xf32> to vector<16x1xf32>
    %603 = arith.mulf %600, %602 : vector<16x1xf32>
    %604 = vector.extract_strided_slice %12 {offsets = [0, 1], sizes = [16, 1], strides = [1, 1]} : vector<16x4xf32> to vector<16x1xf32>
    %605 = vector.extract_strided_slice %599 {offsets = [1, 0], sizes = [1, 1], strides = [1, 1]} : vector<4x1xf32> to vector<1x1xf32>
    %606 = vector.broadcast %605 : vector<1x1xf32> to vector<16x1xf32>
    %607 = arith.mulf %604, %606 : vector<16x1xf32>
    %608 = arith.addf %603, %607 : vector<16x1xf32>
    %609 = vector.extract_strided_slice %12 {offsets = [0, 2], sizes = [16, 1], strides = [1, 1]} : vector<16x4xf32> to vector<16x1xf32>
    %610 = vector.extract_strided_slice %599 {offsets = [2, 0], sizes = [1, 1], strides = [1, 1]} : vector<4x1xf32> to vector<1x1xf32>
    %611 = vector.broadcast %610 : vector<1x1xf32> to vector<16x1xf32>
    %612 = arith.mulf %609, %611 : vector<16x1xf32>
    %613 = arith.addf %608, %612 : vector<16x1xf32>
    %614 = vector.extract_strided_slice %12 {offsets = [0, 3], sizes = [16, 1], strides = [1, 1]} : vector<16x4xf32> to vector<16x1xf32>
    %615 = vector.extract_strided_slice %599 {offsets = [3, 0], sizes = [1, 1], strides = [1, 1]} : vector<4x1xf32> to vector<1x1xf32>
    %616 = vector.broadcast %615 : vector<1x1xf32> to vector<16x1xf32>
    %617 = arith.mulf %614, %616 : vector<16x1xf32>
    %618 = arith.addf %613, %617 : vector<16x1xf32>
    %619 = arith.addf %618, %13 : vector<16x1xf32>
    %620 = arith.negf %619 : vector<16x1xf32>
    %621 = math.exp %620 : vector<16x1xf32>
    %cst_48 = arith.constant 1.000000e+00 : f32
    %622 = vector.broadcast %cst_48 : f32 to vector<16x1xf32>
    %623 = arith.addf %622, %621 : vector<16x1xf32>
    %624 = arith.divf %622, %623 : vector<16x1xf32>
    %625 = vector.broadcast %624 : vector<16x1xf32> to vector<16x256xf32>
    %626 = arith.mulf %509, %625 : vector<16x256xf32>
    %627 = vector.extract_strided_slice %3 {offsets = [0, 0], sizes = [4, 1], strides = [1, 1]} : vector<4x16xf32> to vector<4x1xf32>
    %628 = vector.extract_strided_slice %626 {offsets = [0, 0], sizes = [1, 256], strides = [1, 1]} : vector<16x256xf32> to vector<1x256xf32>
    %629 = vector.broadcast %627 : vector<4x1xf32> to vector<4x256xf32>
    %630 = vector.broadcast %628 : vector<1x256xf32> to vector<4x256xf32>
    %631 = arith.mulf %629, %630 : vector<4x256xf32>
    %632 = vector.extract_strided_slice %3 {offsets = [0, 1], sizes = [4, 1], strides = [1, 1]} : vector<4x16xf32> to vector<4x1xf32>
    %633 = vector.extract_strided_slice %626 {offsets = [1, 0], sizes = [1, 256], strides = [1, 1]} : vector<16x256xf32> to vector<1x256xf32>
    %634 = vector.broadcast %632 : vector<4x1xf32> to vector<4x256xf32>
    %635 = vector.broadcast %633 : vector<1x256xf32> to vector<4x256xf32>
    %636 = arith.mulf %634, %635 : vector<4x256xf32>
    %637 = arith.addf %631, %636 : vector<4x256xf32>
    %638 = vector.extract_strided_slice %3 {offsets = [0, 2], sizes = [4, 1], strides = [1, 1]} : vector<4x16xf32> to vector<4x1xf32>
    %639 = vector.extract_strided_slice %626 {offsets = [2, 0], sizes = [1, 256], strides = [1, 1]} : vector<16x256xf32> to vector<1x256xf32>
    %640 = vector.broadcast %638 : vector<4x1xf32> to vector<4x256xf32>
    %641 = vector.broadcast %639 : vector<1x256xf32> to vector<4x256xf32>
    %642 = arith.mulf %640, %641 : vector<4x256xf32>
    %643 = arith.addf %637, %642 : vector<4x256xf32>
    %644 = vector.extract_strided_slice %3 {offsets = [0, 3], sizes = [4, 1], strides = [1, 1]} : vector<4x16xf32> to vector<4x1xf32>
    %645 = vector.extract_strided_slice %626 {offsets = [3, 0], sizes = [1, 256], strides = [1, 1]} : vector<16x256xf32> to vector<1x256xf32>
    %646 = vector.broadcast %644 : vector<4x1xf32> to vector<4x256xf32>
    %647 = vector.broadcast %645 : vector<1x256xf32> to vector<4x256xf32>
    %648 = arith.mulf %646, %647 : vector<4x256xf32>
    %649 = arith.addf %643, %648 : vector<4x256xf32>
    %650 = vector.extract_strided_slice %3 {offsets = [0, 4], sizes = [4, 1], strides = [1, 1]} : vector<4x16xf32> to vector<4x1xf32>
    %651 = vector.extract_strided_slice %626 {offsets = [4, 0], sizes = [1, 256], strides = [1, 1]} : vector<16x256xf32> to vector<1x256xf32>
    %652 = vector.broadcast %650 : vector<4x1xf32> to vector<4x256xf32>
    %653 = vector.broadcast %651 : vector<1x256xf32> to vector<4x256xf32>
    %654 = arith.mulf %652, %653 : vector<4x256xf32>
    %655 = arith.addf %649, %654 : vector<4x256xf32>
    %656 = vector.extract_strided_slice %3 {offsets = [0, 5], sizes = [4, 1], strides = [1, 1]} : vector<4x16xf32> to vector<4x1xf32>
    %657 = vector.extract_strided_slice %626 {offsets = [5, 0], sizes = [1, 256], strides = [1, 1]} : vector<16x256xf32> to vector<1x256xf32>
    %658 = vector.broadcast %656 : vector<4x1xf32> to vector<4x256xf32>
    %659 = vector.broadcast %657 : vector<1x256xf32> to vector<4x256xf32>
    %660 = arith.mulf %658, %659 : vector<4x256xf32>
    %661 = arith.addf %655, %660 : vector<4x256xf32>
    %662 = vector.extract_strided_slice %3 {offsets = [0, 6], sizes = [4, 1], strides = [1, 1]} : vector<4x16xf32> to vector<4x1xf32>
    %663 = vector.extract_strided_slice %626 {offsets = [6, 0], sizes = [1, 256], strides = [1, 1]} : vector<16x256xf32> to vector<1x256xf32>
    %664 = vector.broadcast %662 : vector<4x1xf32> to vector<4x256xf32>
    %665 = vector.broadcast %663 : vector<1x256xf32> to vector<4x256xf32>
    %666 = arith.mulf %664, %665 : vector<4x256xf32>
    %667 = arith.addf %661, %666 : vector<4x256xf32>
    %668 = vector.extract_strided_slice %3 {offsets = [0, 7], sizes = [4, 1], strides = [1, 1]} : vector<4x16xf32> to vector<4x1xf32>
    %669 = vector.extract_strided_slice %626 {offsets = [7, 0], sizes = [1, 256], strides = [1, 1]} : vector<16x256xf32> to vector<1x256xf32>
    %670 = vector.broadcast %668 : vector<4x1xf32> to vector<4x256xf32>
    %671 = vector.broadcast %669 : vector<1x256xf32> to vector<4x256xf32>
    %672 = arith.mulf %670, %671 : vector<4x256xf32>
    %673 = arith.addf %667, %672 : vector<4x256xf32>
    %674 = vector.extract_strided_slice %3 {offsets = [0, 8], sizes = [4, 1], strides = [1, 1]} : vector<4x16xf32> to vector<4x1xf32>
    %675 = vector.extract_strided_slice %626 {offsets = [8, 0], sizes = [1, 256], strides = [1, 1]} : vector<16x256xf32> to vector<1x256xf32>
    %676 = vector.broadcast %674 : vector<4x1xf32> to vector<4x256xf32>
    %677 = vector.broadcast %675 : vector<1x256xf32> to vector<4x256xf32>
    %678 = arith.mulf %676, %677 : vector<4x256xf32>
    %679 = arith.addf %673, %678 : vector<4x256xf32>
    %680 = vector.extract_strided_slice %3 {offsets = [0, 9], sizes = [4, 1], strides = [1, 1]} : vector<4x16xf32> to vector<4x1xf32>
    %681 = vector.extract_strided_slice %626 {offsets = [9, 0], sizes = [1, 256], strides = [1, 1]} : vector<16x256xf32> to vector<1x256xf32>
    %682 = vector.broadcast %680 : vector<4x1xf32> to vector<4x256xf32>
    %683 = vector.broadcast %681 : vector<1x256xf32> to vector<4x256xf32>
    %684 = arith.mulf %682, %683 : vector<4x256xf32>
    %685 = arith.addf %679, %684 : vector<4x256xf32>
    %686 = vector.extract_strided_slice %3 {offsets = [0, 10], sizes = [4, 1], strides = [1, 1]} : vector<4x16xf32> to vector<4x1xf32>
    %687 = vector.extract_strided_slice %626 {offsets = [10, 0], sizes = [1, 256], strides = [1, 1]} : vector<16x256xf32> to vector<1x256xf32>
    %688 = vector.broadcast %686 : vector<4x1xf32> to vector<4x256xf32>
    %689 = vector.broadcast %687 : vector<1x256xf32> to vector<4x256xf32>
    %690 = arith.mulf %688, %689 : vector<4x256xf32>
    %691 = arith.addf %685, %690 : vector<4x256xf32>
    %692 = vector.extract_strided_slice %3 {offsets = [0, 11], sizes = [4, 1], strides = [1, 1]} : vector<4x16xf32> to vector<4x1xf32>
    %693 = vector.extract_strided_slice %626 {offsets = [11, 0], sizes = [1, 256], strides = [1, 1]} : vector<16x256xf32> to vector<1x256xf32>
    %694 = vector.broadcast %692 : vector<4x1xf32> to vector<4x256xf32>
    %695 = vector.broadcast %693 : vector<1x256xf32> to vector<4x256xf32>
    %696 = arith.mulf %694, %695 : vector<4x256xf32>
    %697 = arith.addf %691, %696 : vector<4x256xf32>
    %698 = vector.extract_strided_slice %3 {offsets = [0, 12], sizes = [4, 1], strides = [1, 1]} : vector<4x16xf32> to vector<4x1xf32>
    %699 = vector.extract_strided_slice %626 {offsets = [12, 0], sizes = [1, 256], strides = [1, 1]} : vector<16x256xf32> to vector<1x256xf32>
    %700 = vector.broadcast %698 : vector<4x1xf32> to vector<4x256xf32>
    %701 = vector.broadcast %699 : vector<1x256xf32> to vector<4x256xf32>
    %702 = arith.mulf %700, %701 : vector<4x256xf32>
    %703 = arith.addf %697, %702 : vector<4x256xf32>
    %704 = vector.extract_strided_slice %3 {offsets = [0, 13], sizes = [4, 1], strides = [1, 1]} : vector<4x16xf32> to vector<4x1xf32>
    %705 = vector.extract_strided_slice %626 {offsets = [13, 0], sizes = [1, 256], strides = [1, 1]} : vector<16x256xf32> to vector<1x256xf32>
    %706 = vector.broadcast %704 : vector<4x1xf32> to vector<4x256xf32>
    %707 = vector.broadcast %705 : vector<1x256xf32> to vector<4x256xf32>
    %708 = arith.mulf %706, %707 : vector<4x256xf32>
    %709 = arith.addf %703, %708 : vector<4x256xf32>
    %710 = vector.extract_strided_slice %3 {offsets = [0, 14], sizes = [4, 1], strides = [1, 1]} : vector<4x16xf32> to vector<4x1xf32>
    %711 = vector.extract_strided_slice %626 {offsets = [14, 0], sizes = [1, 256], strides = [1, 1]} : vector<16x256xf32> to vector<1x256xf32>
    %712 = vector.broadcast %710 : vector<4x1xf32> to vector<4x256xf32>
    %713 = vector.broadcast %711 : vector<1x256xf32> to vector<4x256xf32>
    %714 = arith.mulf %712, %713 : vector<4x256xf32>
    %715 = arith.addf %709, %714 : vector<4x256xf32>
    %716 = vector.extract_strided_slice %3 {offsets = [0, 15], sizes = [4, 1], strides = [1, 1]} : vector<4x16xf32> to vector<4x1xf32>
    %717 = vector.extract_strided_slice %626 {offsets = [15, 0], sizes = [1, 256], strides = [1, 1]} : vector<16x256xf32> to vector<1x256xf32>
    %718 = vector.broadcast %716 : vector<4x1xf32> to vector<4x256xf32>
    %719 = vector.broadcast %717 : vector<1x256xf32> to vector<4x256xf32>
    %720 = arith.mulf %718, %719 : vector<4x256xf32>
    %721 = arith.addf %715, %720 : vector<4x256xf32>
    %722 = vector.broadcast %8 : vector<4x1xf32> to vector<4x256xf32>
    %723 = arith.mulf %721, %722 : vector<4x256xf32>
    %724 = vector.broadcast %9 : vector<4x1xf32> to vector<4x256xf32>
    %725 = arith.addf %723, %724 : vector<4x256xf32>
    %726 = arith.addf %725, %373 : vector<4x256xf32>
    %c1_49 = arith.constant 1 : index
    %c0_50 = arith.constant 0 : index
    %c0_51 = arith.constant 0 : index
    %727 = vector.load %arg16[%c1_49, %c0_50, %c0_51] : memref<2x4x256xf32, #tpu.memory_space<vmem>>, vector<1x4x256xf32>
    %728 = vector.shape_cast %727 : vector<1x4x256xf32> to vector<4x256xf32>
    %729 = vector.shape_cast %726 : vector<4x256xf32> to vector<1x4x256xf32>
    tpu.vector_store %arg16[%c1_49, %c0_50, %c0_51], %729 {strides = array<i32>} : memref<2x4x256xf32, #tpu.memory_space<vmem>>, vector<1x4x256xf32>,
    return
  }
  func.func @transform_0(%arg0: i32) -> (i32, i32, i32) {
    %c0_i32 = arith.constant 0 : i32
    %c0_i32_0 = arith.constant 0 : i32
    %c0_i32_1 = arith.constant 0 : i32
    return %arg0, %c0_i32, %c0_i32_0 : i32, i32, i32
  }
  func.func @transform_1(%arg0: i32) -> (i32, i32, i32) {
    %c0_i32 = arith.constant 0 : i32
    %c0_i32_0 = arith.constant 0 : i32
    %c0_i32_1 = arith.constant 0 : i32
    %c0_i32_2 = arith.constant 0 : i32
    return %c0_i32, %c0_i32_0, %c0_i32_1 : i32, i32, i32
  }
  func.func @transform_2(%arg0: i32) -> (i32, i32) {
    %c0_i32 = arith.constant 0 : i32
    %c0_i32_0 = arith.constant 0 : i32
    %c0_i32_1 = arith.constant 0 : i32
    return %c0_i32, %c0_i32_0 : i32, i32
  }
  func.func @transform_3(%arg0: i32) -> (i32, i32) {
    %c0_i32 = arith.constant 0 : i32
    %c0_i32_0 = arith.constant 0 : i32
    %c0_i32_1 = arith.constant 0 : i32
    return %c0_i32, %c0_i32_0 : i32, i32
  }
  func.func @transform_4(%arg0: i32) -> (i32, i32) {
    %c0_i32 = arith.constant 0 : i32
    %c0_i32_0 = arith.constant 0 : i32
    %c0_i32_1 = arith.constant 0 : i32
    return %c0_i32, %c0_i32_0 : i32, i32
  }
  func.func @transform_5(%arg0: i32) -> (i32, i32) {
    %c0_i32 = arith.constant 0 : i32
    %c0_i32_0 = arith.constant 0 : i32
    %c0_i32_1 = arith.constant 0 : i32
    return %c0_i32, %c0_i32_0 : i32, i32
  }
  func.func @transform_6(%arg0: i32) -> (i32, i32) {
    %c0_i32 = arith.constant 0 : i32
    %c0_i32_0 = arith.constant 0 : i32
    %c0_i32_1 = arith.constant 0 : i32
    return %c0_i32, %c0_i32_0 : i32, i32
  }
  func.func @transform_7(%arg0: i32) -> (i32, i32) {
    %c0_i32 = arith.constant 0 : i32
    %c0_i32_0 = arith.constant 0 : i32
    %c0_i32_1 = arith.constant 0 : i32
    return %c0_i32, %c0_i32_0 : i32, i32
  }
  func.func @transform_8(%arg0: i32) -> (i32, i32) {
    %c0_i32 = arith.constant 0 : i32
    %c0_i32_0 = arith.constant 0 : i32
    %c0_i32_1 = arith.constant 0 : i32
    return %c0_i32, %c0_i32_0 : i32, i32
  }
  func.func @transform_9(%arg0: i32) -> (i32, i32) {
    %c0_i32 = arith.constant 0 : i32
    %c0_i32_0 = arith.constant 0 : i32
    %c0_i32_1 = arith.constant 0 : i32
    return %c0_i32, %c0_i32_0 : i32, i32
  }
  func.func @transform_10(%arg0: i32) -> (i32, i32) {
    %c0_i32 = arith.constant 0 : i32
    %c0_i32_0 = arith.constant 0 : i32
    %c0_i32_1 = arith.constant 0 : i32
    return %c0_i32, %c0_i32_0 : i32, i32
  }
  func.func @transform_11(%arg0: i32) -> (i32, i32) {
    %c0_i32 = arith.constant 0 : i32
    %c0_i32_0 = arith.constant 0 : i32
    %c0_i32_1 = arith.constant 0 : i32
    return %c0_i32, %c0_i32_0 : i32, i32
  }
  func.func @transform_12(%arg0: i32) -> (i32, i32) {
    %c0_i32 = arith.constant 0 : i32
    %c0_i32_0 = arith.constant 0 : i32
    %c0_i32_1 = arith.constant 0 : i32
    return %c0_i32, %c0_i32_0 : i32, i32
  }
  func.func @transform_13(%arg0: i32) -> (i32, i32) {
    %c0_i32 = arith.constant 0 : i32
    %c0_i32_0 = arith.constant 0 : i32
    %c0_i32_1 = arith.constant 0 : i32
    return %c0_i32, %c0_i32_0 : i32, i32
  }
  func.func @transform_14(%arg0: i32) -> (i32, i32) {
    %c0_i32 = arith.constant 0 : i32
    %c0_i32_0 = arith.constant 0 : i32
    %c0_i32_1 = arith.constant 0 : i32
    return %c0_i32, %c0_i32_0 : i32, i32
  }
  func.func @transform_15(%arg0: i32) -> (i32, i32, i32) {
    %c0_i32 = arith.constant 0 : i32
    %c0_i32_0 = arith.constant 0 : i32
    %c0_i32_1 = arith.constant 0 : i32
    return %arg0, %c0_i32, %c0_i32_0 : i32, i32, i32
  }
}

</mosaic_0001>

<llo_original>
// kernel: tpu_custom_call.1
$region0: #{tpu_custom_call.1}
  #allocation0 [shape = 'u32[]', space=smem, size = 0x4, offset = 0x4, fixed_abs, tag = 'smem constant byte address 0x4 - core index']
  #allocation1 [shape = 'u32[144,128]{1,0:T(1,128)}', space=vmem, size = 0x12000, scoped, tag = 'internal scratch']
  %s0 = inlined_call_operand.hbm [shape: f32[8,128], index: 0, kind: input, shape index: {}]
  %s1 = inlined_call_operand.hbm [shape: f32[8,128], index: 1, kind: output, shape index: {}]
  %s2 = sld [smem:[#allocation0]]
  $region18: #{tpu_custom_call.1} parent=0
    _
  %s4 = ssub.s32 1, %s2
  %s5 = scalar_select 0, %s4, %s2
  $region1: #{tpu_custom_call.1} parent=0
    #allocation2 [shape = 'u8[4096]{0}', space=vmem, size = 0x1000, scoped, tag = 'input window, operand 0, single buffered']
    #allocation3 [shape = 's32[1]{0}', space=sflag, size = 0x4, scoped, tag = 'scoped memory for tpu_custom_call.1']
    #allocation4 [shape = 's32[1]{0}', space=sflag, size = 0x4, scoped, tag = 'scoped memory for tpu_custom_call.1']
    #allocation5 [shape = 'u8[4096]{0}', space=vmem, size = 0x1000, scoped, tag = 'output window, operand 0, single buffered']
    %6 = vsyncpa [#allocation3], 0
    %7 = vsyncpa [#allocation4], 0
    // Predicated region
    $region2: #{tpu_custom_call.1} parent=1 // pred_check
      _
    $region3: #{tpu_custom_call.1} parent=1 // pred_check_branch
      %9 = sbr.rel (0) target = $region5
    $region4: #{tpu_custom_call.1} parent=1 // pred_region
      %s11 = ssub.s32 128, 128
      %12 = vsyncadd [#allocation3], %s11
      %s14 = sshll.u32 [#allocation2], 4
      %s15 = int_to_ptr.vmem [resolvable:$true] %s14
      %17 = dma.hbm_to_vmem [thread:$0]  %s0, 128, %s15, [#allocation3]
    $region5: #{tpu_custom_call.1} parent=1 // pred_fallthru
      _
    // Predicated region
    $region6: #{tpu_custom_call.1} parent=1 // pred_check
      _
    $region7: #{tpu_custom_call.1} parent=1 // pred_check_branch
      %19 = sbr.rel (0) target = $region9
    $region8: #{tpu_custom_call.1} parent=1 // pred_region
      %20 = dma.done [#allocation3], 128
    $region9: #{tpu_custom_call.1} parent=1 // pred_fallthru
      _
    %v21 = vld [vmem:[#allocation2] sm:$0xff]
    %22 = vrot.lane.b32.xlu0 %v21, 1
    %v23 = vpop.permute.xlu0 %22
    %24 = vst [vmem:[#allocation5] sm:$0xff] %v23
    // Predicated region
    $region10: #{tpu_custom_call.1} parent=1 // pred_check
      _
    $region11: #{tpu_custom_call.1} parent=1 // pred_check_branch
      %26 = sbr.rel (0) target = $region13
    $region12: #{tpu_custom_call.1} parent=1 // pred_region
      %s28 = ssub.s32 128, 128
      %29 = vsyncadd [#allocation4], %s28
      %s31 = sshll.u32 [#allocation5], 4
      %s32 = int_to_ptr.vmem [resolvable:$true] %s31
      %34 = dma.vmem_to_hbm [thread:$0]  %s32, 128, %s1, [#allocation4]
    $region13: #{tpu_custom_call.1} parent=1 // pred_fallthru
      _
    // Predicated region
    $region14: #{tpu_custom_call.1} parent=1 // pred_check
      _
    $region15: #{tpu_custom_call.1} parent=1 // pred_check_branch
      %36 = sbr.rel (0) target = $region17
    $region16: #{tpu_custom_call.1} parent=1 // pred_region
      %37 = dma.done [#allocation4], 128
    $region17: #{tpu_custom_call.1} parent=1 // pred_fallthru
      _
    %38 = vsyncpa [#allocation3], 1
    %39 = vsyncpa [#allocation4], 1

// kernel: tpu_custom_call.1
$region0: #{tpu_custom_call.1}
  #allocation0 [shape = 'u32[]', space=smem, size = 0x4, offset = 0x4, fixed_abs, tag = 'smem constant byte address 0x4 - core index']
  #allocation1 [shape = 'u32[144,128]{1,0:T(1,128)}', space=vmem, size = 0x12000, scoped, tag = 'internal scratch']
  %s0 = inlined_call_operand.vmem [shape: f32[2,4,256], index: 0, kind: input, shape index: {}]
  %s1 = inlined_call_operand.vmem [shape: f32[9,1,256], index: 1, kind: input, shape index: {}]
  %s2 = inlined_call_operand.vmem [shape: f32[16,4], index: 2, kind: input, shape index: {}]
  %s3 = inlined_call_operand.vmem [shape: f32[16,1], index: 3, kind: input, shape index: {}]
  %s4 = inlined_call_operand.vmem [shape: f32[16,1], index: 4, kind: input, shape index: {}]
  %s5 = inlined_call_operand.vmem [shape: f32[16,9], index: 5, kind: input, shape index: {}]
  %s6 = inlined_call_operand.vmem [shape: f32[16,1], index: 6, kind: input, shape index: {}]
  %s7 = inlined_call_operand.vmem [shape: f32[16,1], index: 7, kind: input, shape index: {}]
  %s8 = inlined_call_operand.vmem [shape: f32[4,16], index: 8, kind: input, shape index: {}]
  %s9 = inlined_call_operand.vmem [shape: f32[4,1], index: 9, kind: input, shape index: {}]
  %s10 = inlined_call_operand.vmem [shape: f32[16,4], index: 10, kind: input, shape index: {}]
  %s11 = inlined_call_operand.vmem [shape: f32[16,1], index: 11, kind: input, shape index: {}]
  %s12 = inlined_call_operand.vmem [shape: f32[4,16], index: 12, kind: input, shape index: {}]
  %s13 = inlined_call_operand.vmem [shape: f32[4,1], index: 13, kind: input, shape index: {}]
  %s14 = inlined_call_operand.vmem [shape: f32[4,1], index: 14, kind: input, shape index: {}]
  %s15 = inlined_call_operand.hbm [shape: f32[2,4,256], index: 15, kind: output, shape index: {}]
  %s16 = sld [smem:[#allocation0]]
  $region70: #{tpu_custom_call.1} parent=0
    _
  %s18 = ssub.s32 1, %s16
  %s19 = scalar_select 0, %s18, %s16
  $region1: #{tpu_custom_call.1} parent=0
    #allocation2 [shape = 'u8[8192]{0}', space=vmem, size = 0x2000, scoped, tag = 'output window, operand 0, single buffered']
    #allocation3 [shape = 's32[1]{0}', space=sflag, size = 0x4, scoped, tag = 'scoped memory for tpu_custom_call.1']
    %20 = vsyncpa [#allocation3], 0
    // Predicated region
    $region2: #{tpu_custom_call.1} parent=1 // pred_check
      _
    $region3: #{tpu_custom_call.1} parent=1 // pred_check_branch
      %22 = sbr.rel (0) target = $region5
    $region4: #{tpu_custom_call.1} parent=1 // pred_region
      _
    $region5: #{tpu_custom_call.1} parent=1 // pred_fallthru
      _
    // Predicated region
    $region6: #{tpu_custom_call.1} parent=1 // pred_check
      _
    $region7: #{tpu_custom_call.1} parent=1 // pred_check_branch
      %24 = sbr.rel (0) target = $region9
    $region8: #{tpu_custom_call.1} parent=1 // pred_region
      _
    $region9: #{tpu_custom_call.1} parent=1 // pred_fallthru
      _
    // Predicated region
    $region10: #{tpu_custom_call.1} parent=1 // pred_check
      _
    $region11: #{tpu_custom_call.1} parent=1 // pred_check_branch
      %26 = sbr.rel (0) target = $region13
    $region12: #{tpu_custom_call.1} parent=1 // pred_region
      _
    $region13: #{tpu_custom_call.1} parent=1 // pred_fallthru
      _
    // Predicated region
    $region14: #{tpu_custom_call.1} parent=1 // pred_check
      _
    $region15: #{tpu_custom_call.1} parent=1 // pred_check_branch
      %28 = sbr.rel (0) target = $region17
    $region16: #{tpu_custom_call.1} parent=1 // pred_region
      _
    $region17: #{tpu_custom_call.1} parent=1 // pred_fallthru
      _
    // Predicated region
    $region18: #{tpu_custom_call.1} parent=1 // pred_check
      _
    $region19: #{tpu_custom_call.1} parent=1 // pred_check_branch
      %30 = sbr.rel (0) target = $region21
    $region20: #{tpu_custom_call.1} parent=1 // pred_region
      _
    $region21: #{tpu_custom_call.1} parent=1 // pred_fallthru
      _
    // Predicated region
    $region22: #{tpu_custom_call.1} parent=1 // pred_check
      _
    $region23: #{tpu_custom_call.1} parent=1 // pred_check_branch
      %32 = sbr.rel (0) target = $region25
    $region24: #{tpu_custom_call.1} parent=1 // pred_region
      _
    $region25: #{tpu_custom_call.1} parent=1 // pred_fallthru
      _
    // Predicated region
    $region26: #{tpu_custom_call.1} parent=1 // pred_check
      _
    $region27: #{tpu_custom_call.1} parent=1 // pred_check_branch
      %34 = sbr.rel (0) target = $region29
    $region28: #{tpu_custom_call.1} parent=1 // pred_region
      _
    $region29: #{tpu_custom_call.1} parent=1 // pred_fallthru
      _
    // Predicated region
    $region30: #{tpu_custom_call.1} parent=1 // pred_check
      _
    $region31: #{tpu_custom_call.1} parent=1 // pred_check_branch
      %36 = sbr.rel (0) target = $region33
    $region32: #{tpu_custom_call.1} parent=1 // pred_region
      _
    $region33: #{tpu_custom_call.1} parent=1 // pred_fallthru
      _
    // Predicated region
    $region34: #{tpu_custom_call.1} parent=1 // pred_check
      _
    $region35: #{tpu_custom_call.1} parent=1 // pred_check_branch
      %38 = sbr.rel (0) target = $region37
    $region36: #{tpu_custom_call.1} parent=1 // pred_region
      _
    $region37: #{tpu_custom_call.1} parent=1 // pred_fallthru
      _
    // Predicated region
    $region38: #{tpu_custom_call.1} parent=1 // pred_check
      _
    $region39: #{tpu_custom_call.1} parent=1 // pred_check_branch
      %40 = sbr.rel (0) target = $region41
    $region40: #{tpu_custom_call.1} parent=1 // pred_region
      _
    $region41: #{tpu_custom_call.1} parent=1 // pred_fallthru
      _
    // Predicated region
    $region42: #{tpu_custom_call.1} parent=1 // pred_check
      _
    $region43: #{tpu_custom_call.1} parent=1 // pred_check_branch
      %42 = sbr.rel (0) target = $region45
    $region44: #{tpu_custom_call.1} parent=1 // pred_region
      _
    $region45: #{tpu_custom_call.1} parent=1 // pred_fallthru
      _
    // Predicated region
    $region46: #{tpu_custom_call.1} parent=1 // pred_check
      _
    $region47: #{tpu_custom_call.1} parent=1 // pred_check_branch
      %44 = sbr.rel (0) target = $region49
    $region48: #{tpu_custom_call.1} parent=1 // pred_region
      _
    $region49: #{tpu_custom_call.1} parent=1 // pred_fallthru
      _
    // Predicated region
    $region50: #{tpu_custom_call.1} parent=1 // pred_check
      _
    $region51: #{tpu_custom_call.1} parent=1 // pred_check_branch
      %46 = sbr.rel (0) target = $region53
    $region52: #{tpu_custom_call.1} parent=1 // pred_region
      _
    $region53: #{tpu_custom_call.1} parent=1 // pred_fallthru
      _
    // Predicated region
    $region54: #{tpu_custom_call.1} parent=1 // pred_check
      _
    $region55: #{tpu_custom_call.1} parent=1 // pred_check_branch
      %48 = sbr.rel (0) target = $region57
    $region56: #{tpu_custom_call.1} parent=1 // pred_region
      _
    $region57: #{tpu_custom_call.1} parent=1 // pred_fallthru
      _
    // Predicated region
    $region58: #{tpu_custom_call.1} parent=1 // pred_check
      _
    $region59: #{tpu_custom_call.1} parent=1 // pred_check_branch
      %50 = sbr.rel (0) target = $region61
    $region60: #{tpu_custom_call.1} parent=1 // pred_region
      _
    $region61: #{tpu_custom_call.1} parent=1 // pred_fallthru
      _
    %v51 = vld [vmem:[%s2] sm:$0xff]
    %v52 = vld [vmem:[%s2 + $0x8] sm:$0xff]
    %v53 = vld [vmem:[%s5] sm:$0xff]
    %v54 = vld [vmem:[%s5 + $0x8] sm:$0xff]
    %v55 = vld [vmem:[%s1] sm:$0x3]
    %v56 = vld [vmem:[%s1 + $0x2] sm:$0x3]
    %v57 = vld [vmem:[%s1 + $0x4] sm:$0x3]
    %v58 = vld [vmem:[%s1 + $0x6] sm:$0x3]
    %v59 = vld [vmem:[%s1 + $0xa] sm:$0x3]
    %v60 = vld [vmem:[%s1 + $0xc] sm:$0x3]
    %v61 = vld [vmem:[%s1 + $0xe] sm:$0x3]
    %v62 = vld [vmem:[%s1 + $0x10] sm:$0x3]
    %v63 = vld [vmem:[%s12] sm:$0xf]
    %v64 = vld [vmem:[%s3] sm:$0xff]
    %v65 = vld [vmem:[%s3 + $0x8] sm:$0xff]
    %v66 = vld [vmem:[%s4] sm:$0xff]
    %v67 = vld [vmem:[%s4 + $0x8] sm:$0xff]
    %v68 = vld [vmem:[%s6] sm:$0xff]
    %v69 = vld [vmem:[%s6 + $0x8] sm:$0xff]
    %v70 = vld [vmem:[%s7] sm:$0xff]
    %v71 = vld [vmem:[%s7 + $0x8] sm:$0xff]
    %v72 = vld [vmem:[%s13] sm:$0xf]
    %v73 = vld [vmem:[%s14] sm:$0xf]
    %v74 = vld [vmem:[%s8] sm:$0xf]
    %v75 = vld [vmem:[%s9] sm:$0xf]
    %v76 = vld [vmem:[%s10] sm:$0xff]
    %v77 = vld [vmem:[%s10 + $0x8] sm:$0xff]
    %v78 = vld [vmem:[%s11] sm:$0xff]
    %v79 = vld [vmem:[%s11 + $0x8] sm:$0xff]
    %v80 = vld [vmem:[%s0] sm:$0xff]
    %82 = vset.pattern.permute.xlu0 0
    %83 = vperm.xlu0 %82, %v51
    %v84 = vpop.permute.xlu0 %83
    %87 = vset.pattern.permute.xlu0 0
    %88 = vperm.xlu0 %87, %v52
    %v89 = vpop.permute.xlu0 %88
    %v92 = vlaneseq
    %v93 = vshrl.u32 %v92, 7
    %v94 = vsub.s32 0, %v93
    %v95 = vrot.slane %v80, %v94
    %v96 = vlaneseq
    %v97 = vshrl.u32 %v96, 7
    %v98 = vsub.s32 4, %v97
    %v99 = vrot.slane %v80, %v98
    %v102 = vlaneseq
    %v103 = vshrl.u32 %v102, 7
    %v104 = vsub.s32 0, %v103
    %v105 = vrot.slane %v95, %v104
    %v106 = vlaneseq
    %v107 = vshrl.u32 %v106, 7
    %v108 = vsub.s32 0, %v107
    %v109 = vrot.slane %v99, %v108
    %v110 = vmul.f32 %v84, %v105
    %v111 = vmul.f32 %v84, %v109
    %v112 = vmul.f32 %v89, %v105
    %v113 = vmul.f32 %v89, %v109
    %114 = vset.pattern.permute.xlu0 1
    %115 = vperm.xlu0 %114, %v51
    %v116 = vpop.permute.xlu0 %115
    %118 = vset.pattern.permute.xlu0 1
    %119 = vperm.xlu0 %118, %v52
    %v120 = vpop.permute.xlu0 %119
    %v122 = vlaneseq
    %v123 = vshrl.u32 %v122, 7
    %v124 = vsub.s32 1, %v123
    %v125 = vrot.slane %v80, %v124
    %v126 = vlaneseq
    %v127 = vshrl.u32 %v126, 7
    %v128 = vsub.s32 5, %v127
    %v129 = vrot.slane %v80, %v128
    %v132 = vlaneseq
    %v133 = vshrl.u32 %v132, 7
    %v134 = vsub.s32 1, %v133
    %v135 = vrot.slane %v125, %v134
    %v136 = vlaneseq
    %v137 = vshrl.u32 %v136, 7
    %v138 = vsub.s32 1, %v137
    %v139 = vrot.slane %v129, %v138
    %v140 = vmul.f32 %v116, %v135
    %v141 = vmul.f32 %v116, %v139
    %v142 = vmul.f32 %v120, %v135
    %v143 = vmul.f32 %v120, %v139
    %v144 = vadd.f32 %v110, %v140
    %v145 = vadd.f32 %v111, %v141
    %v146 = vadd.f32 %v112, %v142
    %v147 = vadd.f32 %v113, %v143
    %148 = vset.pattern.permute.xlu0 2
    %149 = vperm.xlu0 %148, %v51
    %v150 = vpop.permute.xlu0 %149
    %152 = vset.pattern.permute.xlu0 2
    %153 = vperm.xlu0 %152, %v52
    %v154 = vpop.permute.xlu0 %153
    %v156 = vlaneseq
    %v157 = vshrl.u32 %v156, 7
    %v158 = vsub.s32 2, %v157
    %v159 = vrot.slane %v80, %v158
    %v160 = vlaneseq
    %v161 = vshrl.u32 %v160, 7
    %v162 = vsub.s32 6, %v161
    %v163 = vrot.slane %v80, %v162
    %v166 = vlaneseq
    %v167 = vshrl.u32 %v166, 7
    %v168 = vsub.s32 2, %v167
    %v169 = vrot.slane %v159, %v168
    %v170 = vlaneseq
    %v171 = vshrl.u32 %v170, 7
    %v172 = vsub.s32 2, %v171
    %v173 = vrot.slane %v163, %v172
    %v174 = vmul.f32 %v150, %v169
    %v175 = vmul.f32 %v150, %v173
    %v176 = vmul.f32 %v154, %v169
    %v177 = vmul.f32 %v154, %v173
    %v178 = vadd.f32 %v144, %v174
    %v179 = vadd.f32 %v145, %v175
    %v180 = vadd.f32 %v146, %v176
    %v181 = vadd.f32 %v147, %v177
    %182 = vset.pattern.permute.xlu0 3
    %183 = vperm.xlu0 %182, %v51
    %v184 = vpop.permute.xlu0 %183
    %186 = vset.pattern.permute.xlu0 3
    %187 = vperm.xlu0 %186, %v52
    %v188 = vpop.permute.xlu0 %187
    %v190 = vlaneseq
    %v191 = vshrl.u32 %v190, 7
    %v192 = vsub.s32 3, %v191
    %v193 = vrot.slane %v80, %v192
    %v194 = vlaneseq
    %v195 = vshrl.u32 %v194, 7
    %v196 = vsub.s32 7, %v195
    %v197 = vrot.slane %v80, %v196
    %v200 = vlaneseq
    %v201 = vshrl.u32 %v200, 7
    %v202 = vsub.s32 3, %v201
    %v203 = vrot.slane %v193, %v202
    %v204 = vlaneseq
    %v205 = vshrl.u32 %v204, 7
    %v206 = vsub.s32 3, %v205
    %v207 = vrot.slane %v197, %v206
    %v208 = vmul.f32 %v184, %v203
    %v209 = vmul.f32 %v184, %v207
    %v210 = vmul.f32 %v188, %v203
    %v211 = vmul.f32 %v188, %v207
    %v212 = vadd.f32 %v178, %v208
    %v213 = vadd.f32 %v179, %v209
    %v214 = vadd.f32 %v180, %v210
    %v215 = vadd.f32 %v181, %v211
    %217 = vset.pattern.permute.xlu0 0
    %218 = vperm.xlu0 %217, %v64
    %v219 = vpop.permute.xlu0 %218
    %222 = vset.pattern.permute.xlu0 0
    %223 = vperm.xlu0 %222, %v65
    %v224 = vpop.permute.xlu0 %223
    %v226 = vmul.f32 %v212, %v219
    %v227 = vmul.f32 %v213, %v219
    %v228 = vmul.f32 %v214, %v224
    %v229 = vmul.f32 %v215, %v224
    %231 = vset.pattern.permute.xlu0 0
    %232 = vperm.xlu0 %231, %v66
    %v233 = vpop.permute.xlu0 %232
    %236 = vset.pattern.permute.xlu0 0
    %237 = vperm.xlu0 %236, %v67
    %v238 = vpop.permute.xlu0 %237
    %v240 = vadd.f32 %v226, %v233
    %v241 = vadd.f32 %v227, %v233
    %v242 = vadd.f32 %v228, %v238
    %v243 = vadd.f32 %v229, %v238
    %v244 = vxor.u32 %v240, 2147483648
    %v245 = vxor.u32 %v241, 2147483648
    %v246 = vxor.u32 %v242, 2147483648
    %v247 = vxor.u32 %v243, 2147483648
    %v248 = vmul.f32 %v244, 1.442695
    %v249 = vpow.pop %v248
    %v250 = vmul.f32 %v245, 1.442695
    %v251 = vpow.pop %v250
    %v252 = vmul.f32 %v246, 1.442695
    %v253 = vpow.pop %v252
    %v254 = vmul.f32 %v247, 1.442695
    %v255 = vpow.pop %v254
    %v256 = vadd.f32 %v249, 1.0
    %v257 = vadd.f32 %v251, 1.0
    %v258 = vadd.f32 %v253, 1.0
    %v259 = vadd.f32 %v255, 1.0
    %v260 = vrcp.pop %v256
    %v261 = vmul.f32 1.0, %v260
    %v262 = vrcp.pop %v257
    %v263 = vmul.f32 1.0, %v262
    %v264 = vrcp.pop %v258
    %v265 = vmul.f32 1.0, %v264
    %v266 = vrcp.pop %v259
    %v267 = vmul.f32 1.0, %v266
    %v268 = vmul.f32 %v240, %v261
    %v269 = vmul.f32 %v241, %v263
    %v270 = vmul.f32 %v242, %v265
    %v271 = vmul.f32 %v243, %v267
    %274 = vrot.lane.b32.xlu0 %v269, 17
    %v275 = vpop.permute.xlu0 %274
    %276 = vrot.lane.b32.xlu0 %v271, 17
    %v277 = vpop.permute.xlu0 %276
    %282 = vrot.lane.b32.xlu0 %v268, 17
    %v283 = vpop.permute.xlu0 %282
    %284 = vrot.lane.b32.xlu0 %v270, 17
    %v285 = vpop.permute.xlu0 %284
    %vm286 = vcmask 138240
    %v287 = vsel %vm286, %v283, %v275
    %v288 = vsel %vm286, %v285, %v277
    %v293 = vsel %vm286, %v275, %v283
    %v294 = vsel %vm286, %v277, %v285
    %296 = vset.pattern.permute.xlu0 0
    %297 = vperm.xlu0 %296, %v53
    %v298 = vpop.permute.xlu0 %297
    %301 = vset.pattern.permute.xlu0 0
    %302 = vperm.xlu0 %301, %v54
    %v303 = vpop.permute.xlu0 %302
    %v305 = vmul.f32 %v293, %v298
    %v306 = vmul.f32 %v287, %v298
    %v307 = vmul.f32 %v294, %v303
    %v308 = vmul.f32 %v288, %v303
    %v310 = vlaneseq
    %v311 = vshrl.u32 %v310, 7
    %v312 = vsub.s32 0, %v311
    %v313 = vrot.slane %v55, %v312
    %v314 = vlaneseq
    %v315 = vshrl.u32 %v314, 7
    %v316 = vsub.s32 1, %v315
    %v317 = vrot.slane %v55, %v316
    %v320 = vmul.f32 %v305, %v313
    %v321 = vmul.f32 %v306, %v317
    %v322 = vmul.f32 %v307, %v313
    %v323 = vmul.f32 %v308, %v317
    %v324 = vadd.f32 %v320, 0.0
    %v325 = vadd.f32 %v321, 0.0
    %v326 = vadd.f32 %v322, 0.0
    %v327 = vadd.f32 %v323, 0.0
    %328 = vrot.lane.b32.xlu0 %v269, 16
    %v329 = vpop.permute.xlu0 %328
    %330 = vrot.lane.b32.xlu0 %v271, 16
    %v331 = vpop.permute.xlu0 %330
    %334 = vrot.lane.b32.xlu0 %v268, 16
    %v335 = vpop.permute.xlu0 %334
    %336 = vrot.lane.b32.xlu0 %v270, 16
    %v337 = vpop.permute.xlu0 %336
    %vm338 = vcmask 130048
    %v339 = vsel %vm338, %v335, %v329
    %v340 = vsel %vm338, %v337, %v331
    %v345 = vsel %vm338, %v329, %v335
    %v346 = vsel %vm338, %v331, %v337
    %347 = vset.pattern.permute.xlu0 1
    %348 = vperm.xlu0 %347, %v53
    %v349 = vpop.permute.xlu0 %348
    %351 = vset.pattern.permute.xlu0 1
    %352 = vperm.xlu0 %351, %v54
    %v353 = vpop.permute.xlu0 %352
    %v355 = vmul.f32 %v345, %v349
    %v356 = vmul.f32 %v339, %v349
    %v357 = vmul.f32 %v346, %v353
    %v358 = vmul.f32 %v340, %v353
    %v360 = vlaneseq
    %v361 = vshrl.u32 %v360, 7
    %v362 = vsub.s32 0, %v361
    %v363 = vrot.slane %v56, %v362
    %v364 = vlaneseq
    %v365 = vshrl.u32 %v364, 7
    %v366 = vsub.s32 1, %v365
    %v367 = vrot.slane %v56, %v366
    %v370 = vmul.f32 %v355, %v363
    %v371 = vmul.f32 %v356, %v367
    %v372 = vmul.f32 %v357, %v363
    %v373 = vmul.f32 %v358, %v367
    %v374 = vadd.f32 %v324, %v370
    %v375 = vadd.f32 %v325, %v371
    %v376 = vadd.f32 %v326, %v372
    %v377 = vadd.f32 %v327, %v373
    %378 = vrot.lane.b32.xlu0 %v269, 15
    %v379 = vpop.permute.xlu0 %378
    %380 = vrot.lane.b32.xlu0 %v271, 15
    %v381 = vpop.permute.xlu0 %380
    %384 = vrot.lane.b32.xlu0 %v268, 15
    %v385 = vpop.permute.xlu0 %384
    %386 = vrot.lane.b32.xlu0 %v270, 15
    %v387 = vpop.permute.xlu0 %386
    %vm388 = vcmask 121856
    %v389 = vsel %vm388, %v385, %v379
    %v390 = vsel %vm388, %v387, %v381
    %v395 = vsel %vm388, %v379, %v385
    %v396 = vsel %vm388, %v381, %v387
    %397 = vset.pattern.permute.xlu0 2
    %398 = vperm.xlu0 %397, %v53
    %v399 = vpop.permute.xlu0 %398
    %401 = vset.pattern.permute.xlu0 2
    %402 = vperm.xlu0 %401, %v54
    %v403 = vpop.permute.xlu0 %402
    %v405 = vmul.f32 %v395, %v399
    %v406 = vmul.f32 %v389, %v399
    %v407 = vmul.f32 %v396, %v403
    %v408 = vmul.f32 %v390, %v403
    %v410 = vlaneseq
    %v411 = vshrl.u32 %v410, 7
    %v412 = vsub.s32 0, %v411
    %v413 = vrot.slane %v57, %v412
    %v414 = vlaneseq
    %v415 = vshrl.u32 %v414, 7
    %v416 = vsub.s32 1, %v415
    %v417 = vrot.slane %v57, %v416
    %v420 = vmul.f32 %v405, %v413
    %v421 = vmul.f32 %v406, %v417
    %v422 = vmul.f32 %v407, %v413
    %v423 = vmul.f32 %v408, %v417
    %v424 = vadd.f32 %v374, %v420
    %v425 = vadd.f32 %v375, %v421
    %v426 = vadd.f32 %v376, %v422
    %v427 = vadd.f32 %v377, %v423
    %428 = vrot.lane.b32.xlu0 %v269, 1
    %v429 = vpop.permute.xlu0 %428
    %430 = vrot.lane.b32.xlu0 %v271, 1
    %v431 = vpop.permute.xlu0 %430
    %434 = vrot.lane.b32.xlu0 %v268, 1
    %v435 = vpop.permute.xlu0 %434
    %436 = vrot.lane.b32.xlu0 %v270, 1
    %v437 = vpop.permute.xlu0 %436
    %vm438 = vcmask 7168
    %v439 = vsel %vm438, %v435, %v429
    %v440 = vsel %vm438, %v437, %v431
    %v445 = vsel %vm438, %v429, %v435
    %v446 = vsel %vm438, %v431, %v437
    %447 = vset.pattern.permute.xlu0 3
    %448 = vperm.xlu0 %447, %v53
    %v449 = vpop.permute.xlu0 %448
    %451 = vset.pattern.permute.xlu0 3
    %452 = vperm.xlu0 %451, %v54
    %v453 = vpop.permute.xlu0 %452
    %v455 = vmul.f32 %v445, %v449
    %v456 = vmul.f32 %v439, %v449
    %v457 = vmul.f32 %v446, %v453
    %v458 = vmul.f32 %v440, %v453
    %v460 = vlaneseq
    %v461 = vshrl.u32 %v460, 7
    %v462 = vsub.s32 0, %v461
    %v463 = vrot.slane %v58, %v462
    %v464 = vlaneseq
    %v465 = vshrl.u32 %v464, 7
    %v466 = vsub.s32 1, %v465
    %v467 = vrot.slane %v58, %v466
    %v470 = vmul.f32 %v455, %v463
    %v471 = vmul.f32 %v456, %v467
    %v472 = vmul.f32 %v457, %v463
    %v473 = vmul.f32 %v458, %v467
    %v474 = vadd.f32 %v424, %v470
    %v475 = vadd.f32 %v425, %v471
    %v476 = vadd.f32 %v426, %v472
    %v477 = vadd.f32 %v427, %v473
    %478 = vset.pattern.permute.xlu0 4
    %479 = vperm.xlu0 %478, %v53
    %v480 = vpop.permute.xlu0 %479
    %482 = vset.pattern.permute.xlu0 4
    %483 = vperm.xlu0 %482, %v54
    %v484 = vpop.permute.xlu0 %483
    %v486 = vmul.f32 %v268, %v480
    %v487 = vmul.f32 %v269, %v480
    %v488 = vmul.f32 %v270, %v484
    %v489 = vmul.f32 %v271, %v484
    %v490 = vadd.f32 %v474, %v486
    %v491 = vadd.f32 %v475, %v487
    %v492 = vadd.f32 %v476, %v488
    %v493 = vadd.f32 %v477, %v489
    %494 = vrot.lane.b32.xlu0 %v268, 127
    %v495 = vpop.permute.xlu0 %494
    %496 = vrot.lane.b32.xlu0 %v269, 127
    %v497 = vpop.permute.xlu0 %496
    %498 = vrot.lane.b32.xlu0 %v270, 127
    %v499 = vpop.permute.xlu0 %498
    %500 = vrot.lane.b32.xlu0 %v271, 127
    %v501 = vpop.permute.xlu0 %500
    %vm502 = vcmask 1039360
    %v503 = vsel %vm502, %v495, %v497
    %v504 = vsel %vm502, %v499, %v501
    %v511 = vsel %vm502, %v497, %v495
    %v512 = vsel %vm502, %v501, %v499
    %513 = vset.pattern.permute.xlu0 5
    %514 = vperm.xlu0 %513, %v53
    %v515 = vpop.permute.xlu0 %514
    %517 = vset.pattern.permute.xlu0 5
    %518 = vperm.xlu0 %517, %v54
    %v519 = vpop.permute.xlu0 %518
    %v521 = vmul.f32 %v503, %v515
    %v522 = vmul.f32 %v511, %v515
    %v523 = vmul.f32 %v504, %v519
    %v524 = vmul.f32 %v512, %v519
    %v526 = vlaneseq
    %v527 = vshrl.u32 %v526, 7
    %v528 = vsub.s32 0, %v527
    %v529 = vrot.slane %v59, %v528
    %v530 = vlaneseq
    %v531 = vshrl.u32 %v530, 7
    %v532 = vsub.s32 1, %v531
    %v533 = vrot.slane %v59, %v532
    %v536 = vmul.f32 %v521, %v529
    %v537 = vmul.f32 %v522, %v533
    %v538 = vmul.f32 %v523, %v529
    %v539 = vmul.f32 %v524, %v533
    %v540 = vadd.f32 %v490, %v536
    %v541 = vadd.f32 %v491, %v537
    %v542 = vadd.f32 %v492, %v538
    %v543 = vadd.f32 %v493, %v539
    %544 = vrot.lane.b32.xlu0 %v268, 113
    %v545 = vpop.permute.xlu0 %544
    %546 = vrot.lane.b32.xlu0 %v269, 113
    %v547 = vpop.permute.xlu0 %546
    %548 = vrot.lane.b32.xlu0 %v270, 113
    %v549 = vpop.permute.xlu0 %548
    %550 = vrot.lane.b32.xlu0 %v271, 113
    %v551 = vpop.permute.xlu0 %550
    %vm552 = vcmask 924672
    %v553 = vsel %vm552, %v545, %v547
    %v554 = vsel %vm552, %v549, %v551
    %v561 = vsel %vm552, %v547, %v545
    %v562 = vsel %vm552, %v551, %v549
    %563 = vset.pattern.permute.xlu0 6
    %564 = vperm.xlu0 %563, %v53
    %v565 = vpop.permute.xlu0 %564
    %567 = vset.pattern.permute.xlu0 6
    %568 = vperm.xlu0 %567, %v54
    %v569 = vpop.permute.xlu0 %568
    %v571 = vmul.f32 %v553, %v565
    %v572 = vmul.f32 %v561, %v565
    %v573 = vmul.f32 %v554, %v569
    %v574 = vmul.f32 %v562, %v569
    %v576 = vlaneseq
    %v577 = vshrl.u32 %v576, 7
    %v578 = vsub.s32 0, %v577
    %v579 = vrot.slane %v60, %v578
    %v580 = vlaneseq
    %v581 = vshrl.u32 %v580, 7
    %v582 = vsub.s32 1, %v581
    %v583 = vrot.slane %v60, %v582
    %v586 = vmul.f32 %v571, %v579
    %v587 = vmul.f32 %v572, %v583
    %v588 = vmul.f32 %v573, %v579
    %v589 = vmul.f32 %v574, %v583
    %v590 = vadd.f32 %v540, %v586
    %v591 = vadd.f32 %v541, %v587
    %v592 = vadd.f32 %v542, %v588
    %v593 = vadd.f32 %v543, %v589
    %594 = vrot.lane.b32.xlu0 %v268, 112
    %v595 = vpop.permute.xlu0 %594
    %596 = vrot.lane.b32.xlu0 %v269, 112
    %v597 = vpop.permute.xlu0 %596
    %598 = vrot.lane.b32.xlu0 %v270, 112
    %v599 = vpop.permute.xlu0 %598
    %600 = vrot.lane.b32.xlu0 %v271, 112
    %v601 = vpop.permute.xlu0 %600
    %vm602 = vcmask 916480
    %v603 = vsel %vm602, %v595, %v597
    %v604 = vsel %vm602, %v599, %v601
    %v611 = vsel %vm602, %v597, %v595
    %v612 = vsel %vm602, %v601, %v599
    %613 = vset.pattern.permute.xlu0 7
    %614 = vperm.xlu0 %613, %v53
    %v615 = vpop.permute.xlu0 %614
    %617 = vset.pattern.permute.xlu0 7
    %618 = vperm.xlu0 %617, %v54
    %v619 = vpop.permute.xlu0 %618
    %v621 = vmul.f32 %v603, %v615
    %v622 = vmul.f32 %v611, %v615
    %v623 = vmul.f32 %v604, %v619
    %v624 = vmul.f32 %v612, %v619
    %v626 = vlaneseq
    %v627 = vshrl.u32 %v626, 7
    %v628 = vsub.s32 0, %v627
    %v629 = vrot.slane %v61, %v628
    %v630 = vlaneseq
    %v631 = vshrl.u32 %v630, 7
    %v632 = vsub.s32 1, %v631
    %v633 = vrot.slane %v61, %v632
    %v636 = vmul.f32 %v621, %v629
    %v637 = vmul.f32 %v622, %v633
    %v638 = vmul.f32 %v623, %v629
    %v639 = vmul.f32 %v624, %v633
    %v640 = vadd.f32 %v590, %v636
    %v641 = vadd.f32 %v591, %v637
    %v642 = vadd.f32 %v592, %v638
    %v643 = vadd.f32 %v593, %v639
    %644 = vrot.lane.b32.xlu0 %v268, 111
    %v645 = vpop.permute.xlu0 %644
    %646 = vrot.lane.b32.xlu0 %v269, 111
    %v647 = vpop.permute.xlu0 %646
    %648 = vrot.lane.b32.xlu0 %v270, 111
    %v649 = vpop.permute.xlu0 %648
    %650 = vrot.lane.b32.xlu0 %v271, 111
    %v651 = vpop.permute.xlu0 %650
    %vm652 = vcmask 908288
    %v653 = vsel %vm652, %v645, %v647
    %v654 = vsel %vm652, %v649, %v651
    %v661 = vsel %vm652, %v647, %v645
    %v662 = vsel %vm652, %v651, %v649
    %663 = vset.pattern.permute.xlu0 8
    %664 = vperm.xlu0 %663, %v53
    %v665 = vpop.permute.xlu0 %664
    %667 = vset.pattern.permute.xlu0 8
    %668 = vperm.xlu0 %667, %v54
    %v669 = vpop.permute.xlu0 %668
    %v671 = vmul.f32 %v653, %v665
    %v672 = vmul.f32 %v661, %v665
    %v673 = vmul.f32 %v654, %v669
    %v674 = vmul.f32 %v662, %v669
    %v676 = vlaneseq
    %v677 = vshrl.u32 %v676, 7
    %v678 = vsub.s32 0, %v677
    %v679 = vrot.slane %v62, %v678
    %v680 = vlaneseq
    %v681 = vshrl.u32 %v680, 7
    %v682 = vsub.s32 1, %v681
    %v683 = vrot.slane %v62, %v682
    %v686 = vmul.f32 %v671, %v679
    %v687 = vmul.f32 %v672, %v683
    %v688 = vmul.f32 %v673, %v679
    %v689 = vmul.f32 %v674, %v683
    %v690 = vadd.f32 %v640, %v686
    %v691 = vadd.f32 %v641, %v687
    %v692 = vadd.f32 %v642, %v688
    %v693 = vadd.f32 %v643, %v689
    %695 = vset.pattern.permute.xlu0 0
    %696 = vperm.xlu0 %695, %v68
    %v697 = vpop.permute.xlu0 %696
    %700 = vset.pattern.permute.xlu0 0
    %701 = vperm.xlu0 %700, %v69
    %v702 = vpop.permute.xlu0 %701
    %v704 = vmul.f32 %v690, %v697
    %v705 = vmul.f32 %v691, %v697
    %v706 = vmul.f32 %v692, %v702
    %v707 = vmul.f32 %v693, %v702
    %709 = vset.pattern.permute.xlu0 0
    %710 = vperm.xlu0 %709, %v70
    %v711 = vpop.permute.xlu0 %710
    %714 = vset.pattern.permute.xlu0 0
    %715 = vperm.xlu0 %714, %v71
    %v716 = vpop.permute.xlu0 %715
    %v718 = vadd.f32 %v704, %v711
    %v719 = vadd.f32 %v705, %v711
    %v720 = vadd.f32 %v706, %v716
    %v721 = vadd.f32 %v707, %v716
    %v722 = vxor.u32 %v718, 2147483648
    %v723 = vxor.u32 %v719, 2147483648
    %v724 = vxor.u32 %v720, 2147483648
    %v725 = vxor.u32 %v721, 2147483648
    %v726 = vmul.f32 %v722, 1.442695
    %v727 = vpow.pop %v726
    %v728 = vmul.f32 %v723, 1.442695
    %v729 = vpow.pop %v728
    %v730 = vmul.f32 %v724, 1.442695
    %v731 = vpow.pop %v730
    %v732 = vmul.f32 %v725, 1.442695
    %v733 = vpow.pop %v732
    %v734 = vadd.f32 %v727, 1.0
    %v735 = vadd.f32 %v729, 1.0
    %v736 = vadd.f32 %v731, 1.0
    %v737 = vadd.f32 %v733, 1.0
    %v738 = vrcp.pop %v734
    %v739 = vmul.f32 1.0, %v738
    %v740 = vrcp.pop %v735
    %v741 = vmul.f32 1.0, %v740
    %v742 = vrcp.pop %v736
    %v743 = vmul.f32 1.0, %v742
    %v744 = vrcp.pop %v737
    %v745 = vmul.f32 1.0, %v744
    %v746 = vmul.f32 %v718, %v739
    %v747 = vmul.f32 %v719, %v741
    %v748 = vmul.f32 %v720, %v743
    %v749 = vmul.f32 %v721, %v745
    %v750 = vadd.f32 %v746, %v747
    %751 = vadd.xlane.f32.xlu0 %v750
    %v752 = vpop.xlane.xlu0 %751
    %v753 = vadd.f32 %v748, %v749
    %754 = vadd.xlane.f32.xlu0 %v753
    %v755 = vpop.xlane.xlu0 %754
    %v756 = vrcp.pop 256.0
    %v757 = vmul.f32 %v752, %v756
    %v758 = vmul.f32 %v755, %v756
    %v759 = vlaneseq
    %v760 = vshrl.u32 %v759, 7
    %v761 = vsub.s32 0, %v760
    %v762 = vrot.slane %v757, %v761
    %v763 = vmul.f32 %v74, %v762
    %v764 = vlaneseq
    %v765 = vshrl.u32 %v764, 7
    %v766 = vsub.s32 1, %v765
    %v767 = vrot.slane %v757, %v766
    %v768 = vmul.f32 %v74, %v767
    %770 = vrot.lane.b32.xlu0 %v768, 127
    %v771 = vpop.permute.xlu0 %770
    %v773 = vadd.f32 %v763, %v771
    %v774 = vlaneseq
    %v775 = vshrl.u32 %v774, 7
    %v776 = vsub.s32 2, %v775
    %v777 = vrot.slane %v757, %v776
    %v778 = vmul.f32 %v74, %v777
    %780 = vrot.lane.b32.xlu0 %v778, 126
    %v781 = vpop.permute.xlu0 %780
    %v783 = vadd.f32 %v773, %v781
    %v784 = vlaneseq
    %v785 = vshrl.u32 %v784, 7
    %v786 = vsub.s32 3, %v785
    %v787 = vrot.slane %v757, %v786
    %v788 = vmul.f32 %v74, %v787
    %790 = vrot.lane.b32.xlu0 %v788, 125
    %v791 = vpop.permute.xlu0 %790
    %v793 = vadd.f32 %v783, %v791
    %v794 = vlaneseq
    %v795 = vshrl.u32 %v794, 7
    %v796 = vsub.s32 4, %v795
    %v797 = vrot.slane %v757, %v796
    %v798 = vmul.f32 %v74, %v797
    %800 = vrot.lane.b32.xlu0 %v798, 124
    %v801 = vpop.permute.xlu0 %800
    %v803 = vadd.f32 %v793, %v801
    %v804 = vlaneseq
    %v805 = vshrl.u32 %v804, 7
    %v806 = vsub.s32 5, %v805
    %v807 = vrot.slane %v757, %v806
    %v808 = vmul.f32 %v74, %v807
    %810 = vrot.lane.b32.xlu0 %v808, 123
    %v811 = vpop.permute.xlu0 %810
    %v813 = vadd.f32 %v803, %v811
    %v814 = vlaneseq
    %v815 = vshrl.u32 %v814, 7
    %v816 = vsub.s32 6, %v815
    %v817 = vrot.slane %v757, %v816
    %v818 = vmul.f32 %v74, %v817
    %820 = vrot.lane.b32.xlu0 %v818, 122
    %v821 = vpop.permute.xlu0 %820
    %v823 = vadd.f32 %v813, %v821
    %v824 = vlaneseq
    %v825 = vshrl.u32 %v824, 7
    %v826 = vsub.s32 7, %v825
    %v827 = vrot.slane %v757, %v826
    %v828 = vmul.f32 %v74, %v827
    %830 = vrot.lane.b32.xlu0 %v828, 121
    %v831 = vpop.permute.xlu0 %830
    %v833 = vadd.f32 %v823, %v831
    %v834 = vlaneseq
    %v835 = vshrl.u32 %v834, 7
    %v836 = vsub.s32 0, %v835
    %v837 = vrot.slane %v758, %v836
    %v838 = vmul.f32 %v74, %v837
    %840 = vrot.lane.b32.xlu0 %v838, 120
    %v841 = vpop.permute.xlu0 %840
    %v843 = vadd.f32 %v833, %v841
    %v844 = vlaneseq
    %v845 = vshrl.u32 %v844, 7
    %v846 = vsub.s32 1, %v845
    %v847 = vrot.slane %v758, %v846
    %v848 = vmul.f32 %v74, %v847
    %850 = vrot.lane.b32.xlu0 %v848, 119
    %v851 = vpop.permute.xlu0 %850
    %v853 = vadd.f32 %v843, %v851
    %v854 = vlaneseq
    %v855 = vshrl.u32 %v854, 7
    %v856 = vsub.s32 2, %v855
    %v857 = vrot.slane %v758, %v856
    %v858 = vmul.f32 %v74, %v857
    %860 = vrot.lane.b32.xlu0 %v858, 118
    %v861 = vpop.permute.xlu0 %860
    %v863 = vadd.f32 %v853, %v861
    %v864 = vlaneseq
    %v865 = vshrl.u32 %v864, 7
    %v866 = vsub.s32 3, %v865
    %v867 = vrot.slane %v758, %v866
    %v868 = vmul.f32 %v74, %v867
    %870 = vrot.lane.b32.xlu0 %v868, 117
    %v871 = vpop.permute.xlu0 %870
    %v873 = vadd.f32 %v863, %v871
    %v874 = vlaneseq
    %v875 = vshrl.u32 %v874, 7
    %v876 = vsub.s32 4, %v875
    %v877 = vrot.slane %v758, %v876
    %v878 = vmul.f32 %v74, %v877
    %880 = vrot.lane.b32.xlu0 %v878, 116
    %v881 = vpop.permute.xlu0 %880
    %v883 = vadd.f32 %v873, %v881
    %v884 = vlaneseq
    %v885 = vshrl.u32 %v884, 7
    %v886 = vsub.s32 5, %v885
    %v887 = vrot.slane %v758, %v886
    %v888 = vmul.f32 %v74, %v887
    %890 = vrot.lane.b32.xlu0 %v888, 115
    %v891 = vpop.permute.xlu0 %890
    %v893 = vadd.f32 %v883, %v891
    %v894 = vlaneseq
    %v895 = vshrl.u32 %v894, 7
    %v896 = vsub.s32 6, %v895
    %v897 = vrot.slane %v758, %v896
    %v898 = vmul.f32 %v74, %v897
    %900 = vrot.lane.b32.xlu0 %v898, 114
    %v901 = vpop.permute.xlu0 %900
    %v903 = vadd.f32 %v893, %v901
    %v904 = vlaneseq
    %v905 = vshrl.u32 %v904, 7
    %v906 = vsub.s32 7, %v905
    %v907 = vrot.slane %v758, %v906
    %v908 = vmul.f32 %v74, %v907
    %910 = vrot.lane.b32.xlu0 %v908, 113
    %v911 = vpop.permute.xlu0 %910
    %v913 = vadd.f32 %v903, %v911
    %v914 = vadd.f32 %v913, %v75
    %v915 = vxor.u32 %v914, 2147483648
    %v916 = vmul.f32 %v915, 1.442695
    %v917 = vpow.pop %v916
    %v918 = vadd.f32 %v917, 1.0
    %v919 = vrcp.pop %v918
    %v920 = vmul.f32 1.0, %v919
    %v921 = vmul.f32 %v914, %v920
    %v922 = vlaneseq
    %v923 = vshrl.u32 %v922, 7
    %v924 = vsub.s32 0, %v923
    %v925 = vrot.slane %v921, %v924
    %v926 = vmul.f32 %v76, %v925
    %v927 = vmul.f32 %v77, %v925
    %v928 = vlaneseq
    %v929 = vshrl.u32 %v928, 7
    %v930 = vsub.s32 1, %v929
    %v931 = vrot.slane %v921, %v930
    %933 = vrot.lane.b32.xlu0 %v931, 1
    %v934 = vpop.permute.xlu0 %933
    %v936 = vmul.f32 %v76, %v934
    %v937 = vmul.f32 %v77, %v934
    %940 = vrot.lane.b32.xlu0 %v936, 127
    %v941 = vpop.permute.xlu0 %940
    %942 = vrot.lane.b32.xlu0 %v937, 127
    %v943 = vpop.permute.xlu0 %942
    %v946 = vadd.f32 %v926, %v941
    %v947 = vadd.f32 %v927, %v943
    %v948 = vlaneseq
    %v949 = vshrl.u32 %v948, 7
    %v950 = vsub.s32 2, %v949
    %v951 = vrot.slane %v921, %v950
    %953 = vrot.lane.b32.xlu0 %v951, 2
    %v954 = vpop.permute.xlu0 %953
    %v956 = vmul.f32 %v76, %v954
    %v957 = vmul.f32 %v77, %v954
    %960 = vrot.lane.b32.xlu0 %v956, 126
    %v961 = vpop.permute.xlu0 %960
    %962 = vrot.lane.b32.xlu0 %v957, 126
    %v963 = vpop.permute.xlu0 %962
    %v966 = vadd.f32 %v946, %v961
    %v967 = vadd.f32 %v947, %v963
    %v968 = vlaneseq
    %v969 = vshrl.u32 %v968, 7
    %v970 = vsub.s32 3, %v969
    %v971 = vrot.slane %v921, %v970
    %973 = vrot.lane.b32.xlu0 %v971, 3
    %v974 = vpop.permute.xlu0 %973
    %v976 = vmul.f32 %v76, %v974
    %v977 = vmul.f32 %v77, %v974
    %980 = vrot.lane.b32.xlu0 %v976, 125
    %v981 = vpop.permute.xlu0 %980
    %982 = vrot.lane.b32.xlu0 %v977, 125
    %v983 = vpop.permute.xlu0 %982
    %v986 = vadd.f32 %v966, %v981
    %v987 = vadd.f32 %v967, %v983
    %v988 = vadd.f32 %v986, %v78
    %v989 = vadd.f32 %v987, %v79
    %v990 = vxor.u32 %v988, 2147483648
    %v991 = vxor.u32 %v989, 2147483648
    %v992 = vmul.f32 %v990, 1.442695
    %v993 = vpow.pop %v992
    %v994 = vmul.f32 %v991, 1.442695
    %v995 = vpow.pop %v994
    %v996 = vadd.f32 %v993, 1.0
    %v997 = vadd.f32 %v995, 1.0
    %v998 = vrcp.pop %v996
    %v999 = vmul.f32 1.0, %v998
    %v1000 = vrcp.pop %v997
    %v1001 = vmul.f32 1.0, %v1000
    %1003 = vset.pattern.permute.xlu0 0
    %1004 = vperm.xlu0 %1003, %v999
    %v1005 = vpop.permute.xlu0 %1004
    %1008 = vset.pattern.permute.xlu0 0
    %1009 = vperm.xlu0 %1008, %v1001
    %v1010 = vpop.permute.xlu0 %1009
    %v1012 = vmul.f32 %v746, %v1005
    %v1013 = vmul.f32 %v747, %v1005
    %v1014 = vmul.f32 %v748, %v1010
    %v1015 = vmul.f32 %v749, %v1010
    %1017 = vset.pattern.permute.xlu0 0
    %1018 = vperm.xlu0 %1017, %v63
    %v1019 = vpop.permute.xlu0 %1018
    %v1021 = vlaneseq
    %v1022 = vshrl.u32 %v1021, 7
    %v1023 = vsub.s32 0, %v1022
    %v1024 = vrot.slane %v1012, %v1023
    %v1025 = vlaneseq
    %v1026 = vshrl.u32 %v1025, 7
    %v1027 = vsub.s32 0, %v1026
    %v1028 = vrot.slane %v1013, %v1027
    %v1029 = vmul.f32 %v1019, %v1024
    %v1030 = vmul.f32 %v1019, %v1028
    %1031 = vset.pattern.permute.xlu0 1
    %1032 = vperm.xlu0 %1031, %v63
    %v1033 = vpop.permute.xlu0 %1032
    %v1035 = vlaneseq
    %v1036 = vshrl.u32 %v1035, 7
    %v1037 = vsub.s32 1, %v1036
    %v1038 = vrot.slane %v1012, %v1037
    %v1039 = vlaneseq
    %v1040 = vshrl.u32 %v1039, 7
    %v1041 = vsub.s32 1, %v1040
    %v1042 = vrot.slane %v1013, %v1041
    %v1043 = vmul.f32 %v1033, %v1038
    %v1044 = vmul.f32 %v1033, %v1042
    %v1045 = vadd.f32 %v1029, %v1043
    %v1046 = vadd.f32 %v1030, %v1044
    %1047 = vset.pattern.permute.xlu0 2
    %1048 = vperm.xlu0 %1047, %v63
    %v1049 = vpop.permute.xlu0 %1048
    %v1051 = vlaneseq
    %v1052 = vshrl.u32 %v1051, 7
    %v1053 = vsub.s32 2, %v1052
    %v1054 = vrot.slane %v1012, %v1053
    %v1055 = vlaneseq
    %v1056 = vshrl.u32 %v1055, 7
    %v1057 = vsub.s32 2, %v1056
    %v1058 = vrot.slane %v1013, %v1057
    %v1059 = vmul.f32 %v1049, %v1054
    %v1060 = vmul.f32 %v1049, %v1058
    %v1061 = vadd.f32 %v1045, %v1059
    %v1062 = vadd.f32 %v1046, %v1060
    %1063 = vset.pattern.permute.xlu0 3
    %1064 = vperm.xlu0 %1063, %v63
    %v1065 = vpop.permute.xlu0 %1064
    %v1067 = vlaneseq
    %v1068 = vshrl.u32 %v1067, 7
    %v1069 = vsub.s32 3, %v1068
    %v1070 = vrot.slane %v1012, %v1069
    %v1071 = vlaneseq
    %v1072 = vshrl.u32 %v1071, 7
    %v1073 = vsub.s32 3, %v1072
    %v1074 = vrot.slane %v1013, %v1073
    %v1075 = vmul.f32 %v1065, %v1070
    %v1076 = vmul.f32 %v1065, %v1074
    %v1077 = vadd.f32 %v1061, %v1075
    %v1078 = vadd.f32 %v1062, %v1076
    %1079 = vset.pattern.permute.xlu0 4
    %1080 = vperm.xlu0 %1079, %v63
    %v1081 = vpop.permute.xlu0 %1080
    %v1083 = vlaneseq
    %v1084 = vshrl.u32 %v1083, 7
    %v1085 = vsub.s32 4, %v1084
    %v1086 = vrot.slane %v1012, %v1085
    %v1087 = vlaneseq
    %v1088 = vshrl.u32 %v1087, 7
    %v1089 = vsub.s32 4, %v1088
    %v1090 = vrot.slane %v1013, %v1089
    %v1091 = vmul.f32 %v1081, %v1086
    %v1092 = vmul.f32 %v1081, %v1090
    %v1093 = vadd.f32 %v1077, %v1091
    %v1094 = vadd.f32 %v1078, %v1092
    %1095 = vset.pattern.permute.xlu0 5
    %1096 = vperm.xlu0 %1095, %v63
    %v1097 = vpop.permute.xlu0 %1096
    %v1099 = vlaneseq
    %v1100 = vshrl.u32 %v1099, 7
    %v1101 = vsub.s32 5, %v1100
    %v1102 = vrot.slane %v1012, %v1101
    %v1103 = vlaneseq
    %v1104 = vshrl.u32 %v1103, 7
    %v1105 = vsub.s32 5, %v1104
    %v1106 = vrot.slane %v1013, %v1105
    %v1107 = vmul.f32 %v1097, %v1102
    %v1108 = vmul.f32 %v1097, %v1106
    %v1109 = vadd.f32 %v1093, %v1107
    %v1110 = vadd.f32 %v1094, %v1108
    %1111 = vset.pattern.permute.xlu0 6
    %1112 = vperm.xlu0 %1111, %v63
    %v1113 = vpop.permute.xlu0 %1112
    %v1115 = vlaneseq
    %v1116 = vshrl.u32 %v1115, 7
    %v1117 = vsub.s32 6, %v1116
    %v1118 = vrot.slane %v1012, %v1117
    %v1119 = vlaneseq
    %v1120 = vshrl.u32 %v1119, 7
    %v1121 = vsub.s32 6, %v1120
    %v1122 = vrot.slane %v1013, %v1121
    %v1123 = vmul.f32 %v1113, %v1118
    %v1124 = vmul.f32 %v1113, %v1122
    %v1125 = vadd.f32 %v1109, %v1123
    %v1126 = vadd.f32 %v1110, %v1124
    %1127 = vset.pattern.permute.xlu0 7
    %1128 = vperm.xlu0 %1127, %v63
    %v1129 = vpop.permute.xlu0 %1128
    %v1131 = vlaneseq
    %v1132 = vshrl.u32 %v1131, 7
    %v1133 = vsub.s32 7, %v1132
    %v1134 = vrot.slane %v1012, %v1133
    %v1135 = vlaneseq
    %v1136 = vshrl.u32 %v1135, 7
    %v1137 = vsub.s32 7, %v1136
    %v1138 = vrot.slane %v1013, %v1137
    %v1139 = vmul.f32 %v1129, %v1134
    %v1140 = vmul.f32 %v1129, %v1138
    %v1141 = vadd.f32 %v1125, %v1139
    %v1142 = vadd.f32 %v1126, %v1140
    %1143 = vset.pattern.permute.xlu0 8
    %1144 = vperm.xlu0 %1143, %v63
    %v1145 = vpop.permute.xlu0 %1144
    %v1147 = vlaneseq
    %v1148 = vshrl.u32 %v1147, 7
    %v1149 = vsub.s32 0, %v1148
    %v1150 = vrot.slane %v1014, %v1149
    %v1151 = vlaneseq
    %v1152 = vshrl.u32 %v1151, 7
    %v1153 = vsub.s32 0, %v1152
    %v1154 = vrot.slane %v1015, %v1153
    %v1155 = vmul.f32 %v1145, %v1150
    %v1156 = vmul.f32 %v1145, %v1154
    %v1157 = vadd.f32 %v1141, %v1155
    %v1158 = vadd.f32 %v1142, %v1156
    %1159 = vset.pattern.permute.xlu0 9
    %1160 = vperm.xlu0 %1159, %v63
    %v1161 = vpop.permute.xlu0 %1160
    %v1163 = vlaneseq
    %v1164 = vshrl.u32 %v1163, 7
    %v1165 = vsub.s32 1, %v1164
    %v1166 = vrot.slane %v1014, %v1165
    %v1167 = vlaneseq
    %v1168 = vshrl.u32 %v1167, 7
    %v1169 = vsub.s32 1, %v1168
    %v1170 = vrot.slane %v1015, %v1169
    %v1171 = vmul.f32 %v1161, %v1166
    %v1172 = vmul.f32 %v1161, %v1170
    %v1173 = vadd.f32 %v1157, %v1171
    %v1174 = vadd.f32 %v1158, %v1172
    %1175 = vset.pattern.permute.xlu0 10
    %1176 = vperm.xlu0 %1175, %v63
    %v1177 = vpop.permute.xlu0 %1176
    %v1179 = vlaneseq
    %v1180 = vshrl.u32 %v1179, 7
    %v1181 = vsub.s32 2, %v1180
    %v1182 = vrot.slane %v1014, %v1181
    %v1183 = vlaneseq
    %v1184 = vshrl.u32 %v1183, 7
    %v1185 = vsub.s32 2, %v1184
    %v1186 = vrot.slane %v1015, %v1185
    %v1187 = vmul.f32 %v1177, %v1182
    %v1188 = vmul.f32 %v1177, %v1186
    %v1189 = vadd.f32 %v1173, %v1187
    %v1190 = vadd.f32 %v1174, %v1188
    %1191 = vset.pattern.permute.xlu0 11
    %1192 = vperm.xlu0 %1191, %v63
    %v1193 = vpop.permute.xlu0 %1192
    %v1195 = vlaneseq
    %v1196 = vshrl.u32 %v1195, 7
    %v1197 = vsub.s32 3, %v1196
    %v1198 = vrot.slane %v1014, %v1197
    %v1199 = vlaneseq
    %v1200 = vshrl.u32 %v1199, 7
    %v1201 = vsub.s32 3, %v1200
    %v1202 = vrot.slane %v1015, %v1201
    %v1203 = vmul.f32 %v1193, %v1198
    %v1204 = vmul.f32 %v1193, %v1202
    %v1205 = vadd.f32 %v1189, %v1203
    %v1206 = vadd.f32 %v1190, %v1204
    %1207 = vset.pattern.permute.xlu0 12
    %1208 = vperm.xlu0 %1207, %v63
    %v1209 = vpop.permute.xlu0 %1208
    %v1211 = vlaneseq
    %v1212 = vshrl.u32 %v1211, 7
    %v1213 = vsub.s32 4, %v1212
    %v1214 = vrot.slane %v1014, %v1213
    %v1215 = vlaneseq
    %v1216 = vshrl.u32 %v1215, 7
    %v1217 = vsub.s32 4, %v1216
    %v1218 = vrot.slane %v1015, %v1217
    %v1219 = vmul.f32 %v1209, %v1214
    %v1220 = vmul.f32 %v1209, %v1218
    %v1221 = vadd.f32 %v1205, %v1219
    %v1222 = vadd.f32 %v1206, %v1220
    %1223 = vset.pattern.permute.xlu0 13
    %1224 = vperm.xlu0 %1223, %v63
    %v1225 = vpop.permute.xlu0 %1224
    %v1227 = vlaneseq
    %v1228 = vshrl.u32 %v1227, 7
    %v1229 = vsub.s32 5, %v1228
    %v1230 = vrot.slane %v1014, %v1229
    %v1231 = vlaneseq
    %v1232 = vshrl.u32 %v1231, 7
    %v1233 = vsub.s32 5, %v1232
    %v1234 = vrot.slane %v1015, %v1233
    %v1235 = vmul.f32 %v1225, %v1230
    %v1236 = vmul.f32 %v1225, %v1234
    %v1237 = vadd.f32 %v1221, %v1235
    %v1238 = vadd.f32 %v1222, %v1236
    %1239 = vset.pattern.permute.xlu0 14
    %1240 = vperm.xlu0 %1239, %v63
    %v1241 = vpop.permute.xlu0 %1240
    %v1243 = vlaneseq
    %v1244 = vshrl.u32 %v1243, 7
    %v1245 = vsub.s32 6, %v1244
    %v1246 = vrot.slane %v1014, %v1245
    %v1247 = vlaneseq
    %v1248 = vshrl.u32 %v1247, 7
    %v1249 = vsub.s32 6, %v1248
    %v1250 = vrot.slane %v1015, %v1249
    %v1251 = vmul.f32 %v1241, %v1246
    %v1252 = vmul.f32 %v1241, %v1250
    %v1253 = vadd.f32 %v1237, %v1251
    %v1254 = vadd.f32 %v1238, %v1252
    %1255 = vset.pattern.permute.xlu0 15
    %1256 = vperm.xlu0 %1255, %v63
    %v1257 = vpop.permute.xlu0 %1256
    %v1259 = vlaneseq
    %v1260 = vshrl.u32 %v1259, 7
    %v1261 = vsub.s32 7, %v1260
    %v1262 = vrot.slane %v1014, %v1261
    %v1263 = vlaneseq
    %v1264 = vshrl.u32 %v1263, 7
    %v1265 = vsub.s32 7, %v1264
    %v1266 = vrot.slane %v1015, %v1265
    %v1267 = vmul.f32 %v1257, %v1262
    %v1268 = vmul.f32 %v1257, %v1266
    %v1269 = vadd.f32 %v1253, %v1267
    %v1270 = vadd.f32 %v1254, %v1268
    %1272 = vset.pattern.permute.xlu0 0
    %1273 = vperm.xlu0 %1272, %v72
    %v1274 = vpop.permute.xlu0 %1273
    %v1276 = vmul.f32 %v1269, %v1274
    %v1277 = vmul.f32 %v1270, %v1274
    %1279 = vset.pattern.permute.xlu0 0
    %1280 = vperm.xlu0 %1279, %v73
    %v1281 = vpop.permute.xlu0 %1280
    %v1283 = vadd.f32 %v1276, %v1281
    %v1284 = vadd.f32 %v1277, %v1281
    %v1285 = vcombine.high %v80, %v80
    %v1287 = vadd.f32 %v1283, %v80
    %v1288 = vadd.f32 %v1284, %v1285
    %v1291 = vcombine.low %v1287, %v1288
    %1293 = vst [vmem:[#allocation2] sm:$0xff] %v1291
    %s1294 = scalar_lea.vmem %s0, 8
    %v1295 = vld [vmem:[%s1294] sm:$0xff]
    %v1297 = vlaneseq
    %v1298 = vshrl.u32 %v1297, 7
    %v1299 = vsub.s32 0, %v1298
    %v1300 = vrot.slane %v1295, %v1299
    %v1301 = vlaneseq
    %v1302 = vshrl.u32 %v1301, 7
    %v1303 = vsub.s32 4, %v1302
    %v1304 = vrot.slane %v1295, %v1303
    %v1307 = vlaneseq
    %v1308 = vshrl.u32 %v1307, 7
    %v1309 = vsub.s32 0, %v1308
    %v1310 = vrot.slane %v1300, %v1309
    %v1311 = vlaneseq
    %v1312 = vshrl.u32 %v1311, 7
    %v1313 = vsub.s32 0, %v1312
    %v1314 = vrot.slane %v1304, %v1313
    %v1315 = vmul.f32 %v84, %v1310
    %v1316 = vmul.f32 %v84, %v1314
    %v1317 = vmul.f32 %v89, %v1310
    %v1318 = vmul.f32 %v89, %v1314
    %v1319 = vlaneseq
    %v1320 = vshrl.u32 %v1319, 7
    %v1321 = vsub.s32 1, %v1320
    %v1322 = vrot.slane %v1295, %v1321
    %v1323 = vlaneseq
    %v1324 = vshrl.u32 %v1323, 7
    %v1325 = vsub.s32 5, %v1324
    %v1326 = vrot.slane %v1295, %v1325
    %v1329 = vlaneseq
    %v1330 = vshrl.u32 %v1329, 7
    %v1331 = vsub.s32 1, %v1330
    %v1332 = vrot.slane %v1322, %v1331
    %v1333 = vlaneseq
    %v1334 = vshrl.u32 %v1333, 7
    %v1335 = vsub.s32 1, %v1334
    %v1336 = vrot.slane %v1326, %v1335
    %v1337 = vmul.f32 %v116, %v1332
    %v1338 = vmul.f32 %v116, %v1336
    %v1339 = vmul.f32 %v120, %v1332
    %v1340 = vmul.f32 %v120, %v1336
    %v1341 = vadd.f32 %v1315, %v1337
    %v1342 = vadd.f32 %v1316, %v1338
    %v1343 = vadd.f32 %v1317, %v1339
    %v1344 = vadd.f32 %v1318, %v1340
    %v1345 = vlaneseq
    %v1346 = vshrl.u32 %v1345, 7
    %v1347 = vsub.s32 2, %v1346
    %v1348 = vrot.slane %v1295, %v1347
    %v1349 = vlaneseq
    %v1350 = vshrl.u32 %v1349, 7
    %v1351 = vsub.s32 6, %v1350
    %v1352 = vrot.slane %v1295, %v1351
    %v1355 = vlaneseq
    %v1356 = vshrl.u32 %v1355, 7
    %v1357 = vsub.s32 2, %v1356
    %v1358 = vrot.slane %v1348, %v1357
    %v1359 = vlaneseq
    %v1360 = vshrl.u32 %v1359, 7
    %v1361 = vsub.s32 2, %v1360
    %v1362 = vrot.slane %v1352, %v1361
    %v1363 = vmul.f32 %v150, %v1358
    %v1364 = vmul.f32 %v150, %v1362
    %v1365 = vmul.f32 %v154, %v1358
    %v1366 = vmul.f32 %v154, %v1362
    %v1367 = vadd.f32 %v1341, %v1363
    %v1368 = vadd.f32 %v1342, %v1364
    %v1369 = vadd.f32 %v1343, %v1365
    %v1370 = vadd.f32 %v1344, %v1366
    %v1371 = vlaneseq
    %v1372 = vshrl.u32 %v1371, 7
    %v1373 = vsub.s32 3, %v1372
    %v1374 = vrot.slane %v1295, %v1373
    %v1375 = vlaneseq
    %v1376 = vshrl.u32 %v1375, 7
    %v1377 = vsub.s32 7, %v1376
    %v1378 = vrot.slane %v1295, %v1377
    %v1381 = vlaneseq
    %v1382 = vshrl.u32 %v1381, 7
    %v1383 = vsub.s32 3, %v1382
    %v1384 = vrot.slane %v1374, %v1383
    %v1385 = vlaneseq
    %v1386 = vshrl.u32 %v1385, 7
    %v1387 = vsub.s32 3, %v1386
    %v1388 = vrot.slane %v1378, %v1387
    %v1389 = vmul.f32 %v184, %v1384
    %v1390 = vmul.f32 %v184, %v1388
    %v1391 = vmul.f32 %v188, %v1384
    %v1392 = vmul.f32 %v188, %v1388
    %v1393 = vadd.f32 %v1367, %v1389
    %v1394 = vadd.f32 %v1368, %v1390
    %v1395 = vadd.f32 %v1369, %v1391
    %v1396 = vadd.f32 %v1370, %v1392
    %v1397 = vmul.f32 %v1393, %v219
    %v1398 = vmul.f32 %v1394, %v219
    %v1399 = vmul.f32 %v1395, %v224
    %v1400 = vmul.f32 %v1396, %v224
    %v1401 = vadd.f32 %v1397, %v233
    %v1402 = vadd.f32 %v1398, %v233
    %v1403 = vadd.f32 %v1399, %v238
    %v1404 = vadd.f32 %v1400, %v238
    %v1405 = vxor.u32 %v1401, 2147483648
    %v1406 = vxor.u32 %v1402, 2147483648
    %v1407 = vxor.u32 %v1403, 2147483648
    %v1408 = vxor.u32 %v1404, 2147483648
    %v1409 = vmul.f32 %v1405, 1.442695
    %v1410 = vpow.pop %v1409
    %v1411 = vmul.f32 %v1406, 1.442695
    %v1412 = vpow.pop %v1411
    %v1413 = vmul.f32 %v1407, 1.442695
    %v1414 = vpow.pop %v1413
    %v1415 = vmul.f32 %v1408, 1.442695
    %v1416 = vpow.pop %v1415
    %v1417 = vadd.f32 %v1410, 1.0
    %v1418 = vadd.f32 %v1412, 1.0
    %v1419 = vadd.f32 %v1414, 1.0
    %v1420 = vadd.f32 %v1416, 1.0
    %v1421 = vrcp.pop %v1417
    %v1422 = vmul.f32 1.0, %v1421
    %v1423 = vrcp.pop %v1418
    %v1424 = vmul.f32 1.0, %v1423
    %v1425 = vrcp.pop %v1419
    %v1426 = vmul.f32 1.0, %v1425
    %v1427 = vrcp.pop %v1420
    %v1428 = vmul.f32 1.0, %v1427
    %v1429 = vmul.f32 %v1401, %v1422
    %v1430 = vmul.f32 %v1402, %v1424
    %v1431 = vmul.f32 %v1403, %v1426
    %v1432 = vmul.f32 %v1404, %v1428
    %1435 = vrot.lane.b32.xlu0 %v1430, 17
    %v1436 = vpop.permute.xlu0 %1435
    %1437 = vrot.lane.b32.xlu0 %v1432, 17
    %v1438 = vpop.permute.xlu0 %1437
    %1443 = vrot.lane.b32.xlu0 %v1429, 17
    %v1444 = vpop.permute.xlu0 %1443
    %1445 = vrot.lane.b32.xlu0 %v1431, 17
    %v1446 = vpop.permute.xlu0 %1445
    %v1447 = vsel %vm286, %v1444, %v1436
    %v1448 = vsel %vm286, %v1446, %v1438
    %v1453 = vsel %vm286, %v1436, %v1444
    %v1454 = vsel %vm286, %v1438, %v1446
    %v1455 = vmul.f32 %v1453, %v298
    %v1456 = vmul.f32 %v1447, %v298
    %v1457 = vmul.f32 %v1454, %v303
    %v1458 = vmul.f32 %v1448, %v303
    %v1459 = vmul.f32 %v1455, %v313
    %v1460 = vmul.f32 %v1456, %v317
    %v1461 = vmul.f32 %v1457, %v313
    %v1462 = vmul.f32 %v1458, %v317
    %v1463 = vadd.f32 %v1459, 0.0
    %v1464 = vadd.f32 %v1460, 0.0
    %v1465 = vadd.f32 %v1461, 0.0
    %v1466 = vadd.f32 %v1462, 0.0
    %1467 = vrot.lane.b32.xlu0 %v1430, 16
    %v1468 = vpop.permute.xlu0 %1467
    %1469 = vrot.lane.b32.xlu0 %v1432, 16
    %v1470 = vpop.permute.xlu0 %1469
    %1473 = vrot.lane.b32.xlu0 %v1429, 16
    %v1474 = vpop.permute.xlu0 %1473
    %1475 = vrot.lane.b32.xlu0 %v1431, 16
    %v1476 = vpop.permute.xlu0 %1475
    %v1477 = vsel %vm338, %v1474, %v1468
    %v1478 = vsel %vm338, %v1476, %v1470
    %v1483 = vsel %vm338, %v1468, %v1474
    %v1484 = vsel %vm338, %v1470, %v1476
    %v1485 = vmul.f32 %v1483, %v349
    %v1486 = vmul.f32 %v1477, %v349
    %v1487 = vmul.f32 %v1484, %v353
    %v1488 = vmul.f32 %v1478, %v353
    %v1489 = vmul.f32 %v1485, %v363
    %v1490 = vmul.f32 %v1486, %v367
    %v1491 = vmul.f32 %v1487, %v363
    %v1492 = vmul.f32 %v1488, %v367
    %v1493 = vadd.f32 %v1463, %v1489
    %v1494 = vadd.f32 %v1464, %v1490
    %v1495 = vadd.f32 %v1465, %v1491
    %v1496 = vadd.f32 %v1466, %v1492
    %1497 = vrot.lane.b32.xlu0 %v1430, 15
    %v1498 = vpop.permute.xlu0 %1497
    %1499 = vrot.lane.b32.xlu0 %v1432, 15
    %v1500 = vpop.permute.xlu0 %1499
    %1503 = vrot.lane.b32.xlu0 %v1429, 15
    %v1504 = vpop.permute.xlu0 %1503
    %1505 = vrot.lane.b32.xlu0 %v1431, 15
    %v1506 = vpop.permute.xlu0 %1505
    %v1507 = vsel %vm388, %v1504, %v1498
    %v1508 = vsel %vm388, %v1506, %v1500
    %v1513 = vsel %vm388, %v1498, %v1504
    %v1514 = vsel %vm388, %v1500, %v1506
    %v1515 = vmul.f32 %v1513, %v399
    %v1516 = vmul.f32 %v1507, %v399
    %v1517 = vmul.f32 %v1514, %v403
    %v1518 = vmul.f32 %v1508, %v403
    %v1519 = vmul.f32 %v1515, %v413
    %v1520 = vmul.f32 %v1516, %v417
    %v1521 = vmul.f32 %v1517, %v413
    %v1522 = vmul.f32 %v1518, %v417
    %v1523 = vadd.f32 %v1493, %v1519
    %v1524 = vadd.f32 %v1494, %v1520
    %v1525 = vadd.f32 %v1495, %v1521
    %v1526 = vadd.f32 %v1496, %v1522
    %1527 = vrot.lane.b32.xlu0 %v1430, 1
    %v1528 = vpop.permute.xlu0 %1527
    %1529 = vrot.lane.b32.xlu0 %v1432, 1
    %v1530 = vpop.permute.xlu0 %1529
    %1533 = vrot.lane.b32.xlu0 %v1429, 1
    %v1534 = vpop.permute.xlu0 %1533
    %1535 = vrot.lane.b32.xlu0 %v1431, 1
    %v1536 = vpop.permute.xlu0 %1535
    %v1537 = vsel %vm438, %v1534, %v1528
    %v1538 = vsel %vm438, %v1536, %v1530
    %v1543 = vsel %vm438, %v1528, %v1534
    %v1544 = vsel %vm438, %v1530, %v1536
    %v1545 = vmul.f32 %v1543, %v449
    %v1546 = vmul.f32 %v1537, %v449
    %v1547 = vmul.f32 %v1544, %v453
    %v1548 = vmul.f32 %v1538, %v453
    %v1549 = vmul.f32 %v1545, %v463
    %v1550 = vmul.f32 %v1546, %v467
    %v1551 = vmul.f32 %v1547, %v463
    %v1552 = vmul.f32 %v1548, %v467
    %v1553 = vadd.f32 %v1523, %v1549
    %v1554 = vadd.f32 %v1524, %v1550
    %v1555 = vadd.f32 %v1525, %v1551
    %v1556 = vadd.f32 %v1526, %v1552
    %v1557 = vmul.f32 %v1429, %v480
    %v1558 = vmul.f32 %v1430, %v480
    %v1559 = vmul.f32 %v1431, %v484
    %v1560 = vmul.f32 %v1432, %v484
    %v1561 = vadd.f32 %v1553, %v1557
    %v1562 = vadd.f32 %v1554, %v1558
    %v1563 = vadd.f32 %v1555, %v1559
    %v1564 = vadd.f32 %v1556, %v1560
    %1565 = vrot.lane.b32.xlu0 %v1429, 127
    %v1566 = vpop.permute.xlu0 %1565
    %1567 = vrot.lane.b32.xlu0 %v1430, 127
    %v1568 = vpop.permute.xlu0 %1567
    %1569 = vrot.lane.b32.xlu0 %v1431, 127
    %v1570 = vpop.permute.xlu0 %1569
    %1571 = vrot.lane.b32.xlu0 %v1432, 127
    %v1572 = vpop.permute.xlu0 %1571
    %v1573 = vsel %vm502, %v1566, %v1568
    %v1574 = vsel %vm502, %v1570, %v1572
    %v1581 = vsel %vm502, %v1568, %v1566
    %v1582 = vsel %vm502, %v1572, %v1570
    %v1583 = vmul.f32 %v1573, %v515
    %v1584 = vmul.f32 %v1581, %v515
    %v1585 = vmul.f32 %v1574, %v519
    %v1586 = vmul.f32 %v1582, %v519
    %v1587 = vmul.f32 %v1583, %v529
    %v1588 = vmul.f32 %v1584, %v533
    %v1589 = vmul.f32 %v1585, %v529
    %v1590 = vmul.f32 %v1586, %v533
    %v1591 = vadd.f32 %v1561, %v1587
    %v1592 = vadd.f32 %v1562, %v1588
    %v1593 = vadd.f32 %v1563, %v1589
    %v1594 = vadd.f32 %v1564, %v1590
    %1595 = vrot.lane.b32.xlu0 %v1429, 113
    %v1596 = vpop.permute.xlu0 %1595
    %1597 = vrot.lane.b32.xlu0 %v1430, 113
    %v1598 = vpop.permute.xlu0 %1597
    %1599 = vrot.lane.b32.xlu0 %v1431, 113
    %v1600 = vpop.permute.xlu0 %1599
    %1601 = vrot.lane.b32.xlu0 %v1432, 113
    %v1602 = vpop.permute.xlu0 %1601
    %v1603 = vsel %vm552, %v1596, %v1598
    %v1604 = vsel %vm552, %v1600, %v1602
    %v1611 = vsel %vm552, %v1598, %v1596
    %v1612 = vsel %vm552, %v1602, %v1600
    %v1613 = vmul.f32 %v1603, %v565
    %v1614 = vmul.f32 %v1611, %v565
    %v1615 = vmul.f32 %v1604, %v569
    %v1616 = vmul.f32 %v1612, %v569
    %v1617 = vmul.f32 %v1613, %v579
    %v1618 = vmul.f32 %v1614, %v583
    %v1619 = vmul.f32 %v1615, %v579
    %v1620 = vmul.f32 %v1616, %v583
    %v1621 = vadd.f32 %v1591, %v1617
    %v1622 = vadd.f32 %v1592, %v1618
    %v1623 = vadd.f32 %v1593, %v1619
    %v1624 = vadd.f32 %v1594, %v1620
    %1625 = vrot.lane.b32.xlu0 %v1429, 112
    %v1626 = vpop.permute.xlu0 %1625
    %1627 = vrot.lane.b32.xlu0 %v1430, 112
    %v1628 = vpop.permute.xlu0 %1627
    %1629 = vrot.lane.b32.xlu0 %v1431, 112
    %v1630 = vpop.permute.xlu0 %1629
    %1631 = vrot.lane.b32.xlu0 %v1432, 112
    %v1632 = vpop.permute.xlu0 %1631
    %v1633 = vsel %vm602, %v1626, %v1628
    %v1634 = vsel %vm602, %v1630, %v1632
    %v1641 = vsel %vm602, %v1628, %v1626
    %v1642 = vsel %vm602, %v1632, %v1630
    %v1643 = vmul.f32 %v1633, %v615
    %v1644 = vmul.f32 %v1641, %v615
    %v1645 = vmul.f32 %v1634, %v619
    %v1646 = vmul.f32 %v1642, %v619
    %v1647 = vmul.f32 %v1643, %v629
    %v1648 = vmul.f32 %v1644, %v633
    %v1649 = vmul.f32 %v1645, %v629
    %v1650 = vmul.f32 %v1646, %v633
    %v1651 = vadd.f32 %v1621, %v1647
    %v1652 = vadd.f32 %v1622, %v1648
    %v1653 = vadd.f32 %v1623, %v1649
    %v1654 = vadd.f32 %v1624, %v1650
    %1655 = vrot.lane.b32.xlu0 %v1429, 111
    %v1656 = vpop.permute.xlu0 %1655
    %1657 = vrot.lane.b32.xlu0 %v1430, 111
    %v1658 = vpop.permute.xlu0 %1657
    %1659 = vrot.lane.b32.xlu0 %v1431, 111
    %v1660 = vpop.permute.xlu0 %1659
    %1661 = vrot.lane.b32.xlu0 %v1432, 111
    %v1662 = vpop.permute.xlu0 %1661
    %v1663 = vsel %vm652, %v1656, %v1658
    %v1664 = vsel %vm652, %v1660, %v1662
    %v1671 = vsel %vm652, %v1658, %v1656
    %v1672 = vsel %vm652, %v1662, %v1660
    %v1673 = vmul.f32 %v1663, %v665
    %v1674 = vmul.f32 %v1671, %v665
    %v1675 = vmul.f32 %v1664, %v669
    %v1676 = vmul.f32 %v1672, %v669
    %v1677 = vmul.f32 %v1673, %v679
    %v1678 = vmul.f32 %v1674, %v683
    %v1679 = vmul.f32 %v1675, %v679
    %v1680 = vmul.f32 %v1676, %v683
    %v1681 = vadd.f32 %v1651, %v1677
    %v1682 = vadd.f32 %v1652, %v1678
    %v1683 = vadd.f32 %v1653, %v1679
    %v1684 = vadd.f32 %v1654, %v1680
    %v1685 = vmul.f32 %v1681, %v697
    %v1686 = vmul.f32 %v1682, %v697
    %v1687 = vmul.f32 %v1683, %v702
    %v1688 = vmul.f32 %v1684, %v702
    %v1689 = vadd.f32 %v1685, %v711
    %v1690 = vadd.f32 %v1686, %v711
    %v1691 = vadd.f32 %v1687, %v716
    %v1692 = vadd.f32 %v1688, %v716
    %v1693 = vxor.u32 %v1689, 2147483648
    %v1694 = vxor.u32 %v1690, 2147483648
    %v1695 = vxor.u32 %v1691, 2147483648
    %v1696 = vxor.u32 %v1692, 2147483648
    %v1697 = vmul.f32 %v1693, 1.442695
    %v1698 = vpow.pop %v1697
    %v1699 = vmul.f32 %v1694, 1.442695
    %v1700 = vpow.pop %v1699
    %v1701 = vmul.f32 %v1695, 1.442695
    %v1702 = vpow.pop %v1701
    %v1703 = vmul.f32 %v1696, 1.442695
    %v1704 = vpow.pop %v1703
    %v1705 = vadd.f32 %v1698, 1.0
    %v1706 = vadd.f32 %v1700, 1.0
    %v1707 = vadd.f32 %v1702, 1.0
    %v1708 = vadd.f32 %v1704, 1.0
    %v1709 = vrcp.pop %v1705
    %v1710 = vmul.f32 1.0, %v1709
    %v1711 = vrcp.pop %v1706
    %v1712 = vmul.f32 1.0, %v1711
    %v1713 = vrcp.pop %v1707
    %v1714 = vmul.f32 1.0, %v1713
    %v1715 = vrcp.pop %v1708
    %v1716 = vmul.f32 1.0, %v1715
    %v1717 = vmul.f32 %v1689, %v1710
    %v1718 = vmul.f32 %v1690, %v1712
    %v1719 = vmul.f32 %v1691, %v1714
    %v1720 = vmul.f32 %v1692, %v1716
    %v1721 = vadd.f32 %v1717, %v1718
    %1722 = vadd.xlane.f32.xlu0 %v1721
    %v1723 = vpop.xlane.xlu0 %1722
    %v1724 = vadd.f32 %v1719, %v1720
    %1725 = vadd.xlane.f32.xlu0 %v1724
    %v1726 = vpop.xlane.xlu0 %1725
    %v1727 = vmul.f32 %v1723, %v756
    %v1728 = vmul.f32 %v1726, %v756
    %v1729 = vlaneseq
    %v1730 = vshrl.u32 %v1729, 7
    %v1731 = vsub.s32 0, %v1730
    %v1732 = vrot.slane %v1727, %v1731
    %v1733 = vmul.f32 %v74, %v1732
    %v1734 = vlaneseq
    %v1735 = vshrl.u32 %v1734, 7
    %v1736 = vsub.s32 1, %v1735
    %v1737 = vrot.slane %v1727, %v1736
    %v1738 = vmul.f32 %v74, %v1737
    %1740 = vrot.lane.b32.xlu0 %v1738, 127
    %v1741 = vpop.permute.xlu0 %1740
    %v1743 = vadd.f32 %v1733, %v1741
    %v1744 = vlaneseq
    %v1745 = vshrl.u32 %v1744, 7
    %v1746 = vsub.s32 2, %v1745
    %v1747 = vrot.slane %v1727, %v1746
    %v1748 = vmul.f32 %v74, %v1747
    %1750 = vrot.lane.b32.xlu0 %v1748, 126
    %v1751 = vpop.permute.xlu0 %1750
    %v1753 = vadd.f32 %v1743, %v1751
    %v1754 = vlaneseq
    %v1755 = vshrl.u32 %v1754, 7
    %v1756 = vsub.s32 3, %v1755
    %v1757 = vrot.slane %v1727, %v1756
    %v1758 = vmul.f32 %v74, %v1757
    %1760 = vrot.lane.b32.xlu0 %v1758, 125
    %v1761 = vpop.permute.xlu0 %1760
    %v1763 = vadd.f32 %v1753, %v1761
    %v1764 = vlaneseq
    %v1765 = vshrl.u32 %v1764, 7
    %v1766 = vsub.s32 4, %v1765
    %v1767 = vrot.slane %v1727, %v1766
    %v1768 = vmul.f32 %v74, %v1767
    %1770 = vrot.lane.b32.xlu0 %v1768, 124
    %v1771 = vpop.permute.xlu0 %1770
    %v1773 = vadd.f32 %v1763, %v1771
    %v1774 = vlaneseq
    %v1775 = vshrl.u32 %v1774, 7
    %v1776 = vsub.s32 5, %v1775
    %v1777 = vrot.slane %v1727, %v1776
    %v1778 = vmul.f32 %v74, %v1777
    %1780 = vrot.lane.b32.xlu0 %v1778, 123
    %v1781 = vpop.permute.xlu0 %1780
    %v1783 = vadd.f32 %v1773, %v1781
    %v1784 = vlaneseq
    %v1785 = vshrl.u32 %v1784, 7
    %v1786 = vsub.s32 6, %v1785
    %v1787 = vrot.slane %v1727, %v1786
    %v1788 = vmul.f32 %v74, %v1787
    %1790 = vrot.lane.b32.xlu0 %v1788, 122
    %v1791 = vpop.permute.xlu0 %1790
    %v1793 = vadd.f32 %v1783, %v1791
    %v1794 = vlaneseq
    %v1795 = vshrl.u32 %v1794, 7
    %v1796 = vsub.s32 7, %v1795
    %v1797 = vrot.slane %v1727, %v1796
    %v1798 = vmul.f32 %v74, %v1797
    %1800 = vrot.lane.b32.xlu0 %v1798, 121
    %v1801 = vpop.permute.xlu0 %1800
    %v1803 = vadd.f32 %v1793, %v1801
    %v1804 = vlaneseq
    %v1805 = vshrl.u32 %v1804, 7
    %v1806 = vsub.s32 0, %v1805
    %v1807 = vrot.slane %v1728, %v1806
    %v1808 = vmul.f32 %v74, %v1807
    %1810 = vrot.lane.b32.xlu0 %v1808, 120
    %v1811 = vpop.permute.xlu0 %1810
    %v1813 = vadd.f32 %v1803, %v1811
    %v1814 = vlaneseq
    %v1815 = vshrl.u32 %v1814, 7
    %v1816 = vsub.s32 1, %v1815
    %v1817 = vrot.slane %v1728, %v1816
    %v1818 = vmul.f32 %v74, %v1817
    %1820 = vrot.lane.b32.xlu0 %v1818, 119
    %v1821 = vpop.permute.xlu0 %1820
    %v1823 = vadd.f32 %v1813, %v1821
    %v1824 = vlaneseq
    %v1825 = vshrl.u32 %v1824, 7
    %v1826 = vsub.s32 2, %v1825
    %v1827 = vrot.slane %v1728, %v1826
    %v1828 = vmul.f32 %v74, %v1827
    %1830 = vrot.lane.b32.xlu0 %v1828, 118
    %v1831 = vpop.permute.xlu0 %1830
    %v1833 = vadd.f32 %v1823, %v1831
    %v1834 = vlaneseq
    %v1835 = vshrl.u32 %v1834, 7
    %v1836 = vsub.s32 3, %v1835
    %v1837 = vrot.slane %v1728, %v1836
    %v1838 = vmul.f32 %v74, %v1837
    %1840 = vrot.lane.b32.xlu0 %v1838, 117
    %v1841 = vpop.permute.xlu0 %1840
    %v1843 = vadd.f32 %v1833, %v1841
    %v1844 = vlaneseq
    %v1845 = vshrl.u32 %v1844, 7
    %v1846 = vsub.s32 4, %v1845
    %v1847 = vrot.slane %v1728, %v1846
    %v1848 = vmul.f32 %v74, %v1847
    %1850 = vrot.lane.b32.xlu0 %v1848, 116
    %v1851 = vpop.permute.xlu0 %1850
    %v1853 = vadd.f32 %v1843, %v1851
    %v1854 = vlaneseq
    %v1855 = vshrl.u32 %v1854, 7
    %v1856 = vsub.s32 5, %v1855
    %v1857 = vrot.slane %v1728, %v1856
    %v1858 = vmul.f32 %v74, %v1857
    %1860 = vrot.lane.b32.xlu0 %v1858, 115
    %v1861 = vpop.permute.xlu0 %1860
    %v1863 = vadd.f32 %v1853, %v1861
    %v1864 = vlaneseq
    %v1865 = vshrl.u32 %v1864, 7
    %v1866 = vsub.s32 6, %v1865
    %v1867 = vrot.slane %v1728, %v1866
    %v1868 = vmul.f32 %v74, %v1867
    %1870 = vrot.lane.b32.xlu0 %v1868, 114
    %v1871 = vpop.permute.xlu0 %1870
    %v1873 = vadd.f32 %v1863, %v1871
    %v1874 = vlaneseq
    %v1875 = vshrl.u32 %v1874, 7
    %v1876 = vsub.s32 7, %v1875
    %v1877 = vrot.slane %v1728, %v1876
    %v1878 = vmul.f32 %v74, %v1877
    %1880 = vrot.lane.b32.xlu0 %v1878, 113
    %v1881 = vpop.permute.xlu0 %1880
    %v1883 = vadd.f32 %v1873, %v1881
    %v1884 = vadd.f32 %v1883, %v75
    %v1885 = vxor.u32 %v1884, 2147483648
    %v1886 = vmul.f32 %v1885, 1.442695
    %v1887 = vpow.pop %v1886
    %v1888 = vadd.f32 %v1887, 1.0
    %v1889 = vrcp.pop %v1888
    %v1890 = vmul.f32 1.0, %v1889
    %v1891 = vmul.f32 %v1884, %v1890
    %v1892 = vlaneseq
    %v1893 = vshrl.u32 %v1892, 7
    %v1894 = vsub.s32 0, %v1893
    %v1895 = vrot.slane %v1891, %v1894
    %v1896 = vmul.f32 %v76, %v1895
    %v1897 = vmul.f32 %v77, %v1895
    %v1898 = vlaneseq
    %v1899 = vshrl.u32 %v1898, 7
    %v1900 = vsub.s32 1, %v1899
    %v1901 = vrot.slane %v1891, %v1900
    %1903 = vrot.lane.b32.xlu0 %v1901, 1
    %v1904 = vpop.permute.xlu0 %1903
    %v1906 = vmul.f32 %v76, %v1904
    %v1907 = vmul.f32 %v77, %v1904
    %1910 = vrot.lane.b32.xlu0 %v1906, 127
    %v1911 = vpop.permute.xlu0 %1910
    %1912 = vrot.lane.b32.xlu0 %v1907, 127
    %v1913 = vpop.permute.xlu0 %1912
    %v1916 = vadd.f32 %v1896, %v1911
    %v1917 = vadd.f32 %v1897, %v1913
    %v1918 = vlaneseq
    %v1919 = vshrl.u32 %v1918, 7
    %v1920 = vsub.s32 2, %v1919
    %v1921 = vrot.slane %v1891, %v1920
    %1923 = vrot.lane.b32.xlu0 %v1921, 2
    %v1924 = vpop.permute.xlu0 %1923
    %v1926 = vmul.f32 %v76, %v1924
    %v1927 = vmul.f32 %v77, %v1924
    %1930 = vrot.lane.b32.xlu0 %v1926, 126
    %v1931 = vpop.permute.xlu0 %1930
    %1932 = vrot.lane.b32.xlu0 %v1927, 126
    %v1933 = vpop.permute.xlu0 %1932
    %v1936 = vadd.f32 %v1916, %v1931
    %v1937 = vadd.f32 %v1917, %v1933
    %v1938 = vlaneseq
    %v1939 = vshrl.u32 %v1938, 7
    %v1940 = vsub.s32 3, %v1939
    %v1941 = vrot.slane %v1891, %v1940
    %1943 = vrot.lane.b32.xlu0 %v1941, 3
    %v1944 = vpop.permute.xlu0 %1943
    %v1946 = vmul.f32 %v76, %v1944
    %v1947 = vmul.f32 %v77, %v1944
    %1950 = vrot.lane.b32.xlu0 %v1946, 125
    %v1951 = vpop.permute.xlu0 %1950
    %1952 = vrot.lane.b32.xlu0 %v1947, 125
    %v1953 = vpop.permute.xlu0 %1952
    %v1956 = vadd.f32 %v1936, %v1951
    %v1957 = vadd.f32 %v1937, %v1953
    %v1958 = vadd.f32 %v1956, %v78
    %v1959 = vadd.f32 %v1957, %v79
    %v1960 = vxor.u32 %v1958, 2147483648
    %v1961 = vxor.u32 %v1959, 2147483648
    %v1962 = vmul.f32 %v1960, 1.442695
    %v1963 = vpow.pop %v1962
    %v1964 = vmul.f32 %v1961, 1.442695
    %v1965 = vpow.pop %v1964
    %v1966 = vadd.f32 %v1963, 1.0
    %v1967 = vadd.f32 %v1965, 1.0
    %v1968 = vrcp.pop %v1966
    %v1969 = vmul.f32 1.0, %v1968
    %v1970 = vrcp.pop %v1967
    %v1971 = vmul.f32 1.0, %v1970
    %1973 = vset.pattern.permute.xlu0 0
    %1974 = vperm.xlu0 %1973, %v1969
    %v1975 = vpop.permute.xlu0 %1974
    %1978 = vset.pattern.permute.xlu0 0
    %1979 = vperm.xlu0 %1978, %v1971
    %v1980 = vpop.permute.xlu0 %1979
    %v1982 = vmul.f32 %v1717, %v1975
    %v1983 = vmul.f32 %v1718, %v1975
    %v1984 = vmul.f32 %v1719, %v1980
    %v1985 = vmul.f32 %v1720, %v1980
    %v1986 = vlaneseq
    %v1987 = vshrl.u32 %v1986, 7
    %v1988 = vsub.s32 0, %v1987
    %v1989 = vrot.slane %v1982, %v1988
    %v1990 = vlaneseq
    %v1991 = vshrl.u32 %v1990, 7
    %v1992 = vsub.s32 0, %v1991
    %v1993 = vrot.slane %v1983, %v1992
    %v1994 = vmul.f32 %v1019, %v1989
    %v1995 = vmul.f32 %v1019, %v1993
    %v1996 = vlaneseq
    %v1997 = vshrl.u32 %v1996, 7
    %v1998 = vsub.s32 1, %v1997
    %v1999 = vrot.slane %v1982, %v1998
    %v2000 = vlaneseq
    %v2001 = vshrl.u32 %v2000, 7
    %v2002 = vsub.s32 1, %v2001
    %v2003 = vrot.slane %v1983, %v2002
    %v2004 = vmul.f32 %v1033, %v1999
    %v2005 = vmul.f32 %v1033, %v2003
    %v2006 = vadd.f32 %v1994, %v2004
    %v2007 = vadd.f32 %v1995, %v2005
    %v2008 = vlaneseq
    %v2009 = vshrl.u32 %v2008, 7
    %v2010 = vsub.s32 2, %v2009
    %v2011 = vrot.slane %v1982, %v2010
    %v2012 = vlaneseq
    %v2013 = vshrl.u32 %v2012, 7
    %v2014 = vsub.s32 2, %v2013
    %v2015 = vrot.slane %v1983, %v2014
    %v2016 = vmul.f32 %v1049, %v2011
    %v2017 = vmul.f32 %v1049, %v2015
    %v2018 = vadd.f32 %v2006, %v2016
    %v2019 = vadd.f32 %v2007, %v2017
    %v2020 = vlaneseq
    %v2021 = vshrl.u32 %v2020, 7
    %v2022 = vsub.s32 3, %v2021
    %v2023 = vrot.slane %v1982, %v2022
    %v2024 = vlaneseq
    %v2025 = vshrl.u32 %v2024, 7
    %v2026 = vsub.s32 3, %v2025
    %v2027 = vrot.slane %v1983, %v2026
    %v2028 = vmul.f32 %v1065, %v2023
    %v2029 = vmul.f32 %v1065, %v2027
    %v2030 = vadd.f32 %v2018, %v2028
    %v2031 = vadd.f32 %v2019, %v2029
    %v2032 = vlaneseq
    %v2033 = vshrl.u32 %v2032, 7
    %v2034 = vsub.s32 4, %v2033
    %v2035 = vrot.slane %v1982, %v2034
    %v2036 = vlaneseq
    %v2037 = vshrl.u32 %v2036, 7
    %v2038 = vsub.s32 4, %v2037
    %v2039 = vrot.slane %v1983, %v2038
    %v2040 = vmul.f32 %v1081, %v2035
    %v2041 = vmul.f32 %v1081, %v2039
    %v2042 = vadd.f32 %v2030, %v2040
    %v2043 = vadd.f32 %v2031, %v2041
    %v2044 = vlaneseq
    %v2045 = vshrl.u32 %v2044, 7
    %v2046 = vsub.s32 5, %v2045
    %v2047 = vrot.slane %v1982, %v2046
    %v2048 = vlaneseq
    %v2049 = vshrl.u32 %v2048, 7
    %v2050 = vsub.s32 5, %v2049
    %v2051 = vrot.slane %v1983, %v2050
    %v2052 = vmul.f32 %v1097, %v2047
    %v2053 = vmul.f32 %v1097, %v2051
    %v2054 = vadd.f32 %v2042, %v2052
    %v2055 = vadd.f32 %v2043, %v2053
    %v2056 = vlaneseq
    %v2057 = vshrl.u32 %v2056, 7
    %v2058 = vsub.s32 6, %v2057
    %v2059 = vrot.slane %v1982, %v2058
    %v2060 = vlaneseq
    %v2061 = vshrl.u32 %v2060, 7
    %v2062 = vsub.s32 6, %v2061
    %v2063 = vrot.slane %v1983, %v2062
    %v2064 = vmul.f32 %v1113, %v2059
    %v2065 = vmul.f32 %v1113, %v2063
    %v2066 = vadd.f32 %v2054, %v2064
    %v2067 = vadd.f32 %v2055, %v2065
    %v2068 = vlaneseq
    %v2069 = vshrl.u32 %v2068, 7
    %v2070 = vsub.s32 7, %v2069
    %v2071 = vrot.slane %v1982, %v2070
    %v2072 = vlaneseq
    %v2073 = vshrl.u32 %v2072, 7
    %v2074 = vsub.s32 7, %v2073
    %v2075 = vrot.slane %v1983, %v2074
    %v2076 = vmul.f32 %v1129, %v2071
    %v2077 = vmul.f32 %v1129, %v2075
    %v2078 = vadd.f32 %v2066, %v2076
    %v2079 = vadd.f32 %v2067, %v2077
    %v2080 = vlaneseq
    %v2081 = vshrl.u32 %v2080, 7
    %v2082 = vsub.s32 0, %v2081
    %v2083 = vrot.slane %v1984, %v2082
    %v2084 = vlaneseq
    %v2085 = vshrl.u32 %v2084, 7
    %v2086 = vsub.s32 0, %v2085
    %v2087 = vrot.slane %v1985, %v2086
    %v2088 = vmul.f32 %v1145, %v2083
    %v2089 = vmul.f32 %v1145, %v2087
    %v2090 = vadd.f32 %v2078, %v2088
    %v2091 = vadd.f32 %v2079, %v2089
    %v2092 = vlaneseq
    %v2093 = vshrl.u32 %v2092, 7
    %v2094 = vsub.s32 1, %v2093
    %v2095 = vrot.slane %v1984, %v2094
    %v2096 = vlaneseq
    %v2097 = vshrl.u32 %v2096, 7
    %v2098 = vsub.s32 1, %v2097
    %v2099 = vrot.slane %v1985, %v2098
    %v2100 = vmul.f32 %v1161, %v2095
    %v2101 = vmul.f32 %v1161, %v2099
    %v2102 = vadd.f32 %v2090, %v2100
    %v2103 = vadd.f32 %v2091, %v2101
    %v2104 = vlaneseq
    %v2105 = vshrl.u32 %v2104, 7
    %v2106 = vsub.s32 2, %v2105
    %v2107 = vrot.slane %v1984, %v2106
    %v2108 = vlaneseq
    %v2109 = vshrl.u32 %v2108, 7
    %v2110 = vsub.s32 2, %v2109
    %v2111 = vrot.slane %v1985, %v2110
    %v2112 = vmul.f32 %v1177, %v2107
    %v2113 = vmul.f32 %v1177, %v2111
    %v2114 = vadd.f32 %v2102, %v2112
    %v2115 = vadd.f32 %v2103, %v2113
    %v2116 = vlaneseq
    %v2117 = vshrl.u32 %v2116, 7
    %v2118 = vsub.s32 3, %v2117
    %v2119 = vrot.slane %v1984, %v2118
    %v2120 = vlaneseq
    %v2121 = vshrl.u32 %v2120, 7
    %v2122 = vsub.s32 3, %v2121
    %v2123 = vrot.slane %v1985, %v2122
    %v2124 = vmul.f32 %v1193, %v2119
    %v2125 = vmul.f32 %v1193, %v2123
    %v2126 = vadd.f32 %v2114, %v2124
    %v2127 = vadd.f32 %v2115, %v2125
    %v2128 = vlaneseq
    %v2129 = vshrl.u32 %v2128, 7
    %v2130 = vsub.s32 4, %v2129
    %v2131 = vrot.slane %v1984, %v2130
    %v2132 = vlaneseq
    %v2133 = vshrl.u32 %v2132, 7
    %v2134 = vsub.s32 4, %v2133
    %v2135 = vrot.slane %v1985, %v2134
    %v2136 = vmul.f32 %v1209, %v2131
    %v2137 = vmul.f32 %v1209, %v2135
    %v2138 = vadd.f32 %v2126, %v2136
    %v2139 = vadd.f32 %v2127, %v2137
    %v2140 = vlaneseq
    %v2141 = vshrl.u32 %v2140, 7
    %v2142 = vsub.s32 5, %v2141
    %v2143 = vrot.slane %v1984, %v2142
    %v2144 = vlaneseq
    %v2145 = vshrl.u32 %v2144, 7
    %v2146 = vsub.s32 5, %v2145
    %v2147 = vrot.slane %v1985, %v2146
    %v2148 = vmul.f32 %v1225, %v2143
    %v2149 = vmul.f32 %v1225, %v2147
    %v2150 = vadd.f32 %v2138, %v2148
    %v2151 = vadd.f32 %v2139, %v2149
    %v2152 = vlaneseq
    %v2153 = vshrl.u32 %v2152, 7
    %v2154 = vsub.s32 6, %v2153
    %v2155 = vrot.slane %v1984, %v2154
    %v2156 = vlaneseq
    %v2157 = vshrl.u32 %v2156, 7
    %v2158 = vsub.s32 6, %v2157
    %v2159 = vrot.slane %v1985, %v2158
    %v2160 = vmul.f32 %v1241, %v2155
    %v2161 = vmul.f32 %v1241, %v2159
    %v2162 = vadd.f32 %v2150, %v2160
    %v2163 = vadd.f32 %v2151, %v2161
    %v2164 = vlaneseq
    %v2165 = vshrl.u32 %v2164, 7
    %v2166 = vsub.s32 7, %v2165
    %v2167 = vrot.slane %v1984, %v2166
    %v2168 = vlaneseq
    %v2169 = vshrl.u32 %v2168, 7
    %v2170 = vsub.s32 7, %v2169
    %v2171 = vrot.slane %v1985, %v2170
    %v2172 = vmul.f32 %v1257, %v2167
    %v2173 = vmul.f32 %v1257, %v2171
    %v2174 = vadd.f32 %v2162, %v2172
    %v2175 = vadd.f32 %v2163, %v2173
    %v2176 = vmul.f32 %v2174, %v1274
    %v2177 = vmul.f32 %v2175, %v1274
    %v2178 = vadd.f32 %v2176, %v1281
    %v2179 = vadd.f32 %v2177, %v1281
    %v2180 = vcombine.high %v1295, %v1295
    %v2182 = vadd.f32 %v2178, %v1295
    %v2183 = vadd.f32 %v2179, %v2180
    %v2186 = vcombine.low %v2182, %v2183
    %s2188 = scalar_lea.vmem [#allocation2], 8
    %2189 = vst [vmem:[%s2188] sm:$0xff] %v2186
    // Predicated region
    $region62: #{tpu_custom_call.1} parent=1 // pred_check
      _
    $region63: #{tpu_custom_call.1} parent=1 // pred_check_branch
      %2191 = sbr.rel (0) target = $region65
    $region64: #{tpu_custom_call.1} parent=1 // pred_region
      %s2193 = ssub.s32 256, 256
      %2194 = vsyncadd [#allocation3], %s2193
      %s2195 = sshll.u32 [#allocation2], 4
      %s2196 = int_to_ptr.vmem [resolvable:$true] %s2195
      %2201 = dma.vmem_to_hbm [thread:$0]  %s2196, 256, %s15, [#allocation3], 128, 128, 8
    $region65: #{tpu_custom_call.1} parent=1 // pred_fallthru
      _
    // Predicated region
    $region66: #{tpu_custom_call.1} parent=1 // pred_check
      _
    $region67: #{tpu_custom_call.1} parent=1 // pred_check_branch
      %2203 = sbr.rel (0) target = $region69
    $region68: #{tpu_custom_call.1} parent=1 // pred_region
      %2204 = dma.done [#allocation3], 256
    $region69: #{tpu_custom_call.1} parent=1 // pred_fallthru
      _
    %2205 = vsyncpa [#allocation3], 1

</llo_original>
